<compile_context>
chip_gen: v6e
topology: v6e:2x2x1
jax: 0.10.0
libtpu: 0.0.40
codegen_flags: <defaults>
</compile_context>

<pallas_src>
import functools

import numpy as np
import jax
import jax.numpy as jnp
from jax import lax
from jax.experimental import pallas as pl
from jax.experimental.pallas import tpu as pltpu

NEG_SLOPE = 0.01            # LeakyReLU negative_slope
K = 3                       # conv kernel size
CIN = 16                    # input channels
SC = 200                    # fixed sequence length (torch `sc`)
C1, C2, C3 = 42, 84, 100    # true conv output channels
CP = 128                    # padded (lane-dense) channel width
CINK = K * CIN              # 48  : stage-1 folded contraction depth
CPK = K * CP                # 384 : stage-2/3 folded contraction depth
L1_OUT = SC - K + 1                    # 198
L1_P = (L1_OUT - 2) // 2 + 1           # 99
L2_OUT = L1_P - K + 1                  # 97
L2_P = (L2_OUT - 2) // 2 + 1           # 48
L3_OUT = L2_P - K + 1                  # 46
L3_P = (L3_OUT - 5) // 5 + 1           # 9
AVG_OUT = 10
H1, H2, DOUT = 500, 50, 1
H1P, H2P, DOUTP = 512, 128, 128
FEAT = L3_P * CP                       # 1152 flattened feature width
MXU_DTYPE = jnp.bfloat16               # matmul operand dtype (accumulation is f32)


def _leaky(x):
    # LeakyReLU(0.01) as a single max (monotonic, so it also commutes with MaxPool)
    return jnp.maximum(x, NEG_SLOPE * x)


def adaptive_avgpool_matrix(n_in, n_out):
    """Fixed pooling matrix P (n_out, n_in) reproducing nn.AdaptiveAvgPool1d."""
    P = np.zeros((n_out, n_in), dtype=np.float32)
    for j in range(n_out):
        s = (j * n_in) // n_out
        e = -((-(j + 1) * n_in) // n_out)          # ceil((j+1)*n_in/n_out)
        P[j, s:e] = 1.0 / float(e - s)
    return jnp.asarray(P)


# ----------------------------------------------------------------------------- kernel

def _fused_kernel(x_ref, w1, b1, w2, b2, w3, b3,
                  wf1, bf1, wf2, bf2, wf3, bf3,
                  o_ref, conv_s, m1_s, m2_s, feat_s, *, bb, mxu_dtype):
    """Whole OneDNetScaled forward for one block of `bb` samples."""

    def conv(lhs, w_ref, b_ref):
        # K already folded into the contraction; bf16 operands, f32 accumulate + f32 bias
        return jnp.dot(lhs.astype(mxu_dtype), w_ref[...],
                       preferred_element_type=jnp.float32) + b_ref[...]

    def pool(lp, stride):
        # floor-mode MaxPool1d over the full-resolution conv output held in conv_s
        m = conv_s[pl.ds(0, lp, stride), :]
        for p in range(1, stride):
            m = jnp.maximum(m, conv_s[pl.ds(p, lp, stride), :])
        return m

    def per_sample(b, carry):
        # ---- stage 1: Conv1d(16,42,3) + LeakyReLU + MaxPool(2); im2col folded at trace time
        conv_s[pl.ds(0, L1_OUT), :] = conv(x_ref[b], w1, b1)            # (198, 128)
        m1_s[...] = _leaky(pool(L1_P, 2))                               # (99, 128)

        # ---- stage 2: Conv1d(42,84,3) + LeakyReLU + MaxPool(2); full-res conv then pool
        lhs2 = jnp.concatenate([m1_s[pl.ds(k, L2_OUT), :] for k in range(K)], axis=-1)
        conv_s[pl.ds(0, L2_OUT), :] = conv(lhs2, w2, b2)                # (97, 128)
        m2_s[...] = _leaky(pool(L2_P, 2))                               # (48, 128)

        # ---- stage 3: Conv1d(84,100,3) + LeakyReLU + MaxPool(5)
        lhs3 = jnp.concatenate([m2_s[pl.ds(k, L3_OUT), :] for k in range(K)], axis=-1)
        conv_s[pl.ds(0, L3_OUT), :] = conv(lhs3, w3, b3)                # (46, 128)
        m3 = _leaky(pool(L3_P, 5))                                      # (9, 128)

        # ---- flatten to a lane-dense (1, 1152) row: lane l*128+c matches the
        #      AdaptiveAvgPool1d(10) + torch channel-major flatten folded into wf1.
        feat_s[pl.ds(b, 1), :] = jnp.concatenate(
            [m3[l:l + 1, :] for l in range(L3_P)], axis=-1)
        return carry

    lax.fori_loop(0, bb, per_sample, 0)

    # ---- classifier (Dropout layers are identity in eval mode), batched over the block
    f = feat_s[...].astype(mxu_dtype)                                   # (bb, 1152)
    h = _leaky(jnp.dot(f, wf1[...], preferred_element_type=jnp.float32) + bf1[...])
    h = _leaky(jnp.dot(h.astype(mxu_dtype), wf2[...],
                       preferred_element_type=jnp.float32) + bf2[...])
    z = jnp.dot(h.astype(mxu_dtype), wf3[...],
                preferred_element_type=jnp.float32) + bf3[...]
    o_ref[0] = 1.0 / (1.0 + jnp.exp(-z))          # sigmoid; lane 0 holds the result


# ------------------------------------------------------------------------ weight prep

def _fold_conv_w(w, cin_p, dtype):
    """torch (Cout, Cin, K) -> folded (K*cin_p, 128); row k*cin_p + c holds w[o, c, k]."""
    cout, cin, k = w.shape
    wt = jnp.transpose(w.astype(jnp.float32), (2, 1, 0))               # (K, Cin, Cout)
    out = jnp.zeros((k, cin_p, CP), jnp.float32).at[:, :cin, :cout].set(wt)
    return out.reshape(k * cin_p, CP).astype(dtype)


def _pad2(a, rows, cols, dtype):
    out = jnp.zeros((rows, cols), jnp.float32)
    return out.at[: a.shape[0], : a.shape[1]].set(a.astype(jnp.float32)).astype(dtype)


def _pad_bias(b, n):
    out = jnp.zeros((1, n), jnp.float32)
    return out.at[0, : b.shape[0]].set(b.astype(jnp.float32))


# ---------------------------------------------------------------------------- wrapper

def one_d_net_scaled(x, params, *, batch_block=8, mxu_dtype=MXU_DTYPE):
    """x: (B, 16, L) float32 (PyTorch NCW). Returns (B,) sigmoid scores."""
    B, C, L = x.shape
    assert C == CIN
    if L != SC:
        # mirrors torch per-sample flatten/truncate/reshape branch (valid for L > 200)
        assert L > SC, "OneDNetScaled reshape branch requires L >= 200"
        x = x.reshape(B, C * L)[:, : C * SC].reshape(B, C, SC)
    xl = jnp.transpose(x, (0, 2, 1)).astype(jnp.float32)                # NCW -> NLC (B,200,16)

    # batch block = cdiv(B,2) capped at batch_block -> grid has >=2 parallel blocks when B>=2
    bb = max(1, min(batch_block, -(-B // 2)))
    n_blk = -(-B // bb)
    b_pad = n_blk * bb
    if b_pad != B:
        xl = jnp.pad(xl, ((0, b_pad - B), (0, 0), (0, 0)))

    # trace-time im2col for stage 1: lane = k*CIN + c -> one 48-deep contraction in-kernel
    x_fold = jnp.concatenate([xl[:, k:k + L1_OUT, :] for k in range(K)],
                             axis=-1).astype(mxu_dtype)                  # (b_pad, 198, 48)

    # ---- trace-time weight prep: K folding, channel padding, avgpool/flatten folding ----
    w1 = _fold_conv_w(params["w1c"], CIN, mxu_dtype); b1 = _pad_bias(params["b1c"], CP)
    w2 = _fold_conv_w(params["w2c"], CP, mxu_dtype);  b2 = _pad_bias(params["b2c"], CP)
    w3 = _fold_conv_w(params["w3c"], CP, mxu_dtype);  b3 = _pad_bias(params["b3c"], CP)

    P = adaptive_avgpool_matrix(L3_P, AVG_OUT)                           # (10, 9) = P[o, l]
    w1f_r = params["w1f"].astype(jnp.float32).reshape(H1, C3, AVG_OUT)
    wf1 = jnp.einsum("hco,ol->lch", w1f_r, P, precision="highest")       # (9, 100, 500)
    wf1 = jnp.zeros((L3_P, CP, H1P), jnp.float32).at[:, :C3, :H1].set(wf1)
    wf1 = wf1.reshape(FEAT, H1P).astype(mxu_dtype)                       # (1152, 512)
    bf1 = _pad_bias(params["b1f"], H1P)
    wf2 = _pad2(params["w2f"].T, H1P, H2P, mxu_dtype);   bf2 = _pad_bias(params["b2f"], H2P)
    wf3 = _pad2(params["w3f"].T, H2P, DOUTP, mxu_dtype); bf3 = _pad_bias(params["b3f"], DOUTP)

    weights = (w1, b1, w2, b2, w3, b3, wf1, bf1, wf2, bf2, wf3, bf3)

    def full(shape):
        return pl.BlockSpec(shape, lambda i, _n=len(shape): (0,) * _n)

    flops_per_sample = 2 * (L1_OUT * CINK * CP + L2_OUT * CPK * CP + L3_OUT * CPK * CP
                            + FEAT * H1P + H1P * H2P + H2P * DOUTP)
    bytes_accessed = (int(x_fold.size) * x_fold.dtype.itemsize
                      + sum(int(w.size) * w.dtype.itemsize for w in weights)
                      + b_pad * DOUTP * 4)

    out = pl.pallas_call(
        functools.partial(_fused_kernel, bb=bb, mxu_dtype=mxu_dtype),
        out_shape=jax.ShapeDtypeStruct((n_blk, bb, DOUTP), jnp.float32),
        grid_spec=pltpu.PrefetchScalarGridSpec(
            num_scalar_prefetch=0,
            grid=(n_blk,),
            in_specs=[
                pl.BlockSpec((bb, L1_OUT, CINK), lambda i: (i, 0, 0)),   # im2col'd input block
                full((CINK, CP)), full((1, CP)),                         # conv1 (K folded)
                full((CPK, CP)), full((1, CP)),                          # conv2 (K folded)
                full((CPK, CP)), full((1, CP)),                          # conv3 (K folded)
                full((FEAT, H1P)), full((1, H1P)),                       # fc1 (avgpool folded)
                full((H1P, H2P)), full((1, H2P)),                        # fc2
                full((H2P, DOUTP)), full((1, DOUTP)),                    # fc3
            ],
            out_specs=pl.BlockSpec((1, bb, DOUTP), lambda i: (i, 0, 0)),
            scratch_shapes=[
                pltpu.VMEM((L1_OUT, CP), jnp.float32),    # full-res conv out (reused per stage)
                pltpu.VMEM((L1_P, CP), jnp.float32),      # stage-1 pooled output
                pltpu.VMEM((L2_P, CP), jnp.float32),      # stage-2 pooled output
                pltpu.VMEM((bb, FEAT), jnp.float32),      # flattened features of the block
            ],
        ),
        compiler_params=pltpu.CompilerParams(
            dimension_semantics=("parallel",)),
        cost_estimate=pl.CostEstimate(
            flops=int(b_pad * flops_per_sample),
            transcendentals=int(b_pad * DOUTP),
            bytes_accessed=int(bytes_accessed)),
    )(x_fold, *weights)

    return out.reshape(b_pad, DOUTP)[:B, 0]


# -------------------------------------------------------------------- reference / demo

def init_params(key):
    ks = jax.random.split(key, 12)

    def w(k, shape, scale):
        return jax.random.normal(k, shape, jnp.float32) * scale

    return {
        # conv weights in PyTorch (Cout, Cin, K) convention
        "w1c": w(ks[0], (C1, CIN, K), 0.10), "b1c": w(ks[1], (C1,), 0.10),
        "w2c": w(ks[2], (C2, C1, K), 0.05), "b2c": w(ks[3], (C2,), 0.05),
        "w3c": w(ks[4], (C3, C2, K), 0.05), "b3c": w(ks[5], (C3,), 0.05),
        # linear weights in PyTorch (out, in) convention
        "w1f": w(ks[6], (H1, C3 * AVG_OUT), 0.05), "b1f": w(ks[7], (H1,), 0.05),
        "w2f": w(ks[8], (H2, H1), 0.10), "b2f": w(ks[9], (H2,), 0.10),
        "w3f": w(ks[10], (DOUT, H2), 0.50), "b3f": w(ks[11], (DOUT,), 0.50),
    }


def reference_forward(x, params):
    """Pure-jnp replica of OneDNetScaled.forward (eval mode) for validation."""
    B, C, L = x.shape
    if L != SC:
        x = x.reshape(B, C * L)[:, : C * SC].reshape(B, C, SC)

    def conv(h, w, b):
        lout = h.shape[-1] - w.shape[-1] + 1
        acc = b[None, :, None]
        for k in range(w.shape[-1]):
            acc = acc + jnp.einsum("bcl,oc->bol", h[:, :, k:k + lout], w[:, :, k],
                                   precision="highest")
        return acc

    def maxpool(h, p):
        lp = h.shape[-1] // p
        return jnp.max(h[:, :, : lp * p].reshape(h.shape[0], h.shape[1], lp, p), -1)

    h = maxpool(_leaky(conv(x, params["w1c"], params["b1c"])), 2)
    h = maxpool(_leaky(conv(h, params["w2c"], params["b2c"])), 2)
    h = maxpool(_leaky(conv(h, params["w3c"], params["b3c"])), 5)
    P = adaptive_avgpool_matrix(h.shape[-1], AVG_OUT)           # (10, 9)
    h = jnp.einsum("bcl,ol->bco", h, P, precision="highest")    # (B, 100, 10)
    f = h.reshape(B, -1)                                        # torch.flatten(x, 1)
    f = _leaky(jnp.dot(f, params["w1f"].T, precision="highest") + params["b1f"])
    f = _leaky(jnp.dot(f, params["w2f"].T, precision="highest") + params["b2f"])
    f = jnp.dot(f, params["w3f"].T, precision="highest") + params["b3f"]
    return jax.nn.sigmoid(f).reshape(B)


if __name__ == "__main__":
    key = jax.random.PRNGKey(0)
    pkey, xkey = jax.random.split(key)
    params = init_params(pkey)
    # input consistent with the module: 16 channels, sequence length 200
    x = jax.random.normal(xkey, (2, CIN, SC), jnp.float32)

    y = jax.jit(one_d_net_scaled)(x, params)
    jax.block_until_ready(y)

    y_ref = reference_forward(x, params)
    assert y.shape == (2,)
    assert bool(jnp.all((y >= 0) & (y <= 1)))
    np.testing.assert_allclose(np.asarray(y), np.asarray(y_ref), rtol=2e-2, atol=2e-2)
    print("KERNEL_OK")
</pallas_src>

<mosaic_0001>
module attributes {stable_mosaic.version = 11 : i64} {
  func.func @_fused_kernel(%arg0: i32, %arg1: memref<1x198x48xbf16, #tpu.memory_space<vmem>>, %arg2: memref<48x128xbf16, #tpu.memory_space<vmem>>, %arg3: memref<1x128xf32, #tpu.memory_space<vmem>>, %arg4: memref<384x128xbf16, #tpu.memory_space<vmem>>, %arg5: memref<1x128xf32, #tpu.memory_space<vmem>>, %arg6: memref<384x128xbf16, #tpu.memory_space<vmem>>, %arg7: memref<1x128xf32, #tpu.memory_space<vmem>>, %arg8: memref<1152x512xbf16, #tpu.memory_space<vmem>>, %arg9: memref<1x512xf32, #tpu.memory_space<vmem>>, %arg10: memref<512x128xbf16, #tpu.memory_space<vmem>>, %arg11: memref<1x128xf32, #tpu.memory_space<vmem>>, %arg12: memref<128x128xbf16, #tpu.memory_space<vmem>>, %arg13: memref<1x128xf32, #tpu.memory_space<vmem>>, %arg14: memref<1x1x128xf32, #tpu.memory_space<vmem>>, %arg15: memref<198x128xf32, #tpu.memory_space<vmem>>, %arg16: memref<99x128xf32, #tpu.memory_space<vmem>>, %arg17: memref<48x128xf32, #tpu.memory_space<vmem>>, %arg18: memref<1x1152xf32, #tpu.memory_space<vmem>>) attributes {dimension_semantics = [#tpu.dimension_semantics<parallel>], iteration_bounds = array<i64: 2>, scalar_prefetch = 0 : i64, scratch_operands = 4 : i64, tpu.core_type = #tpu.core_type<tc>, window_params = [{transform_indices = @transform_0, window_bounds = array<i64: 1, 198, 48>}, {pipeline_mode = #tpu.pipeline_mode<synchronous>, transform_indices = @transform_1, window_bounds = array<i64: 48, 128>}, {pipeline_mode = #tpu.pipeline_mode<synchronous>, transform_indices = @transform_2, window_bounds = array<i64: 1, 128>}, {pipeline_mode = #tpu.pipeline_mode<synchronous>, transform_indices = @transform_3, window_bounds = array<i64: 384, 128>}, {pipeline_mode = #tpu.pipeline_mode<synchronous>, transform_indices = @transform_4, window_bounds = array<i64: 1, 128>}, {pipeline_mode = #tpu.pipeline_mode<synchronous>, transform_indices = @transform_5, window_bounds = array<i64: 384, 128>}, {pipeline_mode = #tpu.pipeline_mode<synchronous>, transform_indices = @transform_6, window_bounds = array<i64: 1, 128>}, {pipeline_mode = #tpu.pipeline_mode<synchronous>, transform_indices = @transform_7, window_bounds = array<i64: 1152, 512>}, {pipeline_mode = #tpu.pipeline_mode<synchronous>, transform_indices = @transform_8, window_bounds = array<i64: 1, 512>}, {pipeline_mode = #tpu.pipeline_mode<synchronous>, transform_indices = @transform_9, window_bounds = array<i64: 512, 128>}, {pipeline_mode = #tpu.pipeline_mode<synchronous>, transform_indices = @transform_10, window_bounds = array<i64: 1, 128>}, {pipeline_mode = #tpu.pipeline_mode<synchronous>, transform_indices = @transform_11, window_bounds = array<i64: 128, 128>}, {pipeline_mode = #tpu.pipeline_mode<synchronous>, transform_indices = @transform_12, window_bounds = array<i64: 1, 128>}, {transform_indices = @transform_13, window_bounds = array<i64: 1, 1, 128>}]} {
    %c0_i32 = arith.constant 0 : i32
    %0 = arith.index_cast %c0_i32 : i32 to index
    %c0 = arith.constant 0 : index
    %c0_0 = arith.constant 0 : index
    %1 = vector.load %arg1[%0, %c0, %c0_0] : memref<1x198x48xbf16, #tpu.memory_space<vmem>>, vector<1x198x48xbf16>
    %2 = vector.shape_cast %1 : vector<1x198x48xbf16> to vector<198x48xbf16>
    %c0_1 = arith.constant 0 : index
    %c0_2 = arith.constant 0 : index
    %3 = vector.load %arg2[%c0_1, %c0_2] : memref<48x128xbf16, #tpu.memory_space<vmem>>, vector<48x128xbf16>
    %cst = arith.constant dense<0.000000e+00> : vector<198x128xf32>
    %4 = tpu.matmul %2, %3, %cst {dimension_numbers = #tpu.dot_dimension_numbers<[1], [0], [0], [1], [0, 0, 1, 1], [], []>} : vector<198x48xbf16>, vector<48x128xbf16>, vector<198x128xf32> -> vector<198x128xf32>
    %c0_3 = arith.constant 0 : index
    %c0_4 = arith.constant 0 : index
    %5 = vector.load %arg3[%c0_3, %c0_4] : memref<1x128xf32, #tpu.memory_space<vmem>>, vector<1x128xf32>
    %6 = vector.broadcast %5 : vector<1x128xf32> to vector<198x128xf32>
    %7 = arith.addf %4, %6 : vector<198x128xf32>
    %c0_5 = arith.constant 0 : index
    %c0_6 = arith.constant 0 : index
    %8 = vector.load %arg15[%c0_5, %c0_6] : memref<198x128xf32, #tpu.memory_space<vmem>>, vector<198x128xf32>
    tpu.vector_store %arg15[%c0_5, %c0_6], %7 {strides = array<i32>} : memref<198x128xf32, #tpu.memory_space<vmem>>, vector<198x128xf32>,
    %c0_7 = arith.constant 0 : index
    %c0_8 = arith.constant 0 : index
    %9 = tpu.strided_load %arg15[%c0_7, %c0_8] {strides = array<i32: 2, 1>} : memref<198x128xf32, #tpu.memory_space<vmem>>, vector<99x128xf32>
    %c1 = arith.constant 1 : index
    %c0_9 = arith.constant 0 : index
    %10 = tpu.strided_load %arg15[%c1, %c0_9] {strides = array<i32: 2, 1>} : memref<198x128xf32, #tpu.memory_space<vmem>>, vector<99x128xf32>
    %11 = arith.maximumf %9, %10 : vector<99x128xf32>
    %cst_10 = arith.constant 0.00999999977 : f32
    %12 = vector.broadcast %cst_10 : f32 to vector<99x128xf32>
    %13 = arith.mulf %12, %11 : vector<99x128xf32>
    %14 = arith.maximumf %11, %13 : vector<99x128xf32>
    %c0_11 = arith.constant 0 : index
    %c0_12 = arith.constant 0 : index
    %15 = vector.load %arg16[%c0_11, %c0_12] : memref<99x128xf32, #tpu.memory_space<vmem>>, vector<99x128xf32>
    tpu.vector_store %arg16[%c0_11, %c0_12], %14 {strides = array<i32>} : memref<99x128xf32, #tpu.memory_space<vmem>>, vector<99x128xf32>,
    %c0_13 = arith.constant 0 : index
    %c0_14 = arith.constant 0 : index
    %16 = vector.load %arg16[%c0_13, %c0_14] : memref<99x128xf32, #tpu.memory_space<vmem>>, vector<97x128xf32>
    %c1_15 = arith.constant 1 : index
    %c0_16 = arith.constant 0 : index
    %17 = vector.load %arg16[%c1_15, %c0_16] : memref<99x128xf32, #tpu.memory_space<vmem>>, vector<97x128xf32>
    %c2 = arith.constant 2 : index
    %c0_17 = arith.constant 0 : index
    %18 = vector.load %arg16[%c2, %c0_17] : memref<99x128xf32, #tpu.memory_space<vmem>>, vector<97x128xf32>
    %19 = tpu.concatenate %16, %17, %18 in 1 : vector<97x128xf32>, vector<97x128xf32>, vector<97x128xf32> -> vector<97x384xf32>
    %20 = arith.truncf %19 : vector<97x384xf32> to vector<97x384xbf16>
    %c0_18 = arith.constant 0 : index
    %c0_19 = arith.constant 0 : index
    %21 = vector.load %arg4[%c0_18, %c0_19] : memref<384x128xbf16, #tpu.memory_space<vmem>>, vector<384x128xbf16>
    %cst_20 = arith.constant dense<0.000000e+00> : vector<97x128xf32>
    %22 = tpu.matmul %20, %21, %cst_20 {dimension_numbers = #tpu.dot_dimension_numbers<[1], [0], [0], [1], [0, 0, 1, 1], [], []>} : vector<97x384xbf16>, vector<384x128xbf16>, vector<97x128xf32> -> vector<97x128xf32>
    %c0_21 = arith.constant 0 : index
    %c0_22 = arith.constant 0 : index
    %23 = vector.load %arg5[%c0_21, %c0_22] : memref<1x128xf32, #tpu.memory_space<vmem>>, vector<1x128xf32>
    %24 = vector.broadcast %23 : vector<1x128xf32> to vector<97x128xf32>
    %25 = arith.addf %22, %24 : vector<97x128xf32>
    %c0_23 = arith.constant 0 : index
    %c0_24 = arith.constant 0 : index
    %26 = vector.load %arg15[%c0_23, %c0_24] : memref<198x128xf32, #tpu.memory_space<vmem>>, vector<97x128xf32>
    tpu.vector_store %arg15[%c0_23, %c0_24], %25 {strides = array<i32>} : memref<198x128xf32, #tpu.memory_space<vmem>>, vector<97x128xf32>,
    %c0_25 = arith.constant 0 : index
    %c0_26 = arith.constant 0 : index
    %27 = tpu.strided_load %arg15[%c0_25, %c0_26] {strides = array<i32: 2, 1>} : memref<198x128xf32, #tpu.memory_space<vmem>>, vector<48x128xf32>
    %c1_27 = arith.constant 1 : index
    %c0_28 = arith.constant 0 : index
    %28 = tpu.strided_load %arg15[%c1_27, %c0_28] {strides = array<i32: 2, 1>} : memref<198x128xf32, #tpu.memory_space<vmem>>, vector<48x128xf32>
    %29 = arith.maximumf %27, %28 : vector<48x128xf32>
    %cst_29 = arith.constant 0.00999999977 : f32
    %30 = vector.broadcast %cst_29 : f32 to vector<48x128xf32>
    %31 = arith.mulf %30, %29 : vector<48x128xf32>
    %32 = arith.maximumf %29, %31 : vector<48x128xf32>
    %c0_30 = arith.constant 0 : index
    %c0_31 = arith.constant 0 : index
    %33 = vector.load %arg17[%c0_30, %c0_31] : memref<48x128xf32, #tpu.memory_space<vmem>>, vector<48x128xf32>
    tpu.vector_store %arg17[%c0_30, %c0_31], %32 {strides = array<i32>} : memref<48x128xf32, #tpu.memory_space<vmem>>, vector<48x128xf32>,
    %c0_32 = arith.constant 0 : index
    %c0_33 = arith.constant 0 : index
    %34 = vector.load %arg17[%c0_32, %c0_33] : memref<48x128xf32, #tpu.memory_space<vmem>>, vector<46x128xf32>
    %c1_34 = arith.constant 1 : index
    %c0_35 = arith.constant 0 : index
    %35 = vector.load %arg17[%c1_34, %c0_35] : memref<48x128xf32, #tpu.memory_space<vmem>>, vector<46x128xf32>
    %c2_36 = arith.constant 2 : index
    %c0_37 = arith.constant 0 : index
    %36 = vector.load %arg17[%c2_36, %c0_37] : memref<48x128xf32, #tpu.memory_space<vmem>>, vector<46x128xf32>
    %37 = tpu.concatenate %34, %35, %36 in 1 : vector<46x128xf32>, vector<46x128xf32>, vector<46x128xf32> -> vector<46x384xf32>
    %38 = arith.truncf %37 : vector<46x384xf32> to vector<46x384xbf16>
    %c0_38 = arith.constant 0 : index
    %c0_39 = arith.constant 0 : index
    %39 = vector.load %arg6[%c0_38, %c0_39] : memref<384x128xbf16, #tpu.memory_space<vmem>>, vector<384x128xbf16>
    %cst_40 = arith.constant dense<0.000000e+00> : vector<46x128xf32>
    %40 = tpu.matmul %38, %39, %cst_40 {dimension_numbers = #tpu.dot_dimension_numbers<[1], [0], [0], [1], [0, 0, 1, 1], [], []>} : vector<46x384xbf16>, vector<384x128xbf16>, vector<46x128xf32> -> vector<46x128xf32>
    %c0_41 = arith.constant 0 : index
    %c0_42 = arith.constant 0 : index
    %41 = vector.load %arg7[%c0_41, %c0_42] : memref<1x128xf32, #tpu.memory_space<vmem>>, vector<1x128xf32>
    %42 = vector.broadcast %41 : vector<1x128xf32> to vector<46x128xf32>
    %43 = arith.addf %40, %42 : vector<46x128xf32>
    %c0_43 = arith.constant 0 : index
    %c0_44 = arith.constant 0 : index
    %44 = vector.load %arg15[%c0_43, %c0_44] : memref<198x128xf32, #tpu.memory_space<vmem>>, vector<46x128xf32>
    tpu.vector_store %arg15[%c0_43, %c0_44], %43 {strides = array<i32>} : memref<198x128xf32, #tpu.memory_space<vmem>>, vector<46x128xf32>,
    %c0_45 = arith.constant 0 : index
    %c0_46 = arith.constant 0 : index
    %45 = tpu.strided_load %arg15[%c0_45, %c0_46] {strides = array<i32: 5, 1>} : memref<198x128xf32, #tpu.memory_space<vmem>>, vector<9x128xf32>
    %c1_47 = arith.constant 1 : index
    %c0_48 = arith.constant 0 : index
    %46 = tpu.strided_load %arg15[%c1_47, %c0_48] {strides = array<i32: 5, 1>} : memref<198x128xf32, #tpu.memory_space<vmem>>, vector<9x128xf32>
    %47 = arith.maximumf %45, %46 : vector<9x128xf32>
    %c2_49 = arith.constant 2 : index
    %c0_50 = arith.constant 0 : index
    %48 = tpu.strided_load %arg15[%c2_49, %c0_50] {strides = array<i32: 5, 1>} : memref<198x128xf32, #tpu.memory_space<vmem>>, vector<9x128xf32>
    %49 = arith.maximumf %47, %48 : vector<9x128xf32>
    %c3 = arith.constant 3 : index
    %c0_51 = arith.constant 0 : index
    %50 = tpu.strided_load %arg15[%c3, %c0_51] {strides = array<i32: 5, 1>} : memref<198x128xf32, #tpu.memory_space<vmem>>, vector<9x128xf32>
    %51 = arith.maximumf %49, %50 : vector<9x128xf32>
    %c4 = arith.constant 4 : index
    %c0_52 = arith.constant 0 : index
    %52 = tpu.strided_load %arg15[%c4, %c0_52] {strides = array<i32: 5, 1>} : memref<198x128xf32, #tpu.memory_space<vmem>>, vector<9x128xf32>
    %53 = arith.maximumf %51, %52 : vector<9x128xf32>
    %cst_53 = arith.constant 0.00999999977 : f32
    %54 = vector.broadcast %cst_53 : f32 to vector<9x128xf32>
    %55 = arith.mulf %54, %53 : vector<9x128xf32>
    %56 = arith.maximumf %53, %55 : vector<9x128xf32>
    %57 = vector.extract_strided_slice %56 {offsets = [0, 0], sizes = [1, 128], strides = [1, 1]} : vector<9x128xf32> to vector<1x128xf32>
    %58 = vector.extract_strided_slice %56 {offsets = [1, 0], sizes = [1, 128], strides = [1, 1]} : vector<9x128xf32> to vector<1x128xf32>
    %59 = vector.extract_strided_slice %56 {offsets = [2, 0], sizes = [1, 128], strides = [1, 1]} : vector<9x128xf32> to vector<1x128xf32>
    %60 = vector.extract_strided_slice %56 {offsets = [3, 0], sizes = [1, 128], strides = [1, 1]} : vector<9x128xf32> to vector<1x128xf32>
    %61 = vector.extract_strided_slice %56 {offsets = [4, 0], sizes = [1, 128], strides = [1, 1]} : vector<9x128xf32> to vector<1x128xf32>
    %62 = vector.extract_strided_slice %56 {offsets = [5, 0], sizes = [1, 128], strides = [1, 1]} : vector<9x128xf32> to vector<1x128xf32>
    %63 = vector.extract_strided_slice %56 {offsets = [6, 0], sizes = [1, 128], strides = [1, 1]} : vector<9x128xf32> to vector<1x128xf32>
    %64 = vector.extract_strided_slice %56 {offsets = [7, 0], sizes = [1, 128], strides = [1, 1]} : vector<9x128xf32> to vector<1x128xf32>
    %65 = vector.extract_strided_slice %56 {offsets = [8, 0], sizes = [1, 128], strides = [1, 1]} : vector<9x128xf32> to vector<1x128xf32>
    %66 = tpu.concatenate %57, %58, %59, %60, %61, %62, %63, %64, %65 in 1 : vector<1x128xf32>, vector<1x128xf32>, vector<1x128xf32>, vector<1x128xf32>, vector<1x128xf32>, vector<1x128xf32>, vector<1x128xf32>, vector<1x128xf32>, vector<1x128xf32> -> vector<1x1152xf32>
    %67 = arith.index_cast %c0_i32 : i32 to index
    %c0_54 = arith.constant 0 : index
    %68 = vector.load %arg18[%67, %c0_54] : memref<1x1152xf32, #tpu.memory_space<vmem>>, vector<1x1152xf32>
    tpu.vector_store %arg18[%67, %c0_54], %66 {strides = array<i32>} : memref<1x1152xf32, #tpu.memory_space<vmem>>, vector<1x1152xf32>,
    %c1_i32 = arith.constant 1 : i32
    %c0_55 = arith.constant 0 : index
    %c0_56 = arith.constant 0 : index
    %69 = vector.load %arg18[%c0_55, %c0_56] : memref<1x1152xf32, #tpu.memory_space<vmem>>, vector<1x1152xf32>
    %70 = arith.truncf %69 : vector<1x1152xf32> to vector<1x1152xbf16>
    %c0_57 = arith.constant 0 : index
    %c0_58 = arith.constant 0 : index
    %71 = vector.load %arg8[%c0_57, %c0_58] : memref<1152x512xbf16, #tpu.memory_space<vmem>>, vector<1152x512xbf16>
    %cst_59 = arith.constant dense<0.000000e+00> : vector<1x512xf32>
    %72 = tpu.matmul %70, %71, %cst_59 {dimension_numbers = #tpu.dot_dimension_numbers<[1], [0], [0], [1], [0, 0, 1, 1], [], []>} : vector<1x1152xbf16>, vector<1152x512xbf16>, vector<1x512xf32> -> vector<1x512xf32>
    %c0_60 = arith.constant 0 : index
    %c0_61 = arith.constant 0 : index
    %73 = vector.load %arg9[%c0_60, %c0_61] : memref<1x512xf32, #tpu.memory_space<vmem>>, vector<1x512xf32>
    %74 = arith.addf %72, %73 : vector<1x512xf32>
    %cst_62 = arith.constant 0.00999999977 : f32
    %75 = vector.broadcast %cst_62 : f32 to vector<1x512xf32>
    %76 = arith.mulf %75, %74 : vector<1x512xf32>
    %77 = arith.maximumf %74, %76 : vector<1x512xf32>
    %78 = arith.truncf %77 : vector<1x512xf32> to vector<1x512xbf16>
    %c0_63 = arith.constant 0 : index
    %c0_64 = arith.constant 0 : index
    %79 = vector.load %arg10[%c0_63, %c0_64] : memref<512x128xbf16, #tpu.memory_space<vmem>>, vector<512x128xbf16>
    %cst_65 = arith.constant dense<0.000000e+00> : vector<1x128xf32>
    %80 = tpu.matmul %78, %79, %cst_65 {dimension_numbers = #tpu.dot_dimension_numbers<[1], [0], [0], [1], [0, 0, 1, 1], [], []>} : vector<1x512xbf16>, vector<512x128xbf16>, vector<1x128xf32> -> vector<1x128xf32>
    %c0_66 = arith.constant 0 : index
    %c0_67 = arith.constant 0 : index
    %81 = vector.load %arg11[%c0_66, %c0_67] : memref<1x128xf32, #tpu.memory_space<vmem>>, vector<1x128xf32>
    %82 = arith.addf %80, %81 : vector<1x128xf32>
    %cst_68 = arith.constant 0.00999999977 : f32
    %83 = vector.broadcast %cst_68 : f32 to vector<1x128xf32>
    %84 = arith.mulf %83, %82 : vector<1x128xf32>
    %85 = arith.maximumf %82, %84 : vector<1x128xf32>
    %86 = arith.truncf %85 : vector<1x128xf32> to vector<1x128xbf16>
    %c0_69 = arith.constant 0 : index
    %c0_70 = arith.constant 0 : index
    %87 = vector.load %arg12[%c0_69, %c0_70] : memref<128x128xbf16, #tpu.memory_space<vmem>>, vector<128x128xbf16>
    %cst_71 = arith.constant dense<0.000000e+00> : vector<1x128xf32>
    %88 = tpu.matmul %86, %87, %cst_71 {dimension_numbers = #tpu.dot_dimension_numbers<[1], [0], [0], [1], [0, 0, 1, 1], [], []>} : vector<1x128xbf16>, vector<128x128xbf16>, vector<1x128xf32> -> vector<1x128xf32>
    %c0_72 = arith.constant 0 : index
    %c0_73 = arith.constant 0 : index
    %89 = vector.load %arg13[%c0_72, %c0_73] : memref<1x128xf32, #tpu.memory_space<vmem>>, vector<1x128xf32>
    %90 = arith.addf %88, %89 : vector<1x128xf32>
    %cst_74 = arith.constant 0.000000e+00 : f32
    %91 = vector.broadcast %cst_74 : f32 to vector<1x128xf32>
    %92 = arith.subf %91, %90 : vector<1x128xf32>
    %93 = math.exp %92 : vector<1x128xf32>
    %cst_75 = arith.constant 1.000000e+00 : f32
    %94 = vector.broadcast %cst_75 : f32 to vector<1x128xf32>
    %95 = arith.addf %94, %93 : vector<1x128xf32>
    %cst_76 = arith.constant 1.000000e+00 : f32
    %96 = vector.broadcast %cst_76 : f32 to vector<1x128xf32>
    %97 = arith.divf %96, %95 : vector<1x128xf32>
    %c0_77 = arith.constant 0 : index
    %c0_78 = arith.constant 0 : index
    %c0_79 = arith.constant 0 : index
    %98 = vector.load %arg14[%c0_77, %c0_78, %c0_79] : memref<1x1x128xf32, #tpu.memory_space<vmem>>, vector<1x1x128xf32>
    %99 = vector.shape_cast %98 : vector<1x1x128xf32> to vector<1x128xf32>
    %100 = vector.shape_cast %97 : vector<1x128xf32> to vector<1x1x128xf32>
    tpu.vector_store %arg14[%c0_77, %c0_78, %c0_79], %100 {strides = array<i32>} : memref<1x1x128xf32, #tpu.memory_space<vmem>>, vector<1x1x128xf32>,
    return
  }
  func.func @transform_0(%arg0: i32) -> (i32, i32, i32) {
    %c0_i32 = arith.constant 0 : i32
    %c0_i32_0 = arith.constant 0 : i32
    %c0_i32_1 = arith.constant 0 : i32
    return %arg0, %c0_i32, %c0_i32_0 : i32, i32, i32
  }
  func.func @transform_1(%arg0: i32) -> (i32, i32) {
    %c0_i32 = arith.constant 0 : i32
    %c0_i32_0 = arith.constant 0 : i32
    %c0_i32_1 = arith.constant 0 : i32
    return %c0_i32, %c0_i32_0 : i32, i32
  }
  func.func @transform_2(%arg0: i32) -> (i32, i32) {
    %c0_i32 = arith.constant 0 : i32
    %c0_i32_0 = arith.constant 0 : i32
    %c0_i32_1 = arith.constant 0 : i32
    return %c0_i32, %c0_i32_0 : i32, i32
  }
  func.func @transform_3(%arg0: i32) -> (i32, i32) {
    %c0_i32 = arith.constant 0 : i32
    %c0_i32_0 = arith.constant 0 : i32
    %c0_i32_1 = arith.constant 0 : i32
    return %c0_i32, %c0_i32_0 : i32, i32
  }
  func.func @transform_4(%arg0: i32) -> (i32, i32) {
    %c0_i32 = arith.constant 0 : i32
    %c0_i32_0 = arith.constant 0 : i32
    %c0_i32_1 = arith.constant 0 : i32
    return %c0_i32, %c0_i32_0 : i32, i32
  }
  func.func @transform_5(%arg0: i32) -> (i32, i32) {
    %c0_i32 = arith.constant 0 : i32
    %c0_i32_0 = arith.constant 0 : i32
    %c0_i32_1 = arith.constant 0 : i32
    return %c0_i32, %c0_i32_0 : i32, i32
  }
  func.func @transform_6(%arg0: i32) -> (i32, i32) {
    %c0_i32 = arith.constant 0 : i32
    %c0_i32_0 = arith.constant 0 : i32
    %c0_i32_1 = arith.constant 0 : i32
    return %c0_i32, %c0_i32_0 : i32, i32
  }
  func.func @transform_7(%arg0: i32) -> (i32, i32) {
    %c0_i32 = arith.constant 0 : i32
    %c0_i32_0 = arith.constant 0 : i32
    %c0_i32_1 = arith.constant 0 : i32
    return %c0_i32, %c0_i32_0 : i32, i32
  }
  func.func @transform_8(%arg0: i32) -> (i32, i32) {
    %c0_i32 = arith.constant 0 : i32
    %c0_i32_0 = arith.constant 0 : i32
    %c0_i32_1 = arith.constant 0 : i32
    return %c0_i32, %c0_i32_0 : i32, i32
  }
  func.func @transform_9(%arg0: i32) -> (i32, i32) {
    %c0_i32 = arith.constant 0 : i32
    %c0_i32_0 = arith.constant 0 : i32
    %c0_i32_1 = arith.constant 0 : i32
    return %c0_i32, %c0_i32_0 : i32, i32
  }
  func.func @transform_10(%arg0: i32) -> (i32, i32) {
    %c0_i32 = arith.constant 0 : i32
    %c0_i32_0 = arith.constant 0 : i32
    %c0_i32_1 = arith.constant 0 : i32
    return %c0_i32, %c0_i32_0 : i32, i32
  }
  func.func @transform_11(%arg0: i32) -> (i32, i32) {
    %c0_i32 = arith.constant 0 : i32
    %c0_i32_0 = arith.constant 0 : i32
    %c0_i32_1 = arith.constant 0 : i32
    return %c0_i32, %c0_i32_0 : i32, i32
  }
  func.func @transform_12(%arg0: i32) -> (i32, i32) {
    %c0_i32 = arith.constant 0 : i32
    %c0_i32_0 = arith.constant 0 : i32
    %c0_i32_1 = arith.constant 0 : i32
    return %c0_i32, %c0_i32_0 : i32, i32
  }
  func.func @transform_13(%arg0: i32) -> (i32, i32, i32) {
    %c0_i32 = arith.constant 0 : i32
    %c0_i32_0 = arith.constant 0 : i32
    %c0_i32_1 = arith.constant 0 : i32
    return %arg0, %c0_i32, %c0_i32_0 : i32, i32, i32
  }
}

</mosaic_0001>

<llo_original>
// kernel: one_d_net_scaled.1
$region0: #{one_d_net_scaled.1}
  #allocation0 [shape = 'u32[]', space=smem, size = 0x4, offset = 0x4, fixed_abs, tag = 'smem constant byte address 0x4 - core index']
  #allocation1 [shape = 'u32[144,128]{1,0:T(1,128)}', space=vmem, size = 0x12000, scoped, tag = 'internal scratch']
  #allocation2 [shape = 'f32[198,128]{1,0:T(8,128)}', space=vmem, size = 0x19000, scoped, tag = 'scratch operand']
  #allocation3 [shape = 'f32[99,128]{1,0:T(8,128)}', space=vmem, size = 0xd000, scoped, tag = 'scratch operand']
  #allocation4 [shape = 'f32[48,128]{1,0:T(8,128)}', space=vmem, size = 0x6000, scoped, tag = 'scratch operand']
  #allocation5 [shape = 'f32[1,1152]{1,0:T(1,128)}', space=vmem, size = 0x1200, scoped, tag = 'scratch operand']
  %s0 = inlined_call_operand.vmem [shape: bf16[2,198,48], index: 0, kind: input, shape index: {}]
  %s1 = inlined_call_operand.vmem [shape: bf16[48,128], index: 1, kind: input, shape index: {}]
  %s2 = inlined_call_operand.vmem [shape: f32[1,128], index: 2, kind: input, shape index: {}]
  %s3 = inlined_call_operand.vmem [shape: bf16[384,128], index: 3, kind: input, shape index: {}]
  %s4 = inlined_call_operand.vmem [shape: f32[1,128], index: 4, kind: input, shape index: {}]
  %s5 = inlined_call_operand.vmem [shape: bf16[384,128], index: 5, kind: input, shape index: {}]
  %s6 = inlined_call_operand.vmem [shape: f32[1,128], index: 6, kind: input, shape index: {}]
  %s7 = inlined_call_operand.vmem [shape: bf16[1152,512], index: 7, kind: input, shape index: {}]
  %s8 = inlined_call_operand.vmem [shape: f32[1,512], index: 8, kind: input, shape index: {}]
  %s9 = inlined_call_operand.vmem [shape: bf16[512,128], index: 9, kind: input, shape index: {}]
  %s10 = inlined_call_operand.vmem [shape: f32[1,128], index: 10, kind: input, shape index: {}]
  %s11 = inlined_call_operand.vmem [shape: bf16[128,128], index: 11, kind: input, shape index: {}]
  %s12 = inlined_call_operand.vmem [shape: f32[1,128], index: 12, kind: input, shape index: {}]
  %s13 = inlined_call_operand.vmem [shape: f32[2,1,128], index: 13, kind: output, shape index: {}]
  %s14 = sld [smem:[#allocation0]]
  $region85: #{one_d_net_scaled.1} parent=0
    _
  %s16 = ssub.s32 1, %s14
  %s17 = scalar_select 0, %s16, %s14
  loop: start=0, step=1, limit=4
  $region2: #{one_d_net_scaled.1} parent=0 // loop_pre_header
    _
  $region3: #{one_d_net_scaled.1} parent=0 // loop_header
    %s19 = sphi 0, %s23
    %p20 = scmp.ge.s32.totalorder %s19, 4
    %s29 = sphi 0, %s31
    %s32 = sphi 0, %s29
    %s33 = sphi 0, %s32
    %s49 = sphi 0, %s33
    %s53 = sphi 0, %s53
    %s55 = sphi 0, %s53
    %s56 = sphi 0, %s55
    %s70 = sphi 0, %s56
    %s74 = sphi 0, %s74
    %s76 = sphi 0, %s74
    %s77 = sphi 0, %s76
    %s91 = sphi 0, %s77
    %s95 = sphi 0, %s95
    %s97 = sphi 0, %s95
    %s98 = sphi 0, %s97
    %s112 = sphi 0, %s98
    %s116 = sphi 0, %s116
    %s118 = sphi 0, %s116
    %s119 = sphi 0, %s118
    %s133 = sphi 0, %s119
    %s137 = sphi 0, %s137
    %s139 = sphi 0, %s137
    %s140 = sphi 0, %s139
    %s154 = sphi 0, %s140
    %s158 = sphi 0, %s158
    %s160 = sphi 0, %s158
    %s161 = sphi 0, %s160
    %s175 = sphi 0, %s161
    %s179 = sphi 0, %s179
    %s181 = sphi 0, %s179
    %s182 = sphi 0, %s181
    %s196 = sphi 0, %s182
    %s200 = sphi 0, %s200
    %s202 = sphi 0, %s200
    %s203 = sphi 0, %s202
    %s217 = sphi 0, %s203
    %s221 = sphi 0, %s221
    %s223 = sphi 0, %s221
    %s224 = sphi 0, %s223
    %s238 = sphi 0, %s224
    %s242 = sphi 0, %s242
    %s244 = sphi 0, %s242
    %s245 = sphi 0, %s244
    %s259 = sphi 0, %s245
    %s263 = sphi 0, %s263
    %s265 = sphi 0, %s263
    %s266 = sphi 0, %s265
    %s280 = sphi 0, %s266
    %s284 = sphi 0, %s284
    %s286 = sphi 0, %s284
    %s287 = sphi 0, %s286
    %s301 = sphi 0, %s287
    %s307 = sphi 0, %s309
    %s310 = sphi 0, %s307
    %s311 = sphi 0, %s310
    %s327 = sphi 0, %s311
  $region4: #{one_d_net_scaled.1} parent=0 // loop_header_branch
    %22 = sbr.rel (%p20) target = $region8
  $region5: #{one_d_net_scaled.1} parent=0 // loop_body
    %s24 = ssub.s32 %s19, 1
    %s25 = ssub.s32 %s19, 2
    %s26 = sadd.s32 %s19, 1
    %s27 = ssub.s32 %s19, %s26
    %p28 = scmp.eq.s32.totalorder %s27, 0
    %s30 = sadd.s32 %s29, 1
    %s31 = scalar_select %p28, %s29, %s30
    %p34 = pneg %p28
    %p35 = scmp.eq.s32.totalorder %s19, 1
    %p36 = por %p34, %p35
    %p37 = scmp.ne.s32.totalorder %s29, %s32
    %p38 = scmp.eq.s32.totalorder %s19, 0
    %p39 = por %p37, %p38
    %p40 = scmp.ne.s32.totalorder %s29, %s32
    %p41 = scmp.eq.s32.totalorder %s24, 1
    %p42 = por %p40, %p41
    %p43 = scmp.ne.s32.totalorder %s32, %s33
    %p44 = scmp.eq.s32.totalorder %s24, 0
    %p45 = por %p43, %p44
    %p46 = scmp.ne.s32.totalorder %s32, %s33
    %p47 = scmp.eq.s32.totalorder %s25, 1
    %p48 = por %p46, %p47
    %p50 = scmp.ne.s32.totalorder %s33, %s49
    %p51 = scmp.eq.s32.totalorder %s25, 0
    %p52 = por %p50, %p51
    %s54 = sadd.s32 %s53, 1
    %p57 = scmp.eq.s32.totalorder %s19, 1
    %p58 = scmp.ne.s32.totalorder %s53, %s55
    %p59 = scmp.eq.s32.totalorder %s19, 0
    %p60 = por %p58, %p59
    %p61 = scmp.ne.s32.totalorder %s53, %s55
    %p62 = scmp.eq.s32.totalorder %s24, 1
    %p63 = por %p61, %p62
    %p64 = scmp.ne.s32.totalorder %s55, %s56
    %p65 = scmp.eq.s32.totalorder %s24, 0
    %p66 = por %p64, %p65
    %p67 = scmp.ne.s32.totalorder %s55, %s56
    %p68 = scmp.eq.s32.totalorder %s25, 1
    %p69 = por %p67, %p68
    %p71 = scmp.ne.s32.totalorder %s56, %s70
    %p72 = scmp.eq.s32.totalorder %s25, 0
    %p73 = por %p71, %p72
    %s75 = sadd.s32 %s74, 1
    %p78 = scmp.eq.s32.totalorder %s19, 1
    %p79 = scmp.ne.s32.totalorder %s74, %s76
    %p80 = scmp.eq.s32.totalorder %s19, 0
    %p81 = por %p79, %p80
    %p82 = scmp.ne.s32.totalorder %s74, %s76
    %p83 = scmp.eq.s32.totalorder %s24, 1
    %p84 = por %p82, %p83
    %p85 = scmp.ne.s32.totalorder %s76, %s77
    %p86 = scmp.eq.s32.totalorder %s24, 0
    %p87 = por %p85, %p86
    %p88 = scmp.ne.s32.totalorder %s76, %s77
    %p89 = scmp.eq.s32.totalorder %s25, 1
    %p90 = por %p88, %p89
    %p92 = scmp.ne.s32.totalorder %s77, %s91
    %p93 = scmp.eq.s32.totalorder %s25, 0
    %p94 = por %p92, %p93
    %s96 = sadd.s32 %s95, 1
    %p99 = scmp.eq.s32.totalorder %s19, 1
    %p100 = scmp.ne.s32.totalorder %s95, %s97
    %p101 = scmp.eq.s32.totalorder %s19, 0
    %p102 = por %p100, %p101
    %p103 = scmp.ne.s32.totalorder %s95, %s97
    %p104 = scmp.eq.s32.totalorder %s24, 1
    %p105 = por %p103, %p104
    %p106 = scmp.ne.s32.totalorder %s97, %s98
    %p107 = scmp.eq.s32.totalorder %s24, 0
    %p108 = por %p106, %p107
    %p109 = scmp.ne.s32.totalorder %s97, %s98
    %p110 = scmp.eq.s32.totalorder %s25, 1
    %p111 = por %p109, %p110
    %p113 = scmp.ne.s32.totalorder %s98, %s112
    %p114 = scmp.eq.s32.totalorder %s25, 0
    %p115 = por %p113, %p114
    %s117 = sadd.s32 %s116, 1
    %p120 = scmp.eq.s32.totalorder %s19, 1
    %p121 = scmp.ne.s32.totalorder %s116, %s118
    %p122 = scmp.eq.s32.totalorder %s19, 0
    %p123 = por %p121, %p122
    %p124 = scmp.ne.s32.totalorder %s116, %s118
    %p125 = scmp.eq.s32.totalorder %s24, 1
    %p126 = por %p124, %p125
    %p127 = scmp.ne.s32.totalorder %s118, %s119
    %p128 = scmp.eq.s32.totalorder %s24, 0
    %p129 = por %p127, %p128
    %p130 = scmp.ne.s32.totalorder %s118, %s119
    %p131 = scmp.eq.s32.totalorder %s25, 1
    %p132 = por %p130, %p131
    %p134 = scmp.ne.s32.totalorder %s119, %s133
    %p135 = scmp.eq.s32.totalorder %s25, 0
    %p136 = por %p134, %p135
    %s138 = sadd.s32 %s137, 1
    %p141 = scmp.eq.s32.totalorder %s19, 1
    %p142 = scmp.ne.s32.totalorder %s137, %s139
    %p143 = scmp.eq.s32.totalorder %s19, 0
    %p144 = por %p142, %p143
    %p145 = scmp.ne.s32.totalorder %s137, %s139
    %p146 = scmp.eq.s32.totalorder %s24, 1
    %p147 = por %p145, %p146
    %p148 = scmp.ne.s32.totalorder %s139, %s140
    %p149 = scmp.eq.s32.totalorder %s24, 0
    %p150 = por %p148, %p149
    %p151 = scmp.ne.s32.totalorder %s139, %s140
    %p152 = scmp.eq.s32.totalorder %s25, 1
    %p153 = por %p151, %p152
    %p155 = scmp.ne.s32.totalorder %s140, %s154
    %p156 = scmp.eq.s32.totalorder %s25, 0
    %p157 = por %p155, %p156
    %s159 = sadd.s32 %s158, 1
    %p162 = scmp.eq.s32.totalorder %s19, 1
    %p163 = scmp.ne.s32.totalorder %s158, %s160
    %p164 = scmp.eq.s32.totalorder %s19, 0
    %p165 = por %p163, %p164
    %p166 = scmp.ne.s32.totalorder %s158, %s160
    %p167 = scmp.eq.s32.totalorder %s24, 1
    %p168 = por %p166, %p167
    %p169 = scmp.ne.s32.totalorder %s160, %s161
    %p170 = scmp.eq.s32.totalorder %s24, 0
    %p171 = por %p169, %p170
    %p172 = scmp.ne.s32.totalorder %s160, %s161
    %p173 = scmp.eq.s32.totalorder %s25, 1
    %p174 = por %p172, %p173
    %p176 = scmp.ne.s32.totalorder %s161, %s175
    %p177 = scmp.eq.s32.totalorder %s25, 0
    %p178 = por %p176, %p177
    %s180 = sadd.s32 %s179, 1
    %p183 = scmp.eq.s32.totalorder %s19, 1
    %p184 = scmp.ne.s32.totalorder %s179, %s181
    %p185 = scmp.eq.s32.totalorder %s19, 0
    %p186 = por %p184, %p185
    %p187 = scmp.ne.s32.totalorder %s179, %s181
    %p188 = scmp.eq.s32.totalorder %s24, 1
    %p189 = por %p187, %p188
    %p190 = scmp.ne.s32.totalorder %s181, %s182
    %p191 = scmp.eq.s32.totalorder %s24, 0
    %p192 = por %p190, %p191
    %p193 = scmp.ne.s32.totalorder %s181, %s182
    %p194 = scmp.eq.s32.totalorder %s25, 1
    %p195 = por %p193, %p194
    %p197 = scmp.ne.s32.totalorder %s182, %s196
    %p198 = scmp.eq.s32.totalorder %s25, 0
    %p199 = por %p197, %p198
    %s201 = sadd.s32 %s200, 1
    %p204 = scmp.eq.s32.totalorder %s19, 1
    %p205 = scmp.ne.s32.totalorder %s200, %s202
    %p206 = scmp.eq.s32.totalorder %s19, 0
    %p207 = por %p205, %p206
    %p208 = scmp.ne.s32.totalorder %s200, %s202
    %p209 = scmp.eq.s32.totalorder %s24, 1
    %p210 = por %p208, %p209
    %p211 = scmp.ne.s32.totalorder %s202, %s203
    %p212 = scmp.eq.s32.totalorder %s24, 0
    %p213 = por %p211, %p212
    %p214 = scmp.ne.s32.totalorder %s202, %s203
    %p215 = scmp.eq.s32.totalorder %s25, 1
    %p216 = por %p214, %p215
    %p218 = scmp.ne.s32.totalorder %s203, %s217
    %p219 = scmp.eq.s32.totalorder %s25, 0
    %p220 = por %p218, %p219
    %s222 = sadd.s32 %s221, 1
    %p225 = scmp.eq.s32.totalorder %s19, 1
    %p226 = scmp.ne.s32.totalorder %s221, %s223
    %p227 = scmp.eq.s32.totalorder %s19, 0
    %p228 = por %p226, %p227
    %p229 = scmp.ne.s32.totalorder %s221, %s223
    %p230 = scmp.eq.s32.totalorder %s24, 1
    %p231 = por %p229, %p230
    %p232 = scmp.ne.s32.totalorder %s223, %s224
    %p233 = scmp.eq.s32.totalorder %s24, 0
    %p234 = por %p232, %p233
    %p235 = scmp.ne.s32.totalorder %s223, %s224
    %p236 = scmp.eq.s32.totalorder %s25, 1
    %p237 = por %p235, %p236
    %p239 = scmp.ne.s32.totalorder %s224, %s238
    %p240 = scmp.eq.s32.totalorder %s25, 0
    %p241 = por %p239, %p240
    %s243 = sadd.s32 %s242, 1
    %p246 = scmp.eq.s32.totalorder %s19, 1
    %p247 = scmp.ne.s32.totalorder %s242, %s244
    %p248 = scmp.eq.s32.totalorder %s19, 0
    %p249 = por %p247, %p248
    %p250 = scmp.ne.s32.totalorder %s242, %s244
    %p251 = scmp.eq.s32.totalorder %s24, 1
    %p252 = por %p250, %p251
    %p253 = scmp.ne.s32.totalorder %s244, %s245
    %p254 = scmp.eq.s32.totalorder %s24, 0
    %p255 = por %p253, %p254
    %p256 = scmp.ne.s32.totalorder %s244, %s245
    %p257 = scmp.eq.s32.totalorder %s25, 1
    %p258 = por %p256, %p257
    %p260 = scmp.ne.s32.totalorder %s245, %s259
    %p261 = scmp.eq.s32.totalorder %s25, 0
    %p262 = por %p260, %p261
    %s264 = sadd.s32 %s263, 1
    %p267 = scmp.eq.s32.totalorder %s19, 1
    %p268 = scmp.ne.s32.totalorder %s263, %s265
    %p269 = scmp.eq.s32.totalorder %s19, 0
    %p270 = por %p268, %p269
    %p271 = scmp.ne.s32.totalorder %s263, %s265
    %p272 = scmp.eq.s32.totalorder %s24, 1
    %p273 = por %p271, %p272
    %p274 = scmp.ne.s32.totalorder %s265, %s266
    %p275 = scmp.eq.s32.totalorder %s24, 0
    %p276 = por %p274, %p275
    %p277 = scmp.ne.s32.totalorder %s265, %s266
    %p278 = scmp.eq.s32.totalorder %s25, 1
    %p279 = por %p277, %p278
    %p281 = scmp.ne.s32.totalorder %s266, %s280
    %p282 = scmp.eq.s32.totalorder %s25, 0
    %p283 = por %p281, %p282
    %s285 = sadd.s32 %s284, 1
    %p288 = scmp.eq.s32.totalorder %s19, 1
    %p289 = scmp.ne.s32.totalorder %s284, %s286
    %p290 = scmp.eq.s32.totalorder %s19, 0
    %p291 = por %p289, %p290
    %p292 = scmp.ne.s32.totalorder %s284, %s286
    %p293 = scmp.eq.s32.totalorder %s24, 1
    %p294 = por %p292, %p293
    %p295 = scmp.ne.s32.totalorder %s286, %s287
    %p296 = scmp.eq.s32.totalorder %s24, 0
    %p297 = por %p295, %p296
    %p298 = scmp.ne.s32.totalorder %s286, %s287
    %p299 = scmp.eq.s32.totalorder %s25, 1
    %p300 = por %p298, %p299
    %p302 = scmp.ne.s32.totalorder %s287, %s301
    %p303 = scmp.eq.s32.totalorder %s25, 0
    %p304 = por %p302, %p303
    %s305 = ssub.s32 %s19, %s26
    %p306 = scmp.eq.s32.totalorder %s305, 0
    %s308 = sadd.s32 %s307, 1
    %s309 = scalar_select %p306, %s307, %s308
    %p312 = pneg %p306
    %p313 = scmp.eq.s32.totalorder %s19, 1
    %p314 = por %p312, %p313
    %p315 = scmp.ne.s32.totalorder %s307, %s310
    %p316 = scmp.eq.s32.totalorder %s19, 0
    %p317 = por %p315, %p316
    %p318 = scmp.ne.s32.totalorder %s307, %s310
    %p319 = scmp.eq.s32.totalorder %s24, 1
    %p320 = por %p318, %p319
    %p321 = scmp.ne.s32.totalorder %s310, %s311
    %p322 = scmp.eq.s32.totalorder %s24, 0
    %p323 = por %p321, %p322
    %p324 = scmp.ne.s32.totalorder %s310, %s311
    %p325 = scmp.eq.s32.totalorder %s25, 1
    %p326 = por %p324, %p325
    %p328 = scmp.ne.s32.totalorder %s311, %s327
    %p329 = scmp.eq.s32.totalorder %s25, 0
    %p330 = por %p328, %p329
    %p331 = scmp.le.s32.totalorder 1, %s19
    %p332 = scmp.lt.s32.totalorder %s19, 3
    %p333 = pnand %p331, %p332
    %p334 = pneg %p333
    // Predicated region
    $region9: #{one_d_net_scaled.1} parent=5 // pred_check
      _
    $region10: #{one_d_net_scaled.1} parent=5 // pred_check_branch
      %336 = sbr.rel (%p333) target = $region12
    $region11: #{one_d_net_scaled.1} parent=5 // pred_region
      %s337 = ssub.s32 %s19, 1
      // Predicated region
      $region13: #{one_d_net_scaled.1} parent=11 // pred_check
        %p338 = pneg %p66
      $region14: #{one_d_net_scaled.1} parent=11 // pred_check_branch
        %340 = sbr.rel (%p338) target = $region16
      $region15: #{one_d_net_scaled.1} parent=11 // pred_region
        _
      $region16: #{one_d_net_scaled.1} parent=11 // pred_fallthru
        _
      // Predicated region
      $region17: #{one_d_net_scaled.1} parent=11 // pred_check
        %p341 = pneg %p87
      $region18: #{one_d_net_scaled.1} parent=11 // pred_check_branch
        %343 = sbr.rel (%p341) target = $region20
      $region19: #{one_d_net_scaled.1} parent=11 // pred_region
        _
      $region20: #{one_d_net_scaled.1} parent=11 // pred_fallthru
        _
      // Predicated region
      $region21: #{one_d_net_scaled.1} parent=11 // pred_check
        %p344 = pneg %p108
      $region22: #{one_d_net_scaled.1} parent=11 // pred_check_branch
        %346 = sbr.rel (%p344) target = $region24
      $region23: #{one_d_net_scaled.1} parent=11 // pred_region
        _
      $region24: #{one_d_net_scaled.1} parent=11 // pred_fallthru
        _
      // Predicated region
      $region25: #{one_d_net_scaled.1} parent=11 // pred_check
        %p347 = pneg %p129
      $region26: #{one_d_net_scaled.1} parent=11 // pred_check_branch
        %349 = sbr.rel (%p347) target = $region28
      $region27: #{one_d_net_scaled.1} parent=11 // pred_region
        _
      $region28: #{one_d_net_scaled.1} parent=11 // pred_fallthru
        _
      // Predicated region
      $region29: #{one_d_net_scaled.1} parent=11 // pred_check
        %p350 = pneg %p150
      $region30: #{one_d_net_scaled.1} parent=11 // pred_check_branch
        %352 = sbr.rel (%p350) target = $region32
      $region31: #{one_d_net_scaled.1} parent=11 // pred_region
        _
      $region32: #{one_d_net_scaled.1} parent=11 // pred_fallthru
        _
      // Predicated region
      $region33: #{one_d_net_scaled.1} parent=11 // pred_check
        %p353 = pneg %p171
      $region34: #{one_d_net_scaled.1} parent=11 // pred_check_branch
        %355 = sbr.rel (%p353) target = $region36
      $region35: #{one_d_net_scaled.1} parent=11 // pred_region
        _
      $region36: #{one_d_net_scaled.1} parent=11 // pred_fallthru
        _
      // Predicated region
      $region37: #{one_d_net_scaled.1} parent=11 // pred_check
        %p356 = pneg %p192
      $region38: #{one_d_net_scaled.1} parent=11 // pred_check_branch
        %358 = sbr.rel (%p356) target = $region40
      $region39: #{one_d_net_scaled.1} parent=11 // pred_region
        _
      $region40: #{one_d_net_scaled.1} parent=11 // pred_fallthru
        _
      // Predicated region
      $region41: #{one_d_net_scaled.1} parent=11 // pred_check
        %p359 = pneg %p213
      $region42: #{one_d_net_scaled.1} parent=11 // pred_check_branch
        %361 = sbr.rel (%p359) target = $region44
      $region43: #{one_d_net_scaled.1} parent=11 // pred_region
        _
      $region44: #{one_d_net_scaled.1} parent=11 // pred_fallthru
        _
      // Predicated region
      $region45: #{one_d_net_scaled.1} parent=11 // pred_check
        %p362 = pneg %p234
      $region46: #{one_d_net_scaled.1} parent=11 // pred_check_branch
        %364 = sbr.rel (%p362) target = $region48
      $region47: #{one_d_net_scaled.1} parent=11 // pred_region
        _
      $region48: #{one_d_net_scaled.1} parent=11 // pred_fallthru
        _
      // Predicated region
      $region49: #{one_d_net_scaled.1} parent=11 // pred_check
        %p365 = pneg %p255
      $region50: #{one_d_net_scaled.1} parent=11 // pred_check_branch
        %367 = sbr.rel (%p365) target = $region52
      $region51: #{one_d_net_scaled.1} parent=11 // pred_region
        _
      $region52: #{one_d_net_scaled.1} parent=11 // pred_fallthru
        _
      // Predicated region
      $region53: #{one_d_net_scaled.1} parent=11 // pred_check
        %p368 = pneg %p276
      $region54: #{one_d_net_scaled.1} parent=11 // pred_check_branch
        %370 = sbr.rel (%p368) target = $region56
      $region55: #{one_d_net_scaled.1} parent=11 // pred_region
        _
      $region56: #{one_d_net_scaled.1} parent=11 // pred_fallthru
        _
      // Predicated region
      $region57: #{one_d_net_scaled.1} parent=11 // pred_check
        %p371 = pneg %p297
      $region58: #{one_d_net_scaled.1} parent=11 // pred_check_branch
        %373 = sbr.rel (%p371) target = $region60
      $region59: #{one_d_net_scaled.1} parent=11 // pred_region
        _
      $region60: #{one_d_net_scaled.1} parent=11 // pred_fallthru
        _
    $region12: #{one_d_net_scaled.1} parent=5 // pred_fallthru
      _
    %p374 = scmp.lt.s32.totalorder %s19, 2
    // Predicated region
    $region61: #{one_d_net_scaled.1} parent=5 // pred_check
      %p375 = pneg %p374
    $region62: #{one_d_net_scaled.1} parent=5 // pred_check_branch
      %377 = sbr.rel (%p375) target = $region64
    $region63: #{one_d_net_scaled.1} parent=5 // pred_region
      // Predicated region
      $region65: #{one_d_net_scaled.1} parent=63 // pred_check
        %p378 = pneg %p39
      $region66: #{one_d_net_scaled.1} parent=63 // pred_check_branch
        %380 = sbr.rel (%p378) target = $region68
      $region67: #{one_d_net_scaled.1} parent=63 // pred_region
        %p381 = scmp.lt.s32.totalorder %s19, 1
        %s382 = scalar_select %p381, %s19, 1
        %s383 = smul.addr %s382, 25
        %s384 = smul.addr %s383, 4
        %s385 = scalar_lea.vmem %s0, %s384
      $region68: #{one_d_net_scaled.1} parent=63 // pred_fallthru
        _
    $region64: #{one_d_net_scaled.1} parent=5 // pred_fallthru
      _
    %p386 = scmp.le.s32.totalorder 1, %s19
    %p387 = scmp.lt.s32.totalorder %s19, 3
    %p388 = pnand %p386, %p387
    %p389 = pneg %p388
    // Predicated region
    $region69: #{one_d_net_scaled.1} parent=5 // pred_check
      _
    $region70: #{one_d_net_scaled.1} parent=5 // pred_check_branch
      %391 = sbr.rel (%p388) target = $region72
    $region71: #{one_d_net_scaled.1} parent=5 // pred_region
      %s392 = ssub.s32 %s19, 1
      %p393 = scmp.lt.s32.totalorder %s24, 1
      %s394 = scalar_select %p393, %s24, 1
      %s395 = smul.addr %s394, 25
      %s396 = smul.addr %s395, 4
      %s397 = scalar_lea.vmem %s0, %s396
      %p398 = pneg %p45
      %p399 = pneg %p42
      %p400 = pneg %p66
      %p401 = pneg %p63
      %p402 = pneg %p87
      %p403 = pneg %p84
      %p404 = pneg %p108
      %p405 = pneg %p105
      %p406 = pneg %p129
      %p407 = pneg %p126
      %p408 = pneg %p150
      %p409 = pneg %p147
      %p410 = pneg %p171
      %p411 = pneg %p168
      %p412 = pneg %p192
      %p413 = pneg %p189
      %p414 = pneg %p213
      %p415 = pneg %p210
      %p416 = pneg %p234
      %p417 = pneg %p231
      %p418 = pneg %p255
      %p419 = pneg %p252
      %p420 = pneg %p276
      %p421 = pneg %p273
      %p422 = pneg %p297
      %p423 = pneg %p294
      %p424 = pneg %p323
      %p425 = pneg %p320
      %p426 = scmp.lt.s32.totalorder %s24, 1
      %s427 = scalar_select %p426, %s24, 1
      %s428 = scalar_lea.vmem %s13, %s427
      %p429 = scmp.lt.s32.totalorder %s24, 1
      %s430 = scalar_select %p429, %s24, 1
      %s431 = smul.addr %s430, 25
      %s432 = smul.addr %s431, 4
      %s433 = scalar_lea.vmem %s0, %s432
      %p434 = scmp.lt.s32.totalorder %s24, 1
      %s435 = scalar_select %p434, %s24, 1
      %s436 = scalar_lea.vmem %s13, %s435
      %v438 = vld [vmem:[%s433] sm:$0xf]
      %v439 = vld [vmem:[%s433 + $0x4] sm:$0xf]
      %v440 = vld [vmem:[%s433 + $0x8] sm:$0xf]
      %v441 = vld [vmem:[%s433 + $0xc] sm:$0xf]
      %v442 = vld [vmem:[%s433 + $0x10] sm:$0xf]
      %v443 = vld [vmem:[%s433 + $0x14] sm:$0xf]
      %v444 = vld [vmem:[%s433 + $0x18] sm:$0xf]
      %v445 = vld [vmem:[%s433 + $0x1c] sm:$0xf]
      %v446 = vld [vmem:[%s433 + $0x20] sm:$0xf]
      %v447 = vld [vmem:[%s433 + $0x24] sm:$0xf]
      %v448 = vld [vmem:[%s433 + $0x28] sm:$0xf]
      %v449 = vld [vmem:[%s433 + $0x2c] sm:$0xf]
      %v450 = vld [vmem:[%s433 + $0x30] sm:$0xf]
      %v451 = vld [vmem:[%s433 + $0x34] sm:$0xf]
      %v452 = vld [vmem:[%s433 + $0x38] sm:$0xf]
      %v453 = vld [vmem:[%s433 + $0x3c] sm:$0xf]
      %v454 = vld [vmem:[%s433 + $0x40] sm:$0xf]
      %v455 = vld [vmem:[%s433 + $0x44] sm:$0xf]
      %v456 = vld [vmem:[%s433 + $0x48] sm:$0xf]
      %v457 = vld [vmem:[%s433 + $0x4c] sm:$0xf]
      %v458 = vld [vmem:[%s433 + $0x50] sm:$0xf]
      %v459 = vld [vmem:[%s433 + $0x54] sm:$0xf]
      %v460 = vld [vmem:[%s433 + $0x58] sm:$0xf]
      %v461 = vld [vmem:[%s433 + $0x5c] sm:$0xf]
      %v462 = vld [vmem:[%s433 + $0x60] sm:$0x7]
      %v463 = vld [vmem:[%s1] sm:$0xf]
      %v464 = vld [vmem:[%s1 + $0x4] sm:$0xf]
      %v465 = vld [vmem:[%s1 + $0x8] sm:$0xf]
      %v466 = vld [vmem:[%s1 + $0xc] sm:$0xf]
      %v467 = vld [vmem:[%s1 + $0x10] sm:$0xf]
      %v468 = vld [vmem:[%s1 + $0x14] sm:$0xf]
      %v469 = vld [vmem:[%s2] sm:$0x1]
      %v471 = vlaneseq
      %v472 = vshrl.u32 %v471, 7
      %v473 = vsub.s32 0, %v472
      %v474 = vrot.slane %v469, %v473
      %v501 = vunpack.c.l.b16 %v438
      %v502 = vunpack.c.l.b16 %v439
      %v503 = vunpack.c.l.b16 %v440
      %v504 = vunpack.c.l.b16 %v441
      %v505 = vunpack.c.l.b16 %v442
      %v506 = vunpack.c.l.b16 %v443
      %v507 = vunpack.c.l.b16 %v444
      %v508 = vunpack.c.l.b16 %v445
      %v509 = vunpack.c.l.b16 %v446
      %v510 = vunpack.c.l.b16 %v447
      %v511 = vunpack.c.l.b16 %v448
      %v512 = vunpack.c.l.b16 %v449
      %v513 = vunpack.c.l.b16 %v450
      %v514 = vunpack.c.l.b16 %v451
      %v515 = vunpack.c.l.b16 %v452
      %v516 = vunpack.c.l.b16 %v453
      %v517 = vunpack.c.l.b16 %v454
      %v518 = vunpack.c.l.b16 %v455
      %v519 = vunpack.c.l.b16 %v456
      %v520 = vunpack.c.l.b16 %v457
      %v521 = vunpack.c.l.b16 %v458
      %v522 = vunpack.c.l.b16 %v459
      %v523 = vunpack.c.l.b16 %v460
      %v524 = vunpack.c.l.b16 %v461
      %v525 = vunpack.c.l.b16 %v462
      %v526 = vpack.c.b16 %v502, %v501
      %v527 = vpack.c.b16 %v504, %v503
      %v528 = vpack.c.b16 %v506, %v505
      %v529 = vpack.c.b16 %v508, %v507
      %v530 = vpack.c.b16 %v510, %v509
      %v531 = vpack.c.b16 %v512, %v511
      %v532 = vpack.c.b16 %v514, %v513
      %v533 = vpack.c.b16 %v516, %v515
      %v534 = vpack.c.b16 %v518, %v517
      %v535 = vpack.c.b16 %v520, %v519
      %v536 = vpack.c.b16 %v522, %v521
      %v537 = vpack.c.b16 %v524, %v523
      %v538 = vpack.c.b16 %v525, %v525
      %v545 = vunpack.c.l.b16 %v463
      %v546 = vunpack.c.l.b16 %v464
      %v547 = vunpack.c.l.b16 %v465
      %v548 = vunpack.c.l.b16 %v466
      %v549 = vunpack.c.l.b16 %v467
      %v550 = vunpack.c.l.b16 %v468
      %v551 = vpack.c.b16 %v546, %v545
      %v552 = vpack.c.b16 %v548, %v547
      %v553 = vpack.c.b16 %v550, %v549
      %vm557 = vcmask 392192
      %v559 = vsel %vm557, %v526, 0
      %v562 = vsel %vm557, %v527, 0
      %v565 = vsel %vm557, %v528, 0
      %v568 = vsel %vm557, %v529, 0
      %v571 = vsel %vm557, %v530, 0
      %v574 = vsel %vm557, %v531, 0
      %v577 = vsel %vm557, %v532, 0
      %v580 = vsel %vm557, %v533, 0
      %v583 = vsel %vm557, %v534, 0
      %v586 = vsel %vm557, %v535, 0
      %v589 = vsel %vm557, %v536, 0
      %v592 = vsel %vm557, %v537, 0
      %v595 = vsel %vm557, %v538, 0
      %597 = vmatprep.subr.bf16.mxu0 0
      %598 = vmatpush1.bf16.msra.mxu0 0
      %599 = vmatprep.subr.bf16.mxu0 0
      %600 = vmatpush1.bf16.msra.mxu0 0
      %601 = vmatprep.subr.bf16.mxu0 0
      %602 = vmatpush1.bf16.msra.mxu0 0
      %603 = vmatprep.subr.bf16.mxu0 0
      %604 = vmatpush1.bf16.msra.mxu0 0
      %605 = vmatprep.subr.bf16.mxu0 0
      %606 = vmatpush1.bf16.msra.mxu0 0
      %607 = vmatprep.subr.bf16.mxu0 0
      %608 = vmatpush1.bf16.msra.mxu0 %v553
      %609 = vmatprep.subr.bf16.mxu0 0
      %610 = vmatpush1.bf16.msra.mxu0 %v552
      %611 = vmatprep.subr.bf16.mxu0 0
      %612 = vmatpush1.bf16.msra.mxu0 %v551
      %613 = vmatprep.subr.bf16.mxu0 0
      %614 = vmatpush2.bf16.msra.mxu0 0
      %615 = vmatprep.subr.bf16.mxu0 0
      %616 = vmatpush2.bf16.msra.mxu0 0
      %617 = vmatprep.subr.bf16.mxu0 0
      %618 = vmatpush2.bf16.msra.mxu0 0
      %619 = vmatprep.subr.bf16.mxu0 0
      %620 = vmatpush2.bf16.msra.mxu0 0
      %621 = vmatprep.subr.bf16.mxu0 0
      %622 = vmatpush2.bf16.msra.mxu0 0
      %623 = vmatprep.subr.bf16.mxu0 0
      %624 = vmatpush2.bf16.msra.mxu0 0
      %625 = vmatprep.subr.bf16.mxu0 0
      %626 = vmatpush2.bf16.msra.mxu0 0
      %627 = vmatprep.subr.bf16.mxu0 0
      %628 = vmatpush2.bf16.msra.mxu0 0
      %629 = vmatprep.mubr.bf16.mxu0 0
      %630 = vmatmul.mubr.bf16.gmra.mxu0 %v559
      %v631 = vpop.f32.mrf.mxu0
      %v632 = vadd.f32 %v474, %v631
      %v633 = vpop.f32.mrf.mxu0
      %v634 = vpop.f32.mrf.mxu0
      %v635 = vadd.f32 %v474, %v634
      %v636 = vpop.f32.mrf.mxu0
      %637 = vmatprep.mubr.bf16.mxu0 0
      %638 = vmatmul.mubr.bf16.gmra.mxu0 %v562
      %v639 = vpop.f32.mrf.mxu0
      %v640 = vadd.f32 %v474, %v639
      %v641 = vpop.f32.mrf.mxu0
      %v642 = vpop.f32.mrf.mxu0
      %v643 = vadd.f32 %v474, %v642
      %v644 = vpop.f32.mrf.mxu0
      %645 = vmatprep.mubr.bf16.mxu0 0
      %646 = vmatmul.mubr.bf16.gmra.mxu0 %v565
      %v647 = vpop.f32.mrf.mxu0
      %v648 = vadd.f32 %v474, %v647
      %v649 = vpop.f32.mrf.mxu0
      %v650 = vpop.f32.mrf.mxu0
      %v651 = vadd.f32 %v474, %v650
      %v652 = vpop.f32.mrf.mxu0
      %653 = vmatprep.mubr.bf16.mxu0 0
      %654 = vmatmul.mubr.bf16.gmra.mxu0 %v568
      %v655 = vpop.f32.mrf.mxu0
      %v656 = vadd.f32 %v474, %v655
      %v657 = vpop.f32.mrf.mxu0
      %v658 = vpop.f32.mrf.mxu0
      %v659 = vadd.f32 %v474, %v658
      %v660 = vpop.f32.mrf.mxu0
      %661 = vmatprep.mubr.bf16.mxu0 0
      %662 = vmatmul.mubr.bf16.gmra.mxu0 %v571
      %v663 = vpop.f32.mrf.mxu0
      %v664 = vadd.f32 %v474, %v663
      %v665 = vpop.f32.mrf.mxu0
      %v666 = vpop.f32.mrf.mxu0
      %v667 = vadd.f32 %v474, %v666
      %v668 = vpop.f32.mrf.mxu0
      %669 = vmatprep.mubr.bf16.mxu0 0
      %670 = vmatmul.mubr.bf16.gmra.mxu0 %v574
      %v671 = vpop.f32.mrf.mxu0
      %v672 = vadd.f32 %v474, %v671
      %v673 = vpop.f32.mrf.mxu0
      %v674 = vpop.f32.mrf.mxu0
      %v675 = vadd.f32 %v474, %v674
      %v676 = vpop.f32.mrf.mxu0
      %677 = vmatprep.mubr.bf16.mxu0 0
      %678 = vmatmul.mubr.bf16.gmra.mxu0 %v577
      %v679 = vpop.f32.mrf.mxu0
      %v680 = vadd.f32 %v474, %v679
      %v681 = vpop.f32.mrf.mxu0
      %v682 = vpop.f32.mrf.mxu0
      %v683 = vadd.f32 %v474, %v682
      %v684 = vpop.f32.mrf.mxu0
      %685 = vmatprep.mubr.bf16.mxu0 0
      %686 = vmatmul.mubr.bf16.gmra.mxu0 %v580
      %v687 = vpop.f32.mrf.mxu0
      %v688 = vadd.f32 %v474, %v687
      %v689 = vpop.f32.mrf.mxu0
      %v690 = vpop.f32.mrf.mxu0
      %v691 = vadd.f32 %v474, %v690
      %v692 = vpop.f32.mrf.mxu0
      %693 = vmatprep.mubr.bf16.mxu0 0
      %694 = vmatmul.mubr.bf16.gmra.mxu0 %v583
      %v695 = vpop.f32.mrf.mxu0
      %v696 = vadd.f32 %v474, %v695
      %v697 = vpop.f32.mrf.mxu0
      %v698 = vpop.f32.mrf.mxu0
      %v699 = vadd.f32 %v474, %v698
      %v700 = vpop.f32.mrf.mxu0
      %701 = vmatprep.mubr.bf16.mxu0 0
      %702 = vmatmul.mubr.bf16.gmra.mxu0 %v586
      %v703 = vpop.f32.mrf.mxu0
      %v704 = vadd.f32 %v474, %v703
      %v705 = vpop.f32.mrf.mxu0
      %v706 = vpop.f32.mrf.mxu0
      %v707 = vadd.f32 %v474, %v706
      %v708 = vpop.f32.mrf.mxu0
      %709 = vmatprep.mubr.bf16.mxu0 0
      %710 = vmatmul.mubr.bf16.gmra.mxu0 %v589
      %v711 = vpop.f32.mrf.mxu0
      %v712 = vadd.f32 %v474, %v711
      %v713 = vpop.f32.mrf.mxu0
      %v714 = vpop.f32.mrf.mxu0
      %v715 = vadd.f32 %v474, %v714
      %v716 = vpop.f32.mrf.mxu0
      %717 = vmatprep.mubr.bf16.mxu0 0
      %718 = vmatmul.mubr.bf16.gmra.mxu0 %v592
      %v719 = vpop.f32.mrf.mxu0
      %v720 = vadd.f32 %v474, %v719
      %v721 = vpop.f32.mrf.mxu0
      %v722 = vpop.f32.mrf.mxu0
      %v723 = vadd.f32 %v474, %v722
      %v724 = vpop.f32.mrf.mxu0
      %725 = vmatprep.mubr.bf16.mxu0 0
      %726 = vmatmul.mubr.bf16.gmra.mxu0 %v595
      %v727 = vpop.f32.mrf.mxu0
      %v728 = vadd.f32 %v474, %v727
      %v729 = vpop.f32.mrf.mxu0
      %v730 = vpop.f32.mrf.mxu0
      %v731 = vpop.f32.mrf.mxu0
      %732 = vdwg.mxu0
      %733 = vst [vmem:[#allocation2] sm:$0xff] %v632
      %734 = vst [vmem:[#allocation2 + $0x8] sm:$0xff] %v635
      %735 = vst [vmem:[#allocation2 + $0x10] sm:$0xff] %v640
      %736 = vst [vmem:[#allocation2 + $0x18] sm:$0xff] %v643
      %737 = vst [vmem:[#allocation2 + $0x20] sm:$0xff] %v648
      %738 = vst [vmem:[#allocation2 + $0x28] sm:$0xff] %v651
      %739 = vst [vmem:[#allocation2 + $0x30] sm:$0xff] %v656
      %740 = vst [vmem:[#allocation2 + $0x38] sm:$0xff] %v659
      %741 = vst [vmem:[#allocation2 + $0x40] sm:$0xff] %v664
      %742 = vst [vmem:[#allocation2 + $0x48] sm:$0xff] %v667
      %743 = vst [vmem:[#allocation2 + $0x50] sm:$0xff] %v672
      %744 = vst [vmem:[#allocation2 + $0x58] sm:$0xff] %v675
      %745 = vst [vmem:[#allocation2 + $0x60] sm:$0xff] %v680
      %746 = vst [vmem:[#allocation2 + $0x68] sm:$0xff] %v683
      %747 = vst [vmem:[#allocation2 + $0x70] sm:$0xff] %v688
      %748 = vst [vmem:[#allocation2 + $0x78] sm:$0xff] %v691
      %749 = vst [vmem:[#allocation2 + $0x80] sm:$0xff] %v696
      %750 = vst [vmem:[#allocation2 + $0x88] sm:$0xff] %v699
      %751 = vst [vmem:[#allocation2 + $0x90] sm:$0xff] %v704
      %752 = vst [vmem:[#allocation2 + $0x98] sm:$0xff] %v707
      %753 = vst [vmem:[#allocation2 + $0xa0] sm:$0xff] %v712
      %754 = vst [vmem:[#allocation2 + $0xa8] sm:$0xff] %v715
      %755 = vst [vmem:[#allocation2 + $0xb0] sm:$0xff] %v720
      %756 = vst [vmem:[#allocation2 + $0xb8] sm:$0xff] %v723
      %757 = vst [vmem:[#allocation2 + $0xc0] sm:$0x3f] %v728
      %v758 = vld [vmem:[#allocation2] ss:$2 sm:$0xff]
      %s759 = scalar_lea.vmem [#allocation2], 16
      %v760 = vld [vmem:[%s759] ss:$2 sm:$0xff]
      %s761 = scalar_lea.vmem [#allocation2], 32
      %v762 = vld [vmem:[%s761] ss:$2 sm:$0xff]
      %s763 = scalar_lea.vmem [#allocation2], 48
      %v764 = vld [vmem:[%s763] ss:$2 sm:$0xff]
      %s765 = scalar_lea.vmem [#allocation2], 64
      %v766 = vld [vmem:[%s765] ss:$2 sm:$0xff]
      %s767 = scalar_lea.vmem [#allocation2], 80
      %v768 = vld [vmem:[%s767] ss:$2 sm:$0xff]
      %s769 = scalar_lea.vmem [#allocation2], 96
      %v770 = vld [vmem:[%s769] ss:$2 sm:$0xff]
      %s771 = scalar_lea.vmem [#allocation2], 112
      %v772 = vld [vmem:[%s771] ss:$2 sm:$0xff]
      %s773 = scalar_lea.vmem [#allocation2], 128
      %v774 = vld [vmem:[%s773] ss:$2 sm:$0xff]
      %s775 = scalar_lea.vmem [#allocation2], 144
      %v776 = vld [vmem:[%s775] ss:$2 sm:$0xff]
      %s777 = scalar_lea.vmem [#allocation2], 160
      %v778 = vld [vmem:[%s777] ss:$2 sm:$0xff]
      %s779 = scalar_lea.vmem [#allocation2], 176
      %v780 = vld [vmem:[%s779] ss:$2 sm:$0xff]
      %s781 = scalar_lea.vmem [#allocation2], 192
      %v782 = vld [vmem:[%s781] ss:$2 sm:$0x7]
      %s783 = scalar_lea.vmem [#allocation2], 1
      %v784 = vld [vmem:[%s783] ss:$2 sm:$0xff]
      %s785 = scalar_lea.vmem [#allocation2], 17
      %v786 = vld [vmem:[%s785] ss:$2 sm:$0xff]
      %s787 = scalar_lea.vmem [#allocation2], 33
      %v788 = vld [vmem:[%s787] ss:$2 sm:$0xff]
      %s789 = scalar_lea.vmem [#allocation2], 49
      %v790 = vld [vmem:[%s789] ss:$2 sm:$0xff]
      %s791 = scalar_lea.vmem [#allocation2], 65
      %v792 = vld [vmem:[%s791] ss:$2 sm:$0xff]
      %s793 = scalar_lea.vmem [#allocation2], 81
      %v794 = vld [vmem:[%s793] ss:$2 sm:$0xff]
      %s795 = scalar_lea.vmem [#allocation2], 97
      %v796 = vld [vmem:[%s795] ss:$2 sm:$0xff]
      %s797 = scalar_lea.vmem [#allocation2], 113
      %v798 = vld [vmem:[%s797] ss:$2 sm:$0xff]
      %s799 = scalar_lea.vmem [#allocation2], 129
      %v800 = vld [vmem:[%s799] ss:$2 sm:$0xff]
      %s801 = scalar_lea.vmem [#allocation2], 145
      %v802 = vld [vmem:[%s801] ss:$2 sm:$0xff]
      %s803 = scalar_lea.vmem [#allocation2], 161
      %v804 = vld [vmem:[%s803] ss:$2 sm:$0xff]
      %s805 = scalar_lea.vmem [#allocation2], 177
      %v806 = vld [vmem:[%s805] ss:$2 sm:$0xff]
      %s807 = scalar_lea.vmem [#allocation2], 193
      %v808 = vld [vmem:[%s807] ss:$2 sm:$0x7]
      %v809 = vmax.f32 %v758, %v784
      %v810 = vmax.f32 %v760, %v786
      %v811 = vmax.f32 %v762, %v788
      %v812 = vmax.f32 %v764, %v790
      %v813 = vmax.f32 %v766, %v792
      %v814 = vmax.f32 %v768, %v794
      %v815 = vmax.f32 %v770, %v796
      %v816 = vmax.f32 %v772, %v798
      %v817 = vmax.f32 %v774, %v800
      %v818 = vmax.f32 %v776, %v802
      %v819 = vmax.f32 %v778, %v804
      %v820 = vmax.f32 %v780, %v806
      %v821 = vmax.f32 %v782, %v808
      %v822 = vmul.f32 %v809, 0.01
      %v823 = vmul.f32 %v810, 0.01
      %v824 = vmul.f32 %v811, 0.01
      %v825 = vmul.f32 %v812, 0.01
      %v826 = vmul.f32 %v813, 0.01
      %v827 = vmul.f32 %v814, 0.01
      %v828 = vmul.f32 %v815, 0.01
      %v829 = vmul.f32 %v816, 0.01
      %v830 = vmul.f32 %v817, 0.01
      %v831 = vmul.f32 %v818, 0.01
      %v832 = vmul.f32 %v819, 0.01
      %v833 = vmul.f32 %v820, 0.01
      %v834 = vmul.f32 %v821, 0.01
      %v835 = vmax.f32 %v809, %v822
      %v836 = vmax.f32 %v810, %v823
      %v837 = vmax.f32 %v811, %v824
      %v838 = vmax.f32 %v812, %v825
      %v839 = vmax.f32 %v813, %v826
      %v840 = vmax.f32 %v814, %v827
      %v841 = vmax.f32 %v815, %v828
      %v842 = vmax.f32 %v816, %v829
      %v843 = vmax.f32 %v817, %v830
      %v844 = vmax.f32 %v818, %v831
      %v845 = vmax.f32 %v819, %v832
      %v846 = vmax.f32 %v820, %v833
      %v847 = vmax.f32 %v821, %v834
      %848 = vst [vmem:[#allocation3] sm:$0xff] %v835
      %849 = vst [vmem:[#allocation3 + $0x8] sm:$0xff] %v836
      %850 = vst [vmem:[#allocation3 + $0x10] sm:$0xff] %v837
      %851 = vst [vmem:[#allocation3 + $0x18] sm:$0xff] %v838
      %852 = vst [vmem:[#allocation3 + $0x20] sm:$0xff] %v839
      %853 = vst [vmem:[#allocation3 + $0x28] sm:$0xff] %v840
      %854 = vst [vmem:[#allocation3 + $0x30] sm:$0xff] %v841
      %855 = vst [vmem:[#allocation3 + $0x38] sm:$0xff] %v842
      %856 = vst [vmem:[#allocation3 + $0x40] sm:$0xff] %v843
      %857 = vst [vmem:[#allocation3 + $0x48] sm:$0xff] %v844
      %858 = vst [vmem:[#allocation3 + $0x50] sm:$0xff] %v845
      %859 = vst [vmem:[#allocation3 + $0x58] sm:$0xff] %v846
      %860 = vst [vmem:[#allocation3 + $0x60] sm:$0x7] %v847
      %v861 = vld [vmem:[#allocation3] sm:$0xff]
      %v862 = vld [vmem:[#allocation3 + $0x8] sm:$0xff]
      %v863 = vld [vmem:[#allocation3 + $0x10] sm:$0xff]
      %v864 = vld [vmem:[#allocation3 + $0x18] sm:$0xff]
      %v865 = vld [vmem:[#allocation3 + $0x20] sm:$0xff]
      %v866 = vld [vmem:[#allocation3 + $0x28] sm:$0xff]
      %v867 = vld [vmem:[#allocation3 + $0x30] sm:$0xff]
      %v868 = vld [vmem:[#allocation3 + $0x38] sm:$0xff]
      %v869 = vld [vmem:[#allocation3 + $0x40] sm:$0xff]
      %v870 = vld [vmem:[#allocation3 + $0x48] sm:$0xff]
      %v871 = vld [vmem:[#allocation3 + $0x50] sm:$0xff]
      %v872 = vld [vmem:[#allocation3 + $0x58] sm:$0xff]
      %v873 = vld [vmem:[#allocation3 + $0x60] sm:$0x1]
      %v874 = vld [vmem:[#allocation3 + $0x1] sm:$0xff]
      %v875 = vld [vmem:[#allocation3 + $0x9] sm:$0xff]
      %v876 = vld [vmem:[#allocation3 + $0x11] sm:$0xff]
      %v877 = vld [vmem:[#allocation3 + $0x19] sm:$0xff]
      %v878 = vld [vmem:[#allocation3 + $0x21] sm:$0xff]
      %v879 = vld [vmem:[#allocation3 + $0x29] sm:$0xff]
      %v880 = vld [vmem:[#allocation3 + $0x31] sm:$0xff]
      %v881 = vld [vmem:[#allocation3 + $0x39] sm:$0xff]
      %v882 = vld [vmem:[#allocation3 + $0x41] sm:$0xff]
      %v883 = vld [vmem:[#allocation3 + $0x49] sm:$0xff]
      %v884 = vld [vmem:[#allocation3 + $0x51] sm:$0xff]
      %v885 = vld [vmem:[#allocation3 + $0x59] sm:$0xff]
      %v886 = vld [vmem:[#allocation3 + $0x61] sm:$0x1]
      %v887 = vld [vmem:[#allocation3 + $0x2] sm:$0xff]
      %v888 = vld [vmem:[#allocation3 + $0xa] sm:$0xff]
      %v889 = vld [vmem:[#allocation3 + $0x12] sm:$0xff]
      %v890 = vld [vmem:[#allocation3 + $0x1a] sm:$0xff]
      %v891 = vld [vmem:[#allocation3 + $0x22] sm:$0xff]
      %v892 = vld [vmem:[#allocation3 + $0x2a] sm:$0xff]
      %v893 = vld [vmem:[#allocation3 + $0x32] sm:$0xff]
      %v894 = vld [vmem:[#allocation3 + $0x3a] sm:$0xff]
      %v895 = vld [vmem:[#allocation3 + $0x42] sm:$0xff]
      %v896 = vld [vmem:[#allocation3 + $0x4a] sm:$0xff]
      %v897 = vld [vmem:[#allocation3 + $0x52] sm:$0xff]
      %v898 = vld [vmem:[#allocation3 + $0x5a] sm:$0xff]
      %v899 = vld [vmem:[#allocation3 + $0x62] sm:$0x1]
      %v900 = vpack.c.bf16 %v862, %v861
      %v901 = vpack.c.bf16 %v875, %v874
      %v902 = vpack.c.bf16 %v888, %v887
      %v903 = vpack.c.bf16 %v864, %v863
      %v904 = vpack.c.bf16 %v877, %v876
      %v905 = vpack.c.bf16 %v890, %v889
      %v906 = vpack.c.bf16 %v866, %v865
      %v907 = vpack.c.bf16 %v879, %v878
      %v908 = vpack.c.bf16 %v892, %v891
      %v909 = vpack.c.bf16 %v868, %v867
      %v910 = vpack.c.bf16 %v881, %v880
      %v911 = vpack.c.bf16 %v894, %v893
      %v912 = vpack.c.bf16 %v870, %v869
      %v913 = vpack.c.bf16 %v883, %v882
      %v914 = vpack.c.bf16 %v896, %v895
      %v915 = vpack.c.bf16 %v872, %v871
      %v916 = vpack.c.bf16 %v885, %v884
      %v917 = vpack.c.bf16 %v898, %v897
      %v918 = vpack.c.bf16 %v873, %v873
      %v919 = vpack.c.bf16 %v886, %v886
      %v920 = vpack.c.bf16 %v899, %v899
      %v921 = vld [vmem:[%s3] sm:$0xf]
      %v922 = vld [vmem:[%s3 + $0x4] sm:$0xf]
      %v923 = vld [vmem:[%s3 + $0x8] sm:$0xf]
      %v924 = vld [vmem:[%s3 + $0xc] sm:$0xf]
      %v925 = vld [vmem:[%s3 + $0x10] sm:$0xf]
      %v926 = vld [vmem:[%s3 + $0x14] sm:$0xf]
      %v927 = vld [vmem:[%s3 + $0x18] sm:$0xf]
      %v928 = vld [vmem:[%s3 + $0x1c] sm:$0xf]
      %v929 = vld [vmem:[%s3 + $0x20] sm:$0xf]
      %v930 = vld [vmem:[%s3 + $0x24] sm:$0xf]
      %v931 = vld [vmem:[%s3 + $0x28] sm:$0xf]
      %v932 = vld [vmem:[%s3 + $0x2c] sm:$0xf]
      %v933 = vld [vmem:[%s3 + $0x30] sm:$0xf]
      %v934 = vld [vmem:[%s3 + $0x34] sm:$0xf]
      %v935 = vld [vmem:[%s3 + $0x38] sm:$0xf]
      %v936 = vld [vmem:[%s3 + $0x3c] sm:$0xf]
      %v937 = vld [vmem:[%s3 + $0x40] sm:$0xf]
      %v938 = vld [vmem:[%s3 + $0x44] sm:$0xf]
      %v939 = vld [vmem:[%s3 + $0x48] sm:$0xf]
      %v940 = vld [vmem:[%s3 + $0x4c] sm:$0xf]
      %v941 = vld [vmem:[%s3 + $0x50] sm:$0xf]
      %v942 = vld [vmem:[%s3 + $0x54] sm:$0xf]
      %v943 = vld [vmem:[%s3 + $0x58] sm:$0xf]
      %v944 = vld [vmem:[%s3 + $0x5c] sm:$0xf]
      %v945 = vld [vmem:[%s3 + $0x60] sm:$0xf]
      %v946 = vld [vmem:[%s3 + $0x64] sm:$0xf]
      %v947 = vld [vmem:[%s3 + $0x68] sm:$0xf]
      %v948 = vld [vmem:[%s3 + $0x6c] sm:$0xf]
      %v949 = vld [vmem:[%s3 + $0x70] sm:$0xf]
      %v950 = vld [vmem:[%s3 + $0x74] sm:$0xf]
      %v951 = vld [vmem:[%s3 + $0x78] sm:$0xf]
      %v952 = vld [vmem:[%s3 + $0x7c] sm:$0xf]
      %v953 = vld [vmem:[%s3 + $0x80] sm:$0xf]
      %v954 = vld [vmem:[%s3 + $0x84] sm:$0xf]
      %v955 = vld [vmem:[%s3 + $0x88] sm:$0xf]
      %v956 = vld [vmem:[%s3 + $0x8c] sm:$0xf]
      %v957 = vld [vmem:[%s3 + $0x90] sm:$0xf]
      %v958 = vld [vmem:[%s3 + $0x94] sm:$0xf]
      %v959 = vld [vmem:[%s3 + $0x98] sm:$0xf]
      %v960 = vld [vmem:[%s3 + $0x9c] sm:$0xf]
      %v961 = vld [vmem:[%s3 + $0xa0] sm:$0xf]
      %v962 = vld [vmem:[%s3 + $0xa4] sm:$0xf]
      %v963 = vld [vmem:[%s3 + $0xa8] sm:$0xf]
      %v964 = vld [vmem:[%s3 + $0xac] sm:$0xf]
      %v965 = vld [vmem:[%s3 + $0xb0] sm:$0xf]
      %v966 = vld [vmem:[%s3 + $0xb4] sm:$0xf]
      %v967 = vld [vmem:[%s3 + $0xb8] sm:$0xf]
      %v968 = vld [vmem:[%s3 + $0xbc] sm:$0xf]
      %v969 = vld [vmem:[%s4] sm:$0x1]
      %v971 = vlaneseq
      %v972 = vshrl.u32 %v971, 7
      %v973 = vsub.s32 0, %v972
      %v974 = vrot.slane %v969, %v973
      %v1024 = vunpack.c.l.b16 %v921
      %v1025 = vunpack.c.l.b16 %v922
      %v1026 = vunpack.c.l.b16 %v923
      %v1027 = vunpack.c.l.b16 %v924
      %v1028 = vunpack.c.l.b16 %v925
      %v1029 = vunpack.c.l.b16 %v926
      %v1030 = vunpack.c.l.b16 %v927
      %v1031 = vunpack.c.l.b16 %v928
      %v1032 = vunpack.c.l.b16 %v929
      %v1033 = vunpack.c.l.b16 %v930
      %v1034 = vunpack.c.l.b16 %v931
      %v1035 = vunpack.c.l.b16 %v932
      %v1036 = vunpack.c.l.b16 %v933
      %v1037 = vunpack.c.l.b16 %v934
      %v1038 = vunpack.c.l.b16 %v935
      %v1039 = vunpack.c.l.b16 %v936
      %v1040 = vunpack.c.l.b16 %v937
      %v1041 = vunpack.c.l.b16 %v938
      %v1042 = vunpack.c.l.b16 %v939
      %v1043 = vunpack.c.l.b16 %v940
      %v1044 = vunpack.c.l.b16 %v941
      %v1045 = vunpack.c.l.b16 %v942
      %v1046 = vunpack.c.l.b16 %v943
      %v1047 = vunpack.c.l.b16 %v944
      %v1048 = vunpack.c.l.b16 %v945
      %v1049 = vunpack.c.l.b16 %v946
      %v1050 = vunpack.c.l.b16 %v947
      %v1051 = vunpack.c.l.b16 %v948
      %v1052 = vunpack.c.l.b16 %v949
      %v1053 = vunpack.c.l.b16 %v950
      %v1054 = vunpack.c.l.b16 %v951
      %v1055 = vunpack.c.l.b16 %v952
      %v1056 = vunpack.c.l.b16 %v953
      %v1057 = vunpack.c.l.b16 %v954
      %v1058 = vunpack.c.l.b16 %v955
      %v1059 = vunpack.c.l.b16 %v956
      %v1060 = vunpack.c.l.b16 %v957
      %v1061 = vunpack.c.l.b16 %v958
      %v1062 = vunpack.c.l.b16 %v959
      %v1063 = vunpack.c.l.b16 %v960
      %v1064 = vunpack.c.l.b16 %v961
      %v1065 = vunpack.c.l.b16 %v962
      %v1066 = vunpack.c.l.b16 %v963
      %v1067 = vunpack.c.l.b16 %v964
      %v1068 = vunpack.c.l.b16 %v965
      %v1069 = vunpack.c.l.b16 %v966
      %v1070 = vunpack.c.l.b16 %v967
      %v1071 = vunpack.c.l.b16 %v968
      %v1072 = vpack.c.b16 %v1025, %v1024
      %v1073 = vpack.c.b16 %v1027, %v1026
      %v1074 = vpack.c.b16 %v1029, %v1028
      %v1075 = vpack.c.b16 %v1031, %v1030
      %v1076 = vpack.c.b16 %v1033, %v1032
      %v1077 = vpack.c.b16 %v1035, %v1034
      %v1078 = vpack.c.b16 %v1037, %v1036
      %v1079 = vpack.c.b16 %v1039, %v1038
      %v1080 = vpack.c.b16 %v1041, %v1040
      %v1081 = vpack.c.b16 %v1043, %v1042
      %v1082 = vpack.c.b16 %v1045, %v1044
      %v1083 = vpack.c.b16 %v1047, %v1046
      %v1084 = vpack.c.b16 %v1049, %v1048
      %v1085 = vpack.c.b16 %v1051, %v1050
      %v1086 = vpack.c.b16 %v1053, %v1052
      %v1087 = vpack.c.b16 %v1055, %v1054
      %v1088 = vpack.c.b16 %v1057, %v1056
      %v1089 = vpack.c.b16 %v1059, %v1058
      %v1090 = vpack.c.b16 %v1061, %v1060
      %v1091 = vpack.c.b16 %v1063, %v1062
      %v1092 = vpack.c.b16 %v1065, %v1064
      %v1093 = vpack.c.b16 %v1067, %v1066
      %v1094 = vpack.c.b16 %v1069, %v1068
      %v1095 = vpack.c.b16 %v1071, %v1070
      %1120 = vmatprep.subr.bf16.mxu0 0
      %1121 = vmatpush1.bf16.msra.mxu0 %v1079
      %1122 = vmatprep.subr.bf16.mxu0 0
      %1123 = vmatpush1.bf16.msra.mxu0 %v1078
      %1124 = vmatprep.subr.bf16.mxu0 0
      %1125 = vmatpush1.bf16.msra.mxu0 %v1077
      %1126 = vmatprep.subr.bf16.mxu0 0
      %1127 = vmatpush1.bf16.msra.mxu0 %v1076
      %1128 = vmatprep.subr.bf16.mxu0 0
      %1129 = vmatpush1.bf16.msra.mxu0 %v1075
      %1130 = vmatprep.subr.bf16.mxu0 0
      %1131 = vmatpush1.bf16.msra.mxu0 %v1074
      %1132 = vmatprep.subr.bf16.mxu0 0
      %1133 = vmatpush1.bf16.msra.mxu0 %v1073
      %1134 = vmatprep.subr.bf16.mxu0 0
      %1135 = vmatpush1.bf16.msra.mxu0 %v1072
      %1136 = vmatprep.subr.bf16.mxu0 0
      %1137 = vmatpush2.bf16.msra.mxu0 %v1087
      %1138 = vmatprep.subr.bf16.mxu0 0
      %1139 = vmatpush2.bf16.msra.mxu0 %v1086
      %1140 = vmatprep.subr.bf16.mxu0 0
      %1141 = vmatpush2.bf16.msra.mxu0 %v1085
      %1142 = vmatprep.subr.bf16.mxu0 0
      %1143 = vmatpush2.bf16.msra.mxu0 %v1084
      %1144 = vmatprep.subr.bf16.mxu0 0
      %1145 = vmatpush2.bf16.msra.mxu0 %v1083
      %1146 = vmatprep.subr.bf16.mxu0 0
      %1147 = vmatpush2.bf16.msra.mxu0 %v1082
      %1148 = vmatprep.subr.bf16.mxu0 0
      %1149 = vmatpush2.bf16.msra.mxu0 %v1081
      %1150 = vmatprep.subr.bf16.mxu0 0
      %1151 = vmatpush2.bf16.msra.mxu0 %v1080
      %1152 = vmatprep.mubr.bf16.mxu0 %v901
      %1153 = vmatmul.mubr.bf16.gmra.mxu0 %v900
      %v1154 = vpop.f32.mrf.mxu0
      %v1155 = vadd.f32 %v974, %v1154
      %v1156 = vpop.f32.mrf.mxu0
      %v1157 = vpop.f32.mrf.mxu0
      %v1158 = vadd.f32 %v974, %v1157
      %v1159 = vpop.f32.mrf.mxu0
      %1160 = vmatprep.mubr.bf16.mxu0 %v904
      %1161 = vmatmul.mubr.bf16.gmra.mxu0 %v903
      %v1162 = vpop.f32.mrf.mxu0
      %v1163 = vadd.f32 %v974, %v1162
      %v1164 = vpop.f32.mrf.mxu0
      %v1165 = vpop.f32.mrf.mxu0
      %v1166 = vadd.f32 %v974, %v1165
      %v1167 = vpop.f32.mrf.mxu0
      %1168 = vmatprep.mubr.bf16.mxu0 %v907
      %1169 = vmatmul.mubr.bf16.gmra.mxu0 %v906
      %v1170 = vpop.f32.mrf.mxu0
      %v1171 = vadd.f32 %v974, %v1170
      %v1172 = vpop.f32.mrf.mxu0
      %v1173 = vpop.f32.mrf.mxu0
      %v1174 = vadd.f32 %v974, %v1173
      %v1175 = vpop.f32.mrf.mxu0
      %1176 = vmatprep.mubr.bf16.mxu0 %v910
      %1177 = vmatmul.mubr.bf16.gmra.mxu0 %v909
      %v1178 = vpop.f32.mrf.mxu0
      %v1179 = vadd.f32 %v974, %v1178
      %v1180 = vpop.f32.mrf.mxu0
      %v1181 = vpop.f32.mrf.mxu0
      %v1182 = vadd.f32 %v974, %v1181
      %v1183 = vpop.f32.mrf.mxu0
      %1184 = vmatprep.mubr.bf16.mxu0 %v913
      %1185 = vmatmul.mubr.bf16.gmra.mxu0 %v912
      %v1186 = vpop.f32.mrf.mxu0
      %v1187 = vadd.f32 %v974, %v1186
      %v1188 = vpop.f32.mrf.mxu0
      %v1189 = vpop.f32.mrf.mxu0
      %v1190 = vadd.f32 %v974, %v1189
      %v1191 = vpop.f32.mrf.mxu0
      %1192 = vmatprep.mubr.bf16.mxu0 %v916
      %1193 = vmatmul.mubr.bf16.gmra.mxu0 %v915
      %v1194 = vpop.f32.mrf.mxu0
      %v1195 = vadd.f32 %v974, %v1194
      %v1196 = vpop.f32.mrf.mxu0
      %v1197 = vpop.f32.mrf.mxu0
      %v1198 = vadd.f32 %v974, %v1197
      %v1199 = vpop.f32.mrf.mxu0
      %1200 = vmatprep.mubr.bf16.mxu0 %v919
      %1201 = vmatmul.mubr.bf16.gmra.mxu0 %v918
      %v1202 = vpop.f32.mrf.mxu0
      %v1203 = vadd.f32 %v974, %v1202
      %v1204 = vpop.f32.mrf.mxu0
      %v1205 = vpop.f32.mrf.mxu0
      %v1206 = vpop.f32.mrf.mxu0
      %1207 = vdwg.mxu0
      %1208 = vmatprep.subr.bf16.mxu0 0
      %1209 = vmatpush1.bf16.msra.mxu0 %v1095
      %1210 = vmatprep.subr.bf16.mxu0 0
      %1211 = vmatpush1.bf16.msra.mxu0 %v1094
      %1212 = vmatprep.subr.bf16.mxu0 0
      %1213 = vmatpush1.bf16.msra.mxu0 %v1093
      %1214 = vmatprep.subr.bf16.mxu0 0
      %1215 = vmatpush1.bf16.msra.mxu0 %v1092
      %1216 = vmatprep.subr.bf16.mxu0 0
      %1217 = vmatpush1.bf16.msra.mxu0 %v1091
      %1218 = vmatprep.subr.bf16.mxu0 0
      %1219 = vmatpush1.bf16.msra.mxu0 %v1090
      %1220 = vmatprep.subr.bf16.mxu0 0
      %1221 = vmatpush1.bf16.msra.mxu0 %v1089
      %1222 = vmatprep.subr.bf16.mxu0 0
      %1223 = vmatpush1.bf16.msra.mxu0 %v1088
      %1224 = vmatprep.subr.bf16.mxu0 0
      %1225 = vmatpush2.bf16.msra.mxu0 0
      %1226 = vmatprep.subr.bf16.mxu0 0
      %1227 = vmatpush2.bf16.msra.mxu0 0
      %1228 = vmatprep.subr.bf16.mxu0 0
      %1229 = vmatpush2.bf16.msra.mxu0 0
      %1230 = vmatprep.subr.bf16.mxu0 0
      %1231 = vmatpush2.bf16.msra.mxu0 0
      %1232 = vmatprep.subr.bf16.mxu0 0
      %1233 = vmatpush2.bf16.msra.mxu0 0
      %1234 = vmatprep.subr.bf16.mxu0 0
      %1235 = vmatpush2.bf16.msra.mxu0 0
      %1236 = vmatprep.subr.bf16.mxu0 0
      %1237 = vmatpush2.bf16.msra.mxu0 0
      %1238 = vmatprep.subr.bf16.mxu0 0
      %1239 = vmatpush2.bf16.msra.mxu0 0
      %1240 = vmatprep.mubr.bf16.mxu0 0
      %1241 = vmatmul.mubr.bf16.gmra.mxu0 %v902
      %v1242 = vpop.f32.mrf.mxu0
      %v1243 = vadd.f32 %v1155, %v1242
      %v1244 = vpop.f32.mrf.mxu0
      %v1245 = vpop.f32.mrf.mxu0
      %v1246 = vadd.f32 %v1158, %v1245
      %v1247 = vpop.f32.mrf.mxu0
      %1248 = vmatprep.mubr.bf16.mxu0 0
      %1249 = vmatmul.mubr.bf16.gmra.mxu0 %v905
      %v1250 = vpop.f32.mrf.mxu0
      %v1251 = vadd.f32 %v1163, %v1250
      %v1252 = vpop.f32.mrf.mxu0
      %v1253 = vpop.f32.mrf.mxu0
      %v1254 = vadd.f32 %v1166, %v1253
      %v1255 = vpop.f32.mrf.mxu0
      %1256 = vmatprep.mubr.bf16.mxu0 0
      %1257 = vmatmul.mubr.bf16.gmra.mxu0 %v908
      %v1258 = vpop.f32.mrf.mxu0
      %v1259 = vadd.f32 %v1171, %v1258
      %v1260 = vpop.f32.mrf.mxu0
      %v1261 = vpop.f32.mrf.mxu0
      %v1262 = vadd.f32 %v1174, %v1261
      %v1263 = vpop.f32.mrf.mxu0
      %1264 = vmatprep.mubr.bf16.mxu0 0
      %1265 = vmatmul.mubr.bf16.gmra.mxu0 %v911
      %v1266 = vpop.f32.mrf.mxu0
      %v1267 = vadd.f32 %v1179, %v1266
      %v1268 = vpop.f32.mrf.mxu0
      %v1269 = vpop.f32.mrf.mxu0
      %v1270 = vadd.f32 %v1182, %v1269
      %v1271 = vpop.f32.mrf.mxu0
      %1272 = vmatprep.mubr.bf16.mxu0 0
      %1273 = vmatmul.mubr.bf16.gmra.mxu0 %v914
      %v1274 = vpop.f32.mrf.mxu0
      %v1275 = vadd.f32 %v1187, %v1274
      %v1276 = vpop.f32.mrf.mxu0
      %v1277 = vpop.f32.mrf.mxu0
      %v1278 = vadd.f32 %v1190, %v1277
      %v1279 = vpop.f32.mrf.mxu0
      %1280 = vmatprep.mubr.bf16.mxu0 0
      %1281 = vmatmul.mubr.bf16.gmra.mxu0 %v917
      %v1282 = vpop.f32.mrf.mxu0
      %v1283 = vadd.f32 %v1195, %v1282
      %v1284 = vpop.f32.mrf.mxu0
      %v1285 = vpop.f32.mrf.mxu0
      %v1286 = vadd.f32 %v1198, %v1285
      %v1287 = vpop.f32.mrf.mxu0
      %1288 = vmatprep.mubr.bf16.mxu0 0
      %1289 = vmatmul.mubr.bf16.gmra.mxu0 %v920
      %v1290 = vpop.f32.mrf.mxu0
      %v1291 = vadd.f32 %v1203, %v1290
      %v1292 = vpop.f32.mrf.mxu0
      %v1293 = vpop.f32.mrf.mxu0
      %v1294 = vpop.f32.mrf.mxu0
      %1295 = vdwg.mxu0
      %1296 = vst [vmem:[#allocation2] sm:$0xff] %v1243
      %1297 = vst [vmem:[#allocation2 + $0x8] sm:$0xff] %v1246
      %1298 = vst [vmem:[#allocation2 + $0x10] sm:$0xff] %v1251
      %1299 = vst [vmem:[#allocation2 + $0x18] sm:$0xff] %v1254
      %1300 = vst [vmem:[#allocation2 + $0x20] sm:$0xff] %v1259
      %1301 = vst [vmem:[#allocation2 + $0x28] sm:$0xff] %v1262
      %1302 = vst [vmem:[#allocation2 + $0x30] sm:$0xff] %v1267
      %1303 = vst [vmem:[#allocation2 + $0x38] sm:$0xff] %v1270
      %1304 = vst [vmem:[#allocation2 + $0x40] sm:$0xff] %v1275
      %1305 = vst [vmem:[#allocation2 + $0x48] sm:$0xff] %v1278
      %1306 = vst [vmem:[#allocation2 + $0x50] sm:$0xff] %v1283
      %1307 = vst [vmem:[#allocation2 + $0x58] sm:$0xff] %v1286
      %1308 = vst [vmem:[#allocation2 + $0x60] sm:$0x1] %v1291
      %v1309 = vld [vmem:[#allocation2] ss:$2 sm:$0xff]
      %s1310 = scalar_lea.vmem [#allocation2], 16
      %v1311 = vld [vmem:[%s1310] ss:$2 sm:$0xff]
      %s1312 = scalar_lea.vmem [#allocation2], 32
      %v1313 = vld [vmem:[%s1312] ss:$2 sm:$0xff]
      %s1314 = scalar_lea.vmem [#allocation2], 48
      %v1315 = vld [vmem:[%s1314] ss:$2 sm:$0xff]
      %s1316 = scalar_lea.vmem [#allocation2], 64
      %v1317 = vld [vmem:[%s1316] ss:$2 sm:$0xff]
      %s1318 = scalar_lea.vmem [#allocation2], 80
      %v1319 = vld [vmem:[%s1318] ss:$2 sm:$0xff]
      %v1320 = vld [vmem:[%s783] ss:$2 sm:$0xff]
      %v1321 = vld [vmem:[%s785] ss:$2 sm:$0xff]
      %v1322 = vld [vmem:[%s787] ss:$2 sm:$0xff]
      %v1323 = vld [vmem:[%s789] ss:$2 sm:$0xff]
      %v1324 = vld [vmem:[%s791] ss:$2 sm:$0xff]
      %v1325 = vld [vmem:[%s793] ss:$2 sm:$0xff]
      %v1326 = vmax.f32 %v1309, %v1320
      %v1327 = vmax.f32 %v1311, %v1321
      %v1328 = vmax.f32 %v1313, %v1322
      %v1329 = vmax.f32 %v1315, %v1323
      %v1330 = vmax.f32 %v1317, %v1324
      %v1331 = vmax.f32 %v1319, %v1325
      %v1332 = vmul.f32 %v1326, 0.01
      %v1333 = vmul.f32 %v1327, 0.01
      %v1334 = vmul.f32 %v1328, 0.01
      %v1335 = vmul.f32 %v1329, 0.01
      %v1336 = vmul.f32 %v1330, 0.01
      %v1337 = vmul.f32 %v1331, 0.01
      %v1338 = vmax.f32 %v1326, %v1332
      %v1339 = vmax.f32 %v1327, %v1333
      %v1340 = vmax.f32 %v1328, %v1334
      %v1341 = vmax.f32 %v1329, %v1335
      %v1342 = vmax.f32 %v1330, %v1336
      %v1343 = vmax.f32 %v1331, %v1337
      %1344 = vst [vmem:[#allocation4] sm:$0xff] %v1338
      %1345 = vst [vmem:[#allocation4 + $0x8] sm:$0xff] %v1339
      %1346 = vst [vmem:[#allocation4 + $0x10] sm:$0xff] %v1340
      %1347 = vst [vmem:[#allocation4 + $0x18] sm:$0xff] %v1341
      %1348 = vst [vmem:[#allocation4 + $0x20] sm:$0xff] %v1342
      %1349 = vst [vmem:[#allocation4 + $0x28] sm:$0xff] %v1343
      %v1350 = vld [vmem:[#allocation4] sm:$0xff]
      %v1351 = vld [vmem:[#allocation4 + $0x8] sm:$0xff]
      %v1352 = vld [vmem:[#allocation4 + $0x10] sm:$0xff]
      %v1353 = vld [vmem:[#allocation4 + $0x18] sm:$0xff]
      %v1354 = vld [vmem:[#allocation4 + $0x20] sm:$0xff]
      %v1355 = vld [vmem:[#allocation4 + $0x28] sm:$0x3f]
      %v1356 = vld [vmem:[#allocation4 + $0x1] sm:$0xff]
      %v1357 = vld [vmem:[#allocation4 + $0x9] sm:$0xff]
      %v1358 = vld [vmem:[#allocation4 + $0x11] sm:$0xff]
      %v1359 = vld [vmem:[#allocation4 + $0x19] sm:$0xff]
      %v1360 = vld [vmem:[#allocation4 + $0x21] sm:$0xff]
      %v1361 = vld [vmem:[#allocation4 + $0x29] sm:$0x3f]
      %v1362 = vld [vmem:[#allocation4 + $0x2] sm:$0xff]
      %v1363 = vld [vmem:[#allocation4 + $0xa] sm:$0xff]
      %v1364 = vld [vmem:[#allocation4 + $0x12] sm:$0xff]
      %v1365 = vld [vmem:[#allocation4 + $0x1a] sm:$0xff]
      %v1366 = vld [vmem:[#allocation4 + $0x22] sm:$0xff]
      %v1367 = vld [vmem:[#allocation4 + $0x2a] sm:$0x3f]
      %v1368 = vpack.c.bf16 %v1351, %v1350
      %v1369 = vpack.c.bf16 %v1357, %v1356
      %v1370 = vpack.c.bf16 %v1363, %v1362
      %v1371 = vpack.c.bf16 %v1353, %v1352
      %v1372 = vpack.c.bf16 %v1359, %v1358
      %v1373 = vpack.c.bf16 %v1365, %v1364
      %v1374 = vpack.c.bf16 %v1355, %v1354
      %v1375 = vpack.c.bf16 %v1361, %v1360
      %v1376 = vpack.c.bf16 %v1367, %v1366
      %v1377 = vld [vmem:[%s5] sm:$0xf]
      %v1378 = vld [vmem:[%s5 + $0x4] sm:$0xf]
      %v1379 = vld [vmem:[%s5 + $0x8] sm:$0xf]
      %v1380 = vld [vmem:[%s5 + $0xc] sm:$0xf]
      %v1381 = vld [vmem:[%s5 + $0x10] sm:$0xf]
      %v1382 = vld [vmem:[%s5 + $0x14] sm:$0xf]
      %v1383 = vld [vmem:[%s5 + $0x18] sm:$0xf]
      %v1384 = vld [vmem:[%s5 + $0x1c] sm:$0xf]
      %v1385 = vld [vmem:[%s5 + $0x20] sm:$0xf]
      %v1386 = vld [vmem:[%s5 + $0x24] sm:$0xf]
      %v1387 = vld [vmem:[%s5 + $0x28] sm:$0xf]
      %v1388 = vld [vmem:[%s5 + $0x2c] sm:$0xf]
      %v1389 = vld [vmem:[%s5 + $0x30] sm:$0xf]
      %v1390 = vld [vmem:[%s5 + $0x34] sm:$0xf]
      %v1391 = vld [vmem:[%s5 + $0x38] sm:$0xf]
      %v1392 = vld [vmem:[%s5 + $0x3c] sm:$0xf]
      %v1393 = vld [vmem:[%s5 + $0x40] sm:$0xf]
      %v1394 = vld [vmem:[%s5 + $0x44] sm:$0xf]
      %v1395 = vld [vmem:[%s5 + $0x48] sm:$0xf]
      %v1396 = vld [vmem:[%s5 + $0x4c] sm:$0xf]
      %v1397 = vld [vmem:[%s5 + $0x50] sm:$0xf]
      %v1398 = vld [vmem:[%s5 + $0x54] sm:$0xf]
      %v1399 = vld [vmem:[%s5 + $0x58] sm:$0xf]
      %v1400 = vld [vmem:[%s5 + $0x5c] sm:$0xf]
      %v1401 = vld [vmem:[%s5 + $0x60] sm:$0xf]
      %v1402 = vld [vmem:[%s5 + $0x64] sm:$0xf]
      %v1403 = vld [vmem:[%s5 + $0x68] sm:$0xf]
      %v1404 = vld [vmem:[%s5 + $0x6c] sm:$0xf]
      %v1405 = vld [vmem:[%s5 + $0x70] sm:$0xf]
      %v1406 = vld [vmem:[%s5 + $0x74] sm:$0xf]
      %v1407 = vld [vmem:[%s5 + $0x78] sm:$0xf]
      %v1408 = vld [vmem:[%s5 + $0x7c] sm:$0xf]
      %v1409 = vld [vmem:[%s5 + $0x80] sm:$0xf]
      %v1410 = vld [vmem:[%s5 + $0x84] sm:$0xf]
      %v1411 = vld [vmem:[%s5 + $0x88] sm:$0xf]
      %v1412 = vld [vmem:[%s5 + $0x8c] sm:$0xf]
      %v1413 = vld [vmem:[%s5 + $0x90] sm:$0xf]
      %v1414 = vld [vmem:[%s5 + $0x94] sm:$0xf]
      %v1415 = vld [vmem:[%s5 + $0x98] sm:$0xf]
      %v1416 = vld [vmem:[%s5 + $0x9c] sm:$0xf]
      %v1417 = vld [vmem:[%s5 + $0xa0] sm:$0xf]
      %v1418 = vld [vmem:[%s5 + $0xa4] sm:$0xf]
      %v1419 = vld [vmem:[%s5 + $0xa8] sm:$0xf]
      %v1420 = vld [vmem:[%s5 + $0xac] sm:$0xf]
      %v1421 = vld [vmem:[%s5 + $0xb0] sm:$0xf]
      %v1422 = vld [vmem:[%s5 + $0xb4] sm:$0xf]
      %v1423 = vld [vmem:[%s5 + $0xb8] sm:$0xf]
      %v1424 = vld [vmem:[%s5 + $0xbc] sm:$0xf]
      %v1425 = vld [vmem:[%s6] sm:$0x1]
      %v1427 = vlaneseq
      %v1428 = vshrl.u32 %v1427, 7
      %v1429 = vsub.s32 0, %v1428
      %v1430 = vrot.slane %v1425, %v1429
      %v1480 = vunpack.c.l.b16 %v1377
      %v1481 = vunpack.c.l.b16 %v1378
      %v1482 = vunpack.c.l.b16 %v1379
      %v1483 = vunpack.c.l.b16 %v1380
      %v1484 = vunpack.c.l.b16 %v1381
      %v1485 = vunpack.c.l.b16 %v1382
      %v1486 = vunpack.c.l.b16 %v1383
      %v1487 = vunpack.c.l.b16 %v1384
      %v1488 = vunpack.c.l.b16 %v1385
      %v1489 = vunpack.c.l.b16 %v1386
      %v1490 = vunpack.c.l.b16 %v1387
      %v1491 = vunpack.c.l.b16 %v1388
      %v1492 = vunpack.c.l.b16 %v1389
      %v1493 = vunpack.c.l.b16 %v1390
      %v1494 = vunpack.c.l.b16 %v1391
      %v1495 = vunpack.c.l.b16 %v1392
      %v1496 = vunpack.c.l.b16 %v1393
      %v1497 = vunpack.c.l.b16 %v1394
      %v1498 = vunpack.c.l.b16 %v1395
      %v1499 = vunpack.c.l.b16 %v1396
      %v1500 = vunpack.c.l.b16 %v1397
      %v1501 = vunpack.c.l.b16 %v1398
      %v1502 = vunpack.c.l.b16 %v1399
      %v1503 = vunpack.c.l.b16 %v1400
      %v1504 = vunpack.c.l.b16 %v1401
      %v1505 = vunpack.c.l.b16 %v1402
      %v1506 = vunpack.c.l.b16 %v1403
      %v1507 = vunpack.c.l.b16 %v1404
      %v1508 = vunpack.c.l.b16 %v1405
      %v1509 = vunpack.c.l.b16 %v1406
      %v1510 = vunpack.c.l.b16 %v1407
      %v1511 = vunpack.c.l.b16 %v1408
      %v1512 = vunpack.c.l.b16 %v1409
      %v1513 = vunpack.c.l.b16 %v1410
      %v1514 = vunpack.c.l.b16 %v1411
      %v1515 = vunpack.c.l.b16 %v1412
      %v1516 = vunpack.c.l.b16 %v1413
      %v1517 = vunpack.c.l.b16 %v1414
      %v1518 = vunpack.c.l.b16 %v1415
      %v1519 = vunpack.c.l.b16 %v1416
      %v1520 = vunpack.c.l.b16 %v1417
      %v1521 = vunpack.c.l.b16 %v1418
      %v1522 = vunpack.c.l.b16 %v1419
      %v1523 = vunpack.c.l.b16 %v1420
      %v1524 = vunpack.c.l.b16 %v1421
      %v1525 = vunpack.c.l.b16 %v1422
      %v1526 = vunpack.c.l.b16 %v1423
      %v1527 = vunpack.c.l.b16 %v1424
      %v1528 = vpack.c.b16 %v1481, %v1480
      %v1529 = vpack.c.b16 %v1483, %v1482
      %v1530 = vpack.c.b16 %v1485, %v1484
      %v1531 = vpack.c.b16 %v1487, %v1486
      %v1532 = vpack.c.b16 %v1489, %v1488
      %v1533 = vpack.c.b16 %v1491, %v1490
      %v1534 = vpack.c.b16 %v1493, %v1492
      %v1535 = vpack.c.b16 %v1495, %v1494
      %v1536 = vpack.c.b16 %v1497, %v1496
      %v1537 = vpack.c.b16 %v1499, %v1498
      %v1538 = vpack.c.b16 %v1501, %v1500
      %v1539 = vpack.c.b16 %v1503, %v1502
      %v1540 = vpack.c.b16 %v1505, %v1504
      %v1541 = vpack.c.b16 %v1507, %v1506
      %v1542 = vpack.c.b16 %v1509, %v1508
      %v1543 = vpack.c.b16 %v1511, %v1510
      %v1544 = vpack.c.b16 %v1513, %v1512
      %v1545 = vpack.c.b16 %v1515, %v1514
      %v1546 = vpack.c.b16 %v1517, %v1516
      %v1547 = vpack.c.b16 %v1519, %v1518
      %v1548 = vpack.c.b16 %v1521, %v1520
      %v1549 = vpack.c.b16 %v1523, %v1522
      %v1550 = vpack.c.b16 %v1525, %v1524
      %v1551 = vpack.c.b16 %v1527, %v1526
      %1576 = vmatprep.subr.bf16.mxu0 0
      %1577 = vmatpush1.bf16.msra.mxu0 %v1535
      %1578 = vmatprep.subr.bf16.mxu0 0
      %1579 = vmatpush1.bf16.msra.mxu0 %v1534
      %1580 = vmatprep.subr.bf16.mxu0 0
      %1581 = vmatpush1.bf16.msra.mxu0 %v1533
      %1582 = vmatprep.subr.bf16.mxu0 0
      %1583 = vmatpush1.bf16.msra.mxu0 %v1532
      %1584 = vmatprep.subr.bf16.mxu0 0
      %1585 = vmatpush1.bf16.msra.mxu0 %v1531
      %1586 = vmatprep.subr.bf16.mxu0 0
      %1587 = vmatpush1.bf16.msra.mxu0 %v1530
      %1588 = vmatprep.subr.bf16.mxu0 0
      %1589 = vmatpush1.bf16.msra.mxu0 %v1529
      %1590 = vmatprep.subr.bf16.mxu0 0
      %1591 = vmatpush1.bf16.msra.mxu0 %v1528
      %1592 = vmatprep.subr.bf16.mxu0 0
      %1593 = vmatpush2.bf16.msra.mxu0 %v1543
      %1594 = vmatprep.subr.bf16.mxu0 0
      %1595 = vmatpush2.bf16.msra.mxu0 %v1542
      %1596 = vmatprep.subr.bf16.mxu0 0
      %1597 = vmatpush2.bf16.msra.mxu0 %v1541
      %1598 = vmatprep.subr.bf16.mxu0 0
      %1599 = vmatpush2.bf16.msra.mxu0 %v1540
      %1600 = vmatprep.subr.bf16.mxu0 0
      %1601 = vmatpush2.bf16.msra.mxu0 %v1539
      %1602 = vmatprep.subr.bf16.mxu0 0
      %1603 = vmatpush2.bf16.msra.mxu0 %v1538
      %1604 = vmatprep.subr.bf16.mxu0 0
      %1605 = vmatpush2.bf16.msra.mxu0 %v1537
      %1606 = vmatprep.subr.bf16.mxu0 0
      %1607 = vmatpush2.bf16.msra.mxu0 %v1536
      %1608 = vmatprep.mubr.bf16.mxu0 %v1369
      %1609 = vmatmul.mubr.bf16.gmra.mxu0 %v1368
      %v1610 = vpop.f32.mrf.mxu0
      %v1611 = vadd.f32 %v1430, %v1610
      %v1612 = vpop.f32.mrf.mxu0
      %v1613 = vpop.f32.mrf.mxu0
      %v1614 = vadd.f32 %v1430, %v1613
      %v1615 = vpop.f32.mrf.mxu0
      %1616 = vmatprep.mubr.bf16.mxu0 %v1372
      %1617 = vmatmul.mubr.bf16.gmra.mxu0 %v1371
      %v1618 = vpop.f32.mrf.mxu0
      %v1619 = vadd.f32 %v1430, %v1618
      %v1620 = vpop.f32.mrf.mxu0
      %v1621 = vpop.f32.mrf.mxu0
      %v1622 = vadd.f32 %v1430, %v1621
      %v1623 = vpop.f32.mrf.mxu0
      %1624 = vmatprep.mubr.bf16.mxu0 %v1375
      %1625 = vmatmul.mubr.bf16.gmra.mxu0 %v1374
      %v1626 = vpop.f32.mrf.mxu0
      %v1627 = vadd.f32 %v1430, %v1626
      %v1628 = vpop.f32.mrf.mxu0
      %v1629 = vpop.f32.mrf.mxu0
      %v1630 = vadd.f32 %v1430, %v1629
      %v1631 = vpop.f32.mrf.mxu0
      %1632 = vdwg.mxu0
      %1633 = vmatprep.subr.bf16.mxu0 0
      %1634 = vmatpush1.bf16.msra.mxu0 %v1551
      %1635 = vmatprep.subr.bf16.mxu0 0
      %1636 = vmatpush1.bf16.msra.mxu0 %v1550
      %1637 = vmatprep.subr.bf16.mxu0 0
      %1638 = vmatpush1.bf16.msra.mxu0 %v1549
      %1639 = vmatprep.subr.bf16.mxu0 0
      %1640 = vmatpush1.bf16.msra.mxu0 %v1548
      %1641 = vmatprep.subr.bf16.mxu0 0
      %1642 = vmatpush1.bf16.msra.mxu0 %v1547
      %1643 = vmatprep.subr.bf16.mxu0 0
      %1644 = vmatpush1.bf16.msra.mxu0 %v1546
      %1645 = vmatprep.subr.bf16.mxu0 0
      %1646 = vmatpush1.bf16.msra.mxu0 %v1545
      %1647 = vmatprep.subr.bf16.mxu0 0
      %1648 = vmatpush1.bf16.msra.mxu0 %v1544
      %1649 = vmatprep.subr.bf16.mxu0 0
      %1650 = vmatpush2.bf16.msra.mxu0 0
      %1651 = vmatprep.subr.bf16.mxu0 0
      %1652 = vmatpush2.bf16.msra.mxu0 0
      %1653 = vmatprep.subr.bf16.mxu0 0
      %1654 = vmatpush2.bf16.msra.mxu0 0
      %1655 = vmatprep.subr.bf16.mxu0 0
      %1656 = vmatpush2.bf16.msra.mxu0 0
      %1657 = vmatprep.subr.bf16.mxu0 0
      %1658 = vmatpush2.bf16.msra.mxu0 0
      %1659 = vmatprep.subr.bf16.mxu0 0
      %1660 = vmatpush2.bf16.msra.mxu0 0
      %1661 = vmatprep.subr.bf16.mxu0 0
      %1662 = vmatpush2.bf16.msra.mxu0 0
      %1663 = vmatprep.subr.bf16.mxu0 0
      %1664 = vmatpush2.bf16.msra.mxu0 0
      %1665 = vmatprep.mubr.bf16.mxu0 0
      %1666 = vmatmul.mubr.bf16.gmra.mxu0 %v1370
      %v1667 = vpop.f32.mrf.mxu0
      %v1668 = vadd.f32 %v1611, %v1667
      %v1669 = vpop.f32.mrf.mxu0
      %v1670 = vpop.f32.mrf.mxu0
      %v1671 = vadd.f32 %v1614, %v1670
      %v1672 = vpop.f32.mrf.mxu0
      %1673 = vmatprep.mubr.bf16.mxu0 0
      %1674 = vmatmul.mubr.bf16.gmra.mxu0 %v1373
      %v1675 = vpop.f32.mrf.mxu0
      %v1676 = vadd.f32 %v1619, %v1675
      %v1677 = vpop.f32.mrf.mxu0
      %v1678 = vpop.f32.mrf.mxu0
      %v1679 = vadd.f32 %v1622, %v1678
      %v1680 = vpop.f32.mrf.mxu0
      %1681 = vmatprep.mubr.bf16.mxu0 0
      %1682 = vmatmul.mubr.bf16.gmra.mxu0 %v1376
      %v1683 = vpop.f32.mrf.mxu0
      %v1684 = vadd.f32 %v1627, %v1683
      %v1685 = vpop.f32.mrf.mxu0
      %v1686 = vpop.f32.mrf.mxu0
      %v1687 = vadd.f32 %v1630, %v1686
      %v1688 = vpop.f32.mrf.mxu0
      %1689 = vdwg.mxu0
      %1690 = vst [vmem:[#allocation2] sm:$0xff] %v1668
      %1691 = vst [vmem:[#allocation2 + $0x8] sm:$0xff] %v1671
      %1692 = vst [vmem:[#allocation2 + $0x10] sm:$0xff] %v1676
      %1693 = vst [vmem:[#allocation2 + $0x18] sm:$0xff] %v1679
      %1694 = vst [vmem:[#allocation2 + $0x20] sm:$0xff] %v1684
      %1695 = vst [vmem:[#allocation2 + $0x28] sm:$0x3f] %v1687
      %v1696 = vld [vmem:[#allocation2] ss:$5 sm:$0xff]
      %s1697 = scalar_lea.vmem [#allocation2], 40
      %v1698 = vld [vmem:[%s1697] ss:$5 sm:$0x1]
      %v1699 = vld [vmem:[%s783] ss:$5 sm:$0xff]
      %s1700 = scalar_lea.vmem [#allocation2], 41
      %v1701 = vld [vmem:[%s1700] ss:$5 sm:$0x1]
      %v1702 = vmax.f32 %v1696, %v1699
      %v1703 = vmax.f32 %v1698, %v1701
      %s1704 = scalar_lea.vmem [#allocation2], 2
      %v1705 = vld [vmem:[%s1704] ss:$5 sm:$0xff]
      %s1706 = scalar_lea.vmem [#allocation2], 42
      %v1707 = vld [vmem:[%s1706] ss:$5 sm:$0x1]
      %v1708 = vmax.f32 %v1702, %v1705
      %v1709 = vmax.f32 %v1703, %v1707
      %s1710 = scalar_lea.vmem [#allocation2], 3
      %v1711 = vld [vmem:[%s1710] ss:$5 sm:$0xff]
      %s1712 = scalar_lea.vmem [#allocation2], 43
      %v1713 = vld [vmem:[%s1712] ss:$5 sm:$0x1]
      %v1714 = vmax.f32 %v1708, %v1711
      %v1715 = vmax.f32 %v1709, %v1713
      %s1716 = scalar_lea.vmem [#allocation2], 4
      %v1717 = vld [vmem:[%s1716] ss:$5 sm:$0xff]
      %s1718 = scalar_lea.vmem [#allocation2], 44
      %v1719 = vld [vmem:[%s1718] ss:$5 sm:$0x1]
      %v1720 = vmax.f32 %v1714, %v1717
      %v1721 = vmax.f32 %v1715, %v1719
      %v1722 = vmul.f32 %v1720, 0.01
      %v1723 = vmul.f32 %v1721, 0.01
      %v1724 = vmax.f32 %v1720, %v1722
      %v1725 = vmax.f32 %v1721, %v1723
      %v1727 = vrot.slane %v1724, 1
      %v1728 = vrot.slane %v1724, 2
      %v1729 = vrot.slane %v1724, 3
      %v1730 = vrot.slane %v1724, 4
      %v1731 = vrot.slane %v1724, 5
      %v1732 = vrot.slane %v1724, 6
      %v1733 = vrot.slane %v1724, 7
      %v1735 = vcombine.low %v1724, %v1727
      %v1736 = vcombine.low %v1728, %v1729
      %v1737 = vcombine.low %v1730, %v1731
      %v1738 = vcombine.low %v1732, %v1733
      %v1740 = vunpack.c.l.s4 1966171168
      %v1741 = vunpack.c.0.s8 %v1740
      %v1742 = vlaneseq
      %v1743 = vshrl.u32 %v1742, 7
      %v1744 = vsub.s32 %v1741, %v1743
      %v1745 = vrot.slane %v1735, %v1744
      %v1747 = vunpack.c.l.s4 1966171168
      %v1748 = vunpack.c.0.s8 %v1747
      %v1749 = vlaneseq
      %v1750 = vshrl.u32 %v1749, 7
      %v1751 = vsub.s32 %v1748, %v1750
      %v1752 = vrot.slane %v1736, %v1751
      %v1754 = vunpack.c.l.s4 1966171168
      %v1755 = vunpack.c.0.s8 %v1754
      %v1756 = vlaneseq
      %v1757 = vshrl.u32 %v1756, 7
      %v1758 = vsub.s32 %v1755, %v1757
      %v1759 = vrot.slane %v1737, %v1758
      %v1761 = vunpack.c.l.s4 1966171168
      %v1762 = vunpack.c.0.s8 %v1761
      %v1763 = vlaneseq
      %v1764 = vshrl.u32 %v1763, 7
      %v1765 = vsub.s32 %v1762, %v1764
      %v1766 = vrot.slane %v1738, %v1765
      %v1767 = vcombine.low %v1745, %v1752
      %v1768 = vcombine.low %v1759, %v1766
      %v1770 = vunpack.c.l.s4 1966171168
      %v1771 = vunpack.c.0.s8 %v1770
      %v1772 = vlaneseq
      %v1773 = vshrl.u32 %v1772, 7
      %v1774 = vsub.s32 %v1771, %v1773
      %v1775 = vrot.slane %v1767, %v1774
      %v1777 = vunpack.c.l.s4 1966171168
      %v1778 = vunpack.c.0.s8 %v1777
      %v1779 = vlaneseq
      %v1780 = vshrl.u32 %v1779, 7
      %v1781 = vsub.s32 %v1778, %v1780
      %v1782 = vrot.slane %v1768, %v1781
      %v1783 = vcombine.low %v1775, %v1782
      %v1785 = vunpack.c.l.s4 1966171168
      %v1786 = vunpack.c.0.s8 %v1785
      %v1787 = vlaneseq
      %v1788 = vshrl.u32 %v1787, 7
      %v1789 = vsub.s32 %v1786, %v1788
      %v1790 = vrot.slane %v1725, %v1789
      %v1792 = vunpack.c.l.s4 1966171168
      %v1793 = vunpack.c.0.s8 %v1792
      %v1794 = vlaneseq
      %v1795 = vshrl.u32 %v1794, 7
      %v1796 = vsub.s32 %v1793, %v1795
      %v1797 = vrot.slane %v1790, %v1796
      %1800 = vst [vmem:[#allocation5] sm:$0xff] %v1783
      %v1801 = vlaneseq
      %vm1802 = vcmp.ge.s32.totalorder %v1801, 0
      %vm1803 = vcmp.lt.s32.totalorder %v1801, 128
      %vm1804 = vmand %vm1802, %vm1803
      %1805 = vst.msk [vmem:[#allocation5 + $0x8] sm:$0x1] %vm1804, %v1797
      %v1806 = vld [vmem:[#allocation5] sm:$0xff]
      %v1807 = vld [vmem:[#allocation5 + $0x8] sm:$0x1]
      %v1810 = vlaneseq
      %v1811 = vshrl.u32 %v1810, 7
      %v1812 = vsub.s32 0, %v1811
      %v1813 = vrot.slane %v1806, %v1812
      %v1814 = vlaneseq
      %v1815 = vshrl.u32 %v1814, 7
      %v1816 = vsub.s32 1, %v1815
      %v1817 = vrot.slane %v1806, %v1816
      %v1818 = vlaneseq
      %v1819 = vshrl.u32 %v1818, 7
      %v1820 = vsub.s32 2, %v1819
      %v1821 = vrot.slane %v1806, %v1820
      %v1822 = vlaneseq
      %v1823 = vshrl.u32 %v1822, 7
      %v1824 = vsub.s32 3, %v1823
      %v1825 = vrot.slane %v1806, %v1824
      %v1826 = vlaneseq
      %v1827 = vshrl.u32 %v1826, 7
      %v1828 = vsub.s32 4, %v1827
      %v1829 = vrot.slane %v1806, %v1828
      %v1830 = vlaneseq
      %v1831 = vshrl.u32 %v1830, 7
      %v1832 = vsub.s32 5, %v1831
      %v1833 = vrot.slane %v1806, %v1832
      %v1834 = vlaneseq
      %v1835 = vshrl.u32 %v1834, 7
      %v1836 = vsub.s32 6, %v1835
      %v1837 = vrot.slane %v1806, %v1836
      %v1838 = vlaneseq
      %v1839 = vshrl.u32 %v1838, 7
      %v1840 = vsub.s32 7, %v1839
      %v1841 = vrot.slane %v1806, %v1840
      %v1842 = vlaneseq
      %v1843 = vshrl.u32 %v1842, 7
      %v1844 = vsub.s32 0, %v1843
      %v1845 = vrot.slane %v1807, %v1844
      %v1855 = vpack.c.bf16 %v1813, %v1813
      %v1856 = vpack.c.bf16 %v1817, %v1817
      %v1857 = vpack.c.bf16 %v1821, %v1821
      %v1858 = vpack.c.bf16 %v1825, %v1825
      %v1859 = vpack.c.bf16 %v1829, %v1829
      %v1860 = vpack.c.bf16 %v1833, %v1833
      %v1861 = vpack.c.bf16 %v1837, %v1837
      %v1862 = vpack.c.bf16 %v1841, %v1841
      %v1863 = vpack.c.bf16 %v1845, %v1845
      %v1864 = vld [vmem:[%s7] sm:$0xff]
      %v1865 = vld [vmem:[%s7 + $0x8] sm:$0xff]
      %v1866 = vld [vmem:[%s7 + $0x10] sm:$0xff]
      %v1867 = vld [vmem:[%s7 + $0x18] sm:$0xff]
      %v1868 = vld [vmem:[%s7 + $0x20] sm:$0xff]
      %v1869 = vld [vmem:[%s7 + $0x28] sm:$0xff]
      %v1870 = vld [vmem:[%s7 + $0x30] sm:$0xff]
      %v1871 = vld [vmem:[%s7 + $0x38] sm:$0xff]
      %v1872 = vld [vmem:[%s7 + $0x40] sm:$0xff]
      %v1873 = vld [vmem:[%s7 + $0x48] sm:$0xff]
      %v1874 = vld [vmem:[%s7 + $0x50] sm:$0xff]
      %v1875 = vld [vmem:[%s7 + $0x58] sm:$0xff]
      %v1876 = vld [vmem:[%s7 + $0x60] sm:$0xff]
      %v1877 = vld [vmem:[%s7 + $0x68] sm:$0xff]
      %v1878 = vld [vmem:[%s7 + $0x70] sm:$0xff]
      %v1879 = vld [vmem:[%s7 + $0x78] sm:$0xff]
      %v1880 = vld [vmem:[%s7 + $0x80] sm:$0xff]
      %v1881 = vld [vmem:[%s7 + $0x88] sm:$0xff]
      %v1882 = vld [vmem:[%s7 + $0x90] sm:$0xff]
      %v1883 = vld [vmem:[%s7 + $0x98] sm:$0xff]
      %v1884 = vld [vmem:[%s7 + $0xa0] sm:$0xff]
      %v1885 = vld [vmem:[%s7 + $0xa8] sm:$0xff]
      %v1886 = vld [vmem:[%s7 + $0xb0] sm:$0xff]
      %v1887 = vld [vmem:[%s7 + $0xb8] sm:$0xff]
      %v1888 = vld [vmem:[%s7 + $0xc0] sm:$0xff]
      %v1889 = vld [vmem:[%s7 + $0xc8] sm:$0xff]
      %v1890 = vld [vmem:[%s7 + $0xd0] sm:$0xff]
      %v1891 = vld [vmem:[%s7 + $0xd8] sm:$0xff]
      %v1892 = vld [vmem:[%s7 + $0xe0] sm:$0xff]
      %v1893 = vld [vmem:[%s7 + $0xe8] sm:$0xff]
      %v1894 = vld [vmem:[%s7 + $0xf0] sm:$0xff]
      %v1895 = vld [vmem:[%s7 + $0xf8] sm:$0xff]
      %v1896 = vld [vmem:[%s7 + $0x100] sm:$0xff]
      %v1897 = vld [vmem:[%s7 + $0x108] sm:$0xff]
      %v1898 = vld [vmem:[%s7 + $0x110] sm:$0xff]
      %v1899 = vld [vmem:[%s7 + $0x118] sm:$0xff]
      %v1900 = vld [vmem:[%s7 + $0x120] sm:$0xff]
      %v1901 = vld [vmem:[%s7 + $0x128] sm:$0xff]
      %v1902 = vld [vmem:[%s7 + $0x130] sm:$0xff]
      %v1903 = vld [vmem:[%s7 + $0x138] sm:$0xff]
      %v1904 = vld [vmem:[%s7 + $0x140] sm:$0xff]
      %v1905 = vld [vmem:[%s7 + $0x148] sm:$0xff]
      %v1906 = vld [vmem:[%s7 + $0x150] sm:$0xff]
      %v1907 = vld [vmem:[%s7 + $0x158] sm:$0xff]
      %v1908 = vld [vmem:[%s7 + $0x160] sm:$0xff]
      %v1909 = vld [vmem:[%s7 + $0x168] sm:$0xff]
      %v1910 = vld [vmem:[%s7 + $0x170] sm:$0xff]
      %v1911 = vld [vmem:[%s7 + $0x178] sm:$0xff]
      %v1912 = vld [vmem:[%s7 + $0x180] sm:$0xff]
      %v1913 = vld [vmem:[%s7 + $0x188] sm:$0xff]
      %v1914 = vld [vmem:[%s7 + $0x190] sm:$0xff]
      %v1915 = vld [vmem:[%s7 + $0x198] sm:$0xff]
      %v1916 = vld [vmem:[%s7 + $0x1a0] sm:$0xff]
      %v1917 = vld [vmem:[%s7 + $0x1a8] sm:$0xff]
      %v1918 = vld [vmem:[%s7 + $0x1b0] sm:$0xff]
      %v1919 = vld [vmem:[%s7 + $0x1b8] sm:$0xff]
      %v1920 = vld [vmem:[%s7 + $0x1c0] sm:$0xff]
      %v1921 = vld [vmem:[%s7 + $0x1c8] sm:$0xff]
      %v1922 = vld [vmem:[%s7 + $0x1d0] sm:$0xff]
      %v1923 = vld [vmem:[%s7 + $0x1d8] sm:$0xff]
      %v1924 = vld [vmem:[%s7 + $0x1e0] sm:$0xff]
      %v1925 = vld [vmem:[%s7 + $0x1e8] sm:$0xff]
      %v1926 = vld [vmem:[%s7 + $0x1f0] sm:$0xff]
      %v1927 = vld [vmem:[%s7 + $0x1f8] sm:$0xff]
      %v1928 = vld [vmem:[%s7 + $0x200] sm:$0xff]
      %v1929 = vld [vmem:[%s7 + $0x208] sm:$0xff]
      %v1930 = vld [vmem:[%s7 + $0x210] sm:$0xff]
      %v1931 = vld [vmem:[%s7 + $0x218] sm:$0xff]
      %v1932 = vld [vmem:[%s7 + $0x220] sm:$0xff]
      %v1933 = vld [vmem:[%s7 + $0x228] sm:$0xff]
      %v1934 = vld [vmem:[%s7 + $0x230] sm:$0xff]
      %v1935 = vld [vmem:[%s7 + $0x238] sm:$0xff]
      %v1936 = vld [vmem:[%s7 + $0x240] sm:$0xff]
      %v1937 = vld [vmem:[%s7 + $0x248] sm:$0xff]
      %v1938 = vld [vmem:[%s7 + $0x250] sm:$0xff]
      %v1939 = vld [vmem:[%s7 + $0x258] sm:$0xff]
      %v1940 = vld [vmem:[%s7 + $0x260] sm:$0xff]
      %v1941 = vld [vmem:[%s7 + $0x268] sm:$0xff]
      %v1942 = vld [vmem:[%s7 + $0x270] sm:$0xff]
      %v1943 = vld [vmem:[%s7 + $0x278] sm:$0xff]
      %v1944 = vld [vmem:[%s7 + $0x280] sm:$0xff]
      %v1945 = vld [vmem:[%s7 + $0x288] sm:$0xff]
      %v1946 = vld [vmem:[%s7 + $0x290] sm:$0xff]
      %v1947 = vld [vmem:[%s7 + $0x298] sm:$0xff]
      %v1948 = vld [vmem:[%s7 + $0x2a0] sm:$0xff]
      %v1949 = vld [vmem:[%s7 + $0x2a8] sm:$0xff]
      %v1950 = vld [vmem:[%s7 + $0x2b0] sm:$0xff]
      %v1951 = vld [vmem:[%s7 + $0x2b8] sm:$0xff]
      %v1952 = vld [vmem:[%s7 + $0x2c0] sm:$0xff]
      %v1953 = vld [vmem:[%s7 + $0x2c8] sm:$0xff]
      %v1954 = vld [vmem:[%s7 + $0x2d0] sm:$0xff]
      %v1955 = vld [vmem:[%s7 + $0x2d8] sm:$0xff]
      %v1956 = vld [vmem:[%s7 + $0x2e0] sm:$0xff]
      %v1957 = vld [vmem:[%s7 + $0x2e8] sm:$0xff]
      %v1958 = vld [vmem:[%s7 + $0x2f0] sm:$0xff]
      %v1959 = vld [vmem:[%s7 + $0x2f8] sm:$0xff]
      %v1960 = vld [vmem:[%s7 + $0x300] sm:$0xff]
      %v1961 = vld [vmem:[%s7 + $0x308] sm:$0xff]
      %v1962 = vld [vmem:[%s7 + $0x310] sm:$0xff]
      %v1963 = vld [vmem:[%s7 + $0x318] sm:$0xff]
      %v1964 = vld [vmem:[%s7 + $0x320] sm:$0xff]
      %v1965 = vld [vmem:[%s7 + $0x328] sm:$0xff]
      %v1966 = vld [vmem:[%s7 + $0x330] sm:$0xff]
      %v1967 = vld [vmem:[%s7 + $0x338] sm:$0xff]
      %v1968 = vld [vmem:[%s7 + $0x340] sm:$0xff]
      %v1969 = vld [vmem:[%s7 + $0x348] sm:$0xff]
      %v1970 = vld [vmem:[%s7 + $0x350] sm:$0xff]
      %v1971 = vld [vmem:[%s7 + $0x358] sm:$0xff]
      %v1972 = vld [vmem:[%s7 + $0x360] sm:$0xff]
      %v1973 = vld [vmem:[%s7 + $0x368] sm:$0xff]
      %v1974 = vld [vmem:[%s7 + $0x370] sm:$0xff]
      %v1975 = vld [vmem:[%s7 + $0x378] sm:$0xff]
      %v1976 = vld [vmem:[%s7 + $0x380] sm:$0xff]
      %v1977 = vld [vmem:[%s7 + $0x388] sm:$0xff]
      %v1978 = vld [vmem:[%s7 + $0x390] sm:$0xff]
      %v1979 = vld [vmem:[%s7 + $0x398] sm:$0xff]
      %v1980 = vld [vmem:[%s7 + $0x3a0] sm:$0xff]
      %v1981 = vld [vmem:[%s7 + $0x3a8] sm:$0xff]
      %v1982 = vld [vmem:[%s7 + $0x3b0] sm:$0xff]
      %v1983 = vld [vmem:[%s7 + $0x3b8] sm:$0xff]
      %v1984 = vld [vmem:[%s7 + $0x3c0] sm:$0xff]
      %v1985 = vld [vmem:[%s7 + $0x3c8] sm:$0xff]
      %v1986 = vld [vmem:[%s7 + $0x3d0] sm:$0xff]
      %v1987 = vld [vmem:[%s7 + $0x3d8] sm:$0xff]
      %v1988 = vld [vmem:[%s7 + $0x3e0] sm:$0xff]
      %v1989 = vld [vmem:[%s7 + $0x3e8] sm:$0xff]
      %v1990 = vld [vmem:[%s7 + $0x3f0] sm:$0xff]
      %v1991 = vld [vmem:[%s7 + $0x3f8] sm:$0xff]
      %v1992 = vld [vmem:[%s7 + $0x400] sm:$0xff]
      %v1993 = vld [vmem:[%s7 + $0x408] sm:$0xff]
      %v1994 = vld [vmem:[%s7 + $0x410] sm:$0xff]
      %v1995 = vld [vmem:[%s7 + $0x418] sm:$0xff]
      %v1996 = vld [vmem:[%s7 + $0x420] sm:$0xff]
      %v1997 = vld [vmem:[%s7 + $0x428] sm:$0xff]
      %v1998 = vld [vmem:[%s7 + $0x430] sm:$0xff]
      %v1999 = vld [vmem:[%s7 + $0x438] sm:$0xff]
      %v2000 = vld [vmem:[%s7 + $0x440] sm:$0xff]
      %v2001 = vld [vmem:[%s7 + $0x448] sm:$0xff]
      %v2002 = vld [vmem:[%s7 + $0x450] sm:$0xff]
      %v2003 = vld [vmem:[%s7 + $0x458] sm:$0xff]
      %v2004 = vld [vmem:[%s7 + $0x460] sm:$0xff]
      %v2005 = vld [vmem:[%s7 + $0x468] sm:$0xff]
      %v2006 = vld [vmem:[%s7 + $0x470] sm:$0xff]
      %v2007 = vld [vmem:[%s7 + $0x478] sm:$0xff]
      %v2008 = vld [vmem:[%s7 + $0x480] sm:$0xff]
      %v2009 = vld [vmem:[%s7 + $0x488] sm:$0xff]
      %v2010 = vld [vmem:[%s7 + $0x490] sm:$0xff]
      %v2011 = vld [vmem:[%s7 + $0x498] sm:$0xff]
      %v2012 = vld [vmem:[%s7 + $0x4a0] sm:$0xff]
      %v2013 = vld [vmem:[%s7 + $0x4a8] sm:$0xff]
      %v2014 = vld [vmem:[%s7 + $0x4b0] sm:$0xff]
      %v2015 = vld [vmem:[%s7 + $0x4b8] sm:$0xff]
      %v2016 = vld [vmem:[%s7 + $0x4c0] sm:$0xff]
      %v2017 = vld [vmem:[%s7 + $0x4c8] sm:$0xff]
      %v2018 = vld [vmem:[%s7 + $0x4d0] sm:$0xff]
      %v2019 = vld [vmem:[%s7 + $0x4d8] sm:$0xff]
      %v2020 = vld [vmem:[%s7 + $0x4e0] sm:$0xff]
      %v2021 = vld [vmem:[%s7 + $0x4e8] sm:$0xff]
      %v2022 = vld [vmem:[%s7 + $0x4f0] sm:$0xff]
      %v2023 = vld [vmem:[%s7 + $0x4f8] sm:$0xff]
      %v2024 = vld [vmem:[%s7 + $0x500] sm:$0xff]
      %v2025 = vld [vmem:[%s7 + $0x508] sm:$0xff]
      %v2026 = vld [vmem:[%s7 + $0x510] sm:$0xff]
      %v2027 = vld [vmem:[%s7 + $0x518] sm:$0xff]
      %v2028 = vld [vmem:[%s7 + $0x520] sm:$0xff]
      %v2029 = vld [vmem:[%s7 + $0x528] sm:$0xff]
      %v2030 = vld [vmem:[%s7 + $0x530] sm:$0xff]
      %v2031 = vld [vmem:[%s7 + $0x538] sm:$0xff]
      %v2032 = vld [vmem:[%s7 + $0x540] sm:$0xff]
      %v2033 = vld [vmem:[%s7 + $0x548] sm:$0xff]
      %v2034 = vld [vmem:[%s7 + $0x550] sm:$0xff]
      %v2035 = vld [vmem:[%s7 + $0x558] sm:$0xff]
      %v2036 = vld [vmem:[%s7 + $0x560] sm:$0xff]
      %v2037 = vld [vmem:[%s7 + $0x568] sm:$0xff]
      %v2038 = vld [vmem:[%s7 + $0x570] sm:$0xff]
      %v2039 = vld [vmem:[%s7 + $0x578] sm:$0xff]
      %v2040 = vld [vmem:[%s7 + $0x580] sm:$0xff]
      %v2041 = vld [vmem:[%s7 + $0x588] sm:$0xff]
      %v2042 = vld [vmem:[%s7 + $0x590] sm:$0xff]
      %v2043 = vld [vmem:[%s7 + $0x598] sm:$0xff]
      %v2044 = vld [vmem:[%s7 + $0x5a0] sm:$0xff]
      %v2045 = vld [vmem:[%s7 + $0x5a8] sm:$0xff]
      %v2046 = vld [vmem:[%s7 + $0x5b0] sm:$0xff]
      %v2047 = vld [vmem:[%s7 + $0x5b8] sm:$0xff]
      %v2048 = vld [vmem:[%s7 + $0x5c0] sm:$0xff]
      %v2049 = vld [vmem:[%s7 + $0x5c8] sm:$0xff]
      %v2050 = vld [vmem:[%s7 + $0x5d0] sm:$0xff]
      %v2051 = vld [vmem:[%s7 + $0x5d8] sm:$0xff]
      %v2052 = vld [vmem:[%s7 + $0x5e0] sm:$0xff]
      %v2053 = vld [vmem:[%s7 + $0x5e8] sm:$0xff]
      %v2054 = vld [vmem:[%s7 + $0x5f0] sm:$0xff]
      %v2055 = vld [vmem:[%s7 + $0x5f8] sm:$0xff]
      %v2056 = vld [vmem:[%s7 + $0x600] sm:$0xff]
      %v2057 = vld [vmem:[%s7 + $0x608] sm:$0xff]
      %v2058 = vld [vmem:[%s7 + $0x610] sm:$0xff]
      %v2059 = vld [vmem:[%s7 + $0x618] sm:$0xff]
      %v2060 = vld [vmem:[%s7 + $0x620] sm:$0xff]
      %v2061 = vld [vmem:[%s7 + $0x628] sm:$0xff]
      %v2062 = vld [vmem:[%s7 + $0x630] sm:$0xff]
      %v2063 = vld [vmem:[%s7 + $0x638] sm:$0xff]
      %v2064 = vld [vmem:[%s7 + $0x640] sm:$0xff]
      %v2065 = vld [vmem:[%s7 + $0x648] sm:$0xff]
      %v2066 = vld [vmem:[%s7 + $0x650] sm:$0xff]
      %v2067 = vld [vmem:[%s7 + $0x658] sm:$0xff]
      %v2068 = vld [vmem:[%s7 + $0x660] sm:$0xff]
      %v2069 = vld [vmem:[%s7 + $0x668] sm:$0xff]
      %v2070 = vld [vmem:[%s7 + $0x670] sm:$0xff]
      %v2071 = vld [vmem:[%s7 + $0x678] sm:$0xff]
      %v2072 = vld [vmem:[%s7 + $0x680] sm:$0xff]
      %v2073 = vld [vmem:[%s7 + $0x688] sm:$0xff]
      %v2074 = vld [vmem:[%s7 + $0x690] sm:$0xff]
      %v2075 = vld [vmem:[%s7 + $0x698] sm:$0xff]
      %v2076 = vld [vmem:[%s7 + $0x6a0] sm:$0xff]
      %v2077 = vld [vmem:[%s7 + $0x6a8] sm:$0xff]
      %v2078 = vld [vmem:[%s7 + $0x6b0] sm:$0xff]
      %v2079 = vld [vmem:[%s7 + $0x6b8] sm:$0xff]
      %v2080 = vld [vmem:[%s7 + $0x6c0] sm:$0xff]
      %v2081 = vld [vmem:[%s7 + $0x6c8] sm:$0xff]
      %v2082 = vld [vmem:[%s7 + $0x6d0] sm:$0xff]
      %v2083 = vld [vmem:[%s7 + $0x6d8] sm:$0xff]
      %v2084 = vld [vmem:[%s7 + $0x6e0] sm:$0xff]
      %v2085 = vld [vmem:[%s7 + $0x6e8] sm:$0xff]
      %v2086 = vld [vmem:[%s7 + $0x6f0] sm:$0xff]
      %v2087 = vld [vmem:[%s7 + $0x6f8] sm:$0xff]
      %v2088 = vld [vmem:[%s7 + $0x700] sm:$0xff]
      %v2089 = vld [vmem:[%s7 + $0x708] sm:$0xff]
      %v2090 = vld [vmem:[%s7 + $0x710] sm:$0xff]
      %v2091 = vld [vmem:[%s7 + $0x718] sm:$0xff]
      %v2092 = vld [vmem:[%s7 + $0x720] sm:$0xff]
      %v2093 = vld [vmem:[%s7 + $0x728] sm:$0xff]
      %v2094 = vld [vmem:[%s7 + $0x730] sm:$0xff]
      %v2095 = vld [vmem:[%s7 + $0x738] sm:$0xff]
      %v2096 = vld [vmem:[%s7 + $0x740] sm:$0xff]
      %v2097 = vld [vmem:[%s7 + $0x748] sm:$0xff]
      %v2098 = vld [vmem:[%s7 + $0x750] sm:$0xff]
      %v2099 = vld [vmem:[%s7 + $0x758] sm:$0xff]
      %v2100 = vld [vmem:[%s7 + $0x760] sm:$0xff]
      %v2101 = vld [vmem:[%s7 + $0x768] sm:$0xff]
      %v2102 = vld [vmem:[%s7 + $0x770] sm:$0xff]
      %v2103 = vld [vmem:[%s7 + $0x778] sm:$0xff]
      %v2104 = vld [vmem:[%s7 + $0x780] sm:$0xff]
      %v2105 = vld [vmem:[%s7 + $0x788] sm:$0xff]
      %v2106 = vld [vmem:[%s7 + $0x790] sm:$0xff]
      %v2107 = vld [vmem:[%s7 + $0x798] sm:$0xff]
      %v2108 = vld [vmem:[%s7 + $0x7a0] sm:$0xff]
      %v2109 = vld [vmem:[%s7 + $0x7a8] sm:$0xff]
      %v2110 = vld [vmem:[%s7 + $0x7b0] sm:$0xff]
      %v2111 = vld [vmem:[%s7 + $0x7b8] sm:$0xff]
      %v2112 = vld [vmem:[%s7 + $0x7c0] sm:$0xff]
      %v2113 = vld [vmem:[%s7 + $0x7c8] sm:$0xff]
      %v2114 = vld [vmem:[%s7 + $0x7d0] sm:$0xff]
      %v2115 = vld [vmem:[%s7 + $0x7d8] sm:$0xff]
      %v2116 = vld [vmem:[%s7 + $0x7e0] sm:$0xff]
      %v2117 = vld [vmem:[%s7 + $0x7e8] sm:$0xff]
      %v2118 = vld [vmem:[%s7 + $0x7f0] sm:$0xff]
      %v2119 = vld [vmem:[%s7 + $0x7f8] sm:$0xff]
      %v2120 = vld [vmem:[%s7 + $0x800] sm:$0xff]
      %v2121 = vld [vmem:[%s7 + $0x808] sm:$0xff]
      %v2122 = vld [vmem:[%s7 + $0x810] sm:$0xff]
      %v2123 = vld [vmem:[%s7 + $0x818] sm:$0xff]
      %v2124 = vld [vmem:[%s7 + $0x820] sm:$0xff]
      %v2125 = vld [vmem:[%s7 + $0x828] sm:$0xff]
      %v2126 = vld [vmem:[%s7 + $0x830] sm:$0xff]
      %v2127 = vld [vmem:[%s7 + $0x838] sm:$0xff]
      %v2128 = vld [vmem:[%s7 + $0x840] sm:$0xff]
      %v2129 = vld [vmem:[%s7 + $0x848] sm:$0xff]
      %v2130 = vld [vmem:[%s7 + $0x850] sm:$0xff]
      %v2131 = vld [vmem:[%s7 + $0x858] sm:$0xff]
      %v2132 = vld [vmem:[%s7 + $0x860] sm:$0xff]
      %v2133 = vld [vmem:[%s7 + $0x868] sm:$0xff]
      %v2134 = vld [vmem:[%s7 + $0x870] sm:$0xff]
      %v2135 = vld [vmem:[%s7 + $0x878] sm:$0xff]
      %v2136 = vld [vmem:[%s7 + $0x880] sm:$0xff]
      %v2137 = vld [vmem:[%s7 + $0x888] sm:$0xff]
      %v2138 = vld [vmem:[%s7 + $0x890] sm:$0xff]
      %v2139 = vld [vmem:[%s7 + $0x898] sm:$0xff]
      %v2140 = vld [vmem:[%s7 + $0x8a0] sm:$0xff]
      %v2141 = vld [vmem:[%s7 + $0x8a8] sm:$0xff]
      %v2142 = vld [vmem:[%s7 + $0x8b0] sm:$0xff]
      %v2143 = vld [vmem:[%s7 + $0x8b8] sm:$0xff]
      %v2144 = vld [vmem:[%s7 + $0x8c0] sm:$0xff]
      %v2145 = vld [vmem:[%s7 + $0x8c8] sm:$0xff]
      %v2146 = vld [vmem:[%s7 + $0x8d0] sm:$0xff]
      %v2147 = vld [vmem:[%s7 + $0x8d8] sm:$0xff]
      %v2148 = vld [vmem:[%s7 + $0x8e0] sm:$0xff]
      %v2149 = vld [vmem:[%s7 + $0x8e8] sm:$0xff]
      %v2150 = vld [vmem:[%s7 + $0x8f0] sm:$0xff]
      %v2151 = vld [vmem:[%s7 + $0x8f8] sm:$0xff]
      %v2152 = vld [vmem:[%s8] sm:$0xf]
      %v2441 = vunpack.c.l.b16 %v1864
      %v2442 = vunpack.c.h.b16 %v1864
      %v2443 = vunpack.c.l.b16 %v1865
      %v2444 = vunpack.c.h.b16 %v1865
      %v2445 = vunpack.c.l.b16 %v1866
      %v2446 = vunpack.c.h.b16 %v1866
      %v2447 = vunpack.c.l.b16 %v1867
      %v2448 = vunpack.c.h.b16 %v1867
      %v2449 = vunpack.c.l.b16 %v1868
      %v2450 = vunpack.c.h.b16 %v1868
      %v2451 = vunpack.c.l.b16 %v1869
      %v2452 = vunpack.c.h.b16 %v1869
      %v2453 = vunpack.c.l.b16 %v1870
      %v2454 = vunpack.c.h.b16 %v1870
      %v2455 = vunpack.c.l.b16 %v1871
      %v2456 = vunpack.c.h.b16 %v1871
      %v2457 = vunpack.c.l.b16 %v1872
      %v2458 = vunpack.c.h.b16 %v1872
      %v2459 = vunpack.c.l.b16 %v1873
      %v2460 = vunpack.c.h.b16 %v1873
      %v2461 = vunpack.c.l.b16 %v1874
      %v2462 = vunpack.c.h.b16 %v1874
      %v2463 = vunpack.c.l.b16 %v1875
      %v2464 = vunpack.c.h.b16 %v1875
      %v2465 = vunpack.c.l.b16 %v1876
      %v2466 = vunpack.c.h.b16 %v1876
      %v2467 = vunpack.c.l.b16 %v1877
      %v2468 = vunpack.c.h.b16 %v1877
      %v2469 = vunpack.c.l.b16 %v1878
      %v2470 = vunpack.c.h.b16 %v1878
      %v2471 = vunpack.c.l.b16 %v1879
      %v2472 = vunpack.c.h.b16 %v1879
      %v2473 = vunpack.c.l.b16 %v1880
      %v2474 = vunpack.c.h.b16 %v1880
      %v2475 = vunpack.c.l.b16 %v1881
      %v2476 = vunpack.c.h.b16 %v1881
      %v2477 = vunpack.c.l.b16 %v1882
      %v2478 = vunpack.c.h.b16 %v1882
      %v2479 = vunpack.c.l.b16 %v1883
      %v2480 = vunpack.c.h.b16 %v1883
      %v2481 = vunpack.c.l.b16 %v1884
      %v2482 = vunpack.c.h.b16 %v1884
      %v2483 = vunpack.c.l.b16 %v1885
      %v2484 = vunpack.c.h.b16 %v1885
      %v2485 = vunpack.c.l.b16 %v1886
      %v2486 = vunpack.c.h.b16 %v1886
      %v2487 = vunpack.c.l.b16 %v1887
      %v2488 = vunpack.c.h.b16 %v1887
      %v2489 = vunpack.c.l.b16 %v1888
      %v2490 = vunpack.c.h.b16 %v1888
      %v2491 = vunpack.c.l.b16 %v1889
      %v2492 = vunpack.c.h.b16 %v1889
      %v2493 = vunpack.c.l.b16 %v1890
      %v2494 = vunpack.c.h.b16 %v1890
      %v2495 = vunpack.c.l.b16 %v1891
      %v2496 = vunpack.c.h.b16 %v1891
      %v2497 = vunpack.c.l.b16 %v1892
      %v2498 = vunpack.c.h.b16 %v1892
      %v2499 = vunpack.c.l.b16 %v1893
      %v2500 = vunpack.c.h.b16 %v1893
      %v2501 = vunpack.c.l.b16 %v1894
      %v2502 = vunpack.c.h.b16 %v1894
      %v2503 = vunpack.c.l.b16 %v1895
      %v2504 = vunpack.c.h.b16 %v1895
      %v2505 = vunpack.c.l.b16 %v1896
      %v2506 = vunpack.c.h.b16 %v1896
      %v2507 = vunpack.c.l.b16 %v1897
      %v2508 = vunpack.c.h.b16 %v1897
      %v2509 = vunpack.c.l.b16 %v1898
      %v2510 = vunpack.c.h.b16 %v1898
      %v2511 = vunpack.c.l.b16 %v1899
      %v2512 = vunpack.c.h.b16 %v1899
      %v2513 = vunpack.c.l.b16 %v1900
      %v2514 = vunpack.c.h.b16 %v1900
      %v2515 = vunpack.c.l.b16 %v1901
      %v2516 = vunpack.c.h.b16 %v1901
      %v2517 = vunpack.c.l.b16 %v1902
      %v2518 = vunpack.c.h.b16 %v1902
      %v2519 = vunpack.c.l.b16 %v1903
      %v2520 = vunpack.c.h.b16 %v1903
      %v2521 = vunpack.c.l.b16 %v1904
      %v2522 = vunpack.c.h.b16 %v1904
      %v2523 = vunpack.c.l.b16 %v1905
      %v2524 = vunpack.c.h.b16 %v1905
      %v2525 = vunpack.c.l.b16 %v1906
      %v2526 = vunpack.c.h.b16 %v1906
      %v2527 = vunpack.c.l.b16 %v1907
      %v2528 = vunpack.c.h.b16 %v1907
      %v2529 = vunpack.c.l.b16 %v1908
      %v2530 = vunpack.c.h.b16 %v1908
      %v2531 = vunpack.c.l.b16 %v1909
      %v2532 = vunpack.c.h.b16 %v1909
      %v2533 = vunpack.c.l.b16 %v1910
      %v2534 = vunpack.c.h.b16 %v1910
      %v2535 = vunpack.c.l.b16 %v1911
      %v2536 = vunpack.c.h.b16 %v1911
      %v2537 = vunpack.c.l.b16 %v1912
      %v2538 = vunpack.c.h.b16 %v1912
      %v2539 = vunpack.c.l.b16 %v1913
      %v2540 = vunpack.c.h.b16 %v1913
      %v2541 = vunpack.c.l.b16 %v1914
      %v2542 = vunpack.c.h.b16 %v1914
      %v2543 = vunpack.c.l.b16 %v1915
      %v2544 = vunpack.c.h.b16 %v1915
      %v2545 = vunpack.c.l.b16 %v1916
      %v2546 = vunpack.c.h.b16 %v1916
      %v2547 = vunpack.c.l.b16 %v1917
      %v2548 = vunpack.c.h.b16 %v1917
      %v2549 = vunpack.c.l.b16 %v1918
      %v2550 = vunpack.c.h.b16 %v1918
      %v2551 = vunpack.c.l.b16 %v1919
      %v2552 = vunpack.c.h.b16 %v1919
      %v2553 = vunpack.c.l.b16 %v1920
      %v2554 = vunpack.c.h.b16 %v1920
      %v2555 = vunpack.c.l.b16 %v1921
      %v2556 = vunpack.c.h.b16 %v1921
      %v2557 = vunpack.c.l.b16 %v1922
      %v2558 = vunpack.c.h.b16 %v1922
      %v2559 = vunpack.c.l.b16 %v1923
      %v2560 = vunpack.c.h.b16 %v1923
      %v2561 = vunpack.c.l.b16 %v1924
      %v2562 = vunpack.c.h.b16 %v1924
      %v2563 = vunpack.c.l.b16 %v1925
      %v2564 = vunpack.c.h.b16 %v1925
      %v2565 = vunpack.c.l.b16 %v1926
      %v2566 = vunpack.c.h.b16 %v1926
      %v2567 = vunpack.c.l.b16 %v1927
      %v2568 = vunpack.c.h.b16 %v1927
      %v2569 = vunpack.c.l.b16 %v1928
      %v2570 = vunpack.c.h.b16 %v1928
      %v2571 = vunpack.c.l.b16 %v1929
      %v2572 = vunpack.c.h.b16 %v1929
      %v2573 = vunpack.c.l.b16 %v1930
      %v2574 = vunpack.c.h.b16 %v1930
      %v2575 = vunpack.c.l.b16 %v1931
      %v2576 = vunpack.c.h.b16 %v1931
      %v2577 = vunpack.c.l.b16 %v1932
      %v2578 = vunpack.c.h.b16 %v1932
      %v2579 = vunpack.c.l.b16 %v1933
      %v2580 = vunpack.c.h.b16 %v1933
      %v2581 = vunpack.c.l.b16 %v1934
      %v2582 = vunpack.c.h.b16 %v1934
      %v2583 = vunpack.c.l.b16 %v1935
      %v2584 = vunpack.c.h.b16 %v1935
      %v2585 = vunpack.c.l.b16 %v1936
      %v2586 = vunpack.c.h.b16 %v1936
      %v2587 = vunpack.c.l.b16 %v1937
      %v2588 = vunpack.c.h.b16 %v1937
      %v2589 = vunpack.c.l.b16 %v1938
      %v2590 = vunpack.c.h.b16 %v1938
      %v2591 = vunpack.c.l.b16 %v1939
      %v2592 = vunpack.c.h.b16 %v1939
      %v2593 = vunpack.c.l.b16 %v1940
      %v2594 = vunpack.c.h.b16 %v1940
      %v2595 = vunpack.c.l.b16 %v1941
      %v2596 = vunpack.c.h.b16 %v1941
      %v2597 = vunpack.c.l.b16 %v1942
      %v2598 = vunpack.c.h.b16 %v1942
      %v2599 = vunpack.c.l.b16 %v1943
      %v2600 = vunpack.c.h.b16 %v1943
      %v2601 = vunpack.c.l.b16 %v1944
      %v2602 = vunpack.c.h.b16 %v1944
      %v2603 = vunpack.c.l.b16 %v1945
      %v2604 = vunpack.c.h.b16 %v1945
      %v2605 = vunpack.c.l.b16 %v1946
      %v2606 = vunpack.c.h.b16 %v1946
      %v2607 = vunpack.c.l.b16 %v1947
      %v2608 = vunpack.c.h.b16 %v1947
      %v2609 = vunpack.c.l.b16 %v1948
      %v2610 = vunpack.c.h.b16 %v1948
      %v2611 = vunpack.c.l.b16 %v1949
      %v2612 = vunpack.c.h.b16 %v1949
      %v2613 = vunpack.c.l.b16 %v1950
      %v2614 = vunpack.c.h.b16 %v1950
      %v2615 = vunpack.c.l.b16 %v1951
      %v2616 = vunpack.c.h.b16 %v1951
      %v2617 = vunpack.c.l.b16 %v1952
      %v2618 = vunpack.c.h.b16 %v1952
      %v2619 = vunpack.c.l.b16 %v1953
      %v2620 = vunpack.c.h.b16 %v1953
      %v2621 = vunpack.c.l.b16 %v1954
      %v2622 = vunpack.c.h.b16 %v1954
      %v2623 = vunpack.c.l.b16 %v1955
      %v2624 = vunpack.c.h.b16 %v1955
      %v2625 = vunpack.c.l.b16 %v1956
      %v2626 = vunpack.c.h.b16 %v1956
      %v2627 = vunpack.c.l.b16 %v1957
      %v2628 = vunpack.c.h.b16 %v1957
      %v2629 = vunpack.c.l.b16 %v1958
      %v2630 = vunpack.c.h.b16 %v1958
      %v2631 = vunpack.c.l.b16 %v1959
      %v2632 = vunpack.c.h.b16 %v1959
      %v2633 = vunpack.c.l.b16 %v1960
      %v2634 = vunpack.c.h.b16 %v1960
      %v2635 = vunpack.c.l.b16 %v1961
      %v2636 = vunpack.c.h.b16 %v1961
      %v2637 = vunpack.c.l.b16 %v1962
      %v2638 = vunpack.c.h.b16 %v1962
      %v2639 = vunpack.c.l.b16 %v1963
      %v2640 = vunpack.c.h.b16 %v1963
      %v2641 = vunpack.c.l.b16 %v1964
      %v2642 = vunpack.c.h.b16 %v1964
      %v2643 = vunpack.c.l.b16 %v1965
      %v2644 = vunpack.c.h.b16 %v1965
      %v2645 = vunpack.c.l.b16 %v1966
      %v2646 = vunpack.c.h.b16 %v1966
      %v2647 = vunpack.c.l.b16 %v1967
      %v2648 = vunpack.c.h.b16 %v1967
      %v2649 = vunpack.c.l.b16 %v1968
      %v2650 = vunpack.c.h.b16 %v1968
      %v2651 = vunpack.c.l.b16 %v1969
      %v2652 = vunpack.c.h.b16 %v1969
      %v2653 = vunpack.c.l.b16 %v1970
      %v2654 = vunpack.c.h.b16 %v1970
      %v2655 = vunpack.c.l.b16 %v1971
      %v2656 = vunpack.c.h.b16 %v1971
      %v2657 = vunpack.c.l.b16 %v1972
      %v2658 = vunpack.c.h.b16 %v1972
      %v2659 = vunpack.c.l.b16 %v1973
      %v2660 = vunpack.c.h.b16 %v1973
      %v2661 = vunpack.c.l.b16 %v1974
      %v2662 = vunpack.c.h.b16 %v1974
      %v2663 = vunpack.c.l.b16 %v1975
      %v2664 = vunpack.c.h.b16 %v1975
      %v2665 = vunpack.c.l.b16 %v1976
      %v2666 = vunpack.c.h.b16 %v1976
      %v2667 = vunpack.c.l.b16 %v1977
      %v2668 = vunpack.c.h.b16 %v1977
      %v2669 = vunpack.c.l.b16 %v1978
      %v2670 = vunpack.c.h.b16 %v1978
      %v2671 = vunpack.c.l.b16 %v1979
      %v2672 = vunpack.c.h.b16 %v1979
      %v2673 = vunpack.c.l.b16 %v1980
      %v2674 = vunpack.c.h.b16 %v1980
      %v2675 = vunpack.c.l.b16 %v1981
      %v2676 = vunpack.c.h.b16 %v1981
      %v2677 = vunpack.c.l.b16 %v1982
      %v2678 = vunpack.c.h.b16 %v1982
      %v2679 = vunpack.c.l.b16 %v1983
      %v2680 = vunpack.c.h.b16 %v1983
      %v2681 = vunpack.c.l.b16 %v1984
      %v2682 = vunpack.c.h.b16 %v1984
      %v2683 = vunpack.c.l.b16 %v1985
      %v2684 = vunpack.c.h.b16 %v1985
      %v2685 = vunpack.c.l.b16 %v1986
      %v2686 = vunpack.c.h.b16 %v1986
      %v2687 = vunpack.c.l.b16 %v1987
      %v2688 = vunpack.c.h.b16 %v1987
      %v2689 = vunpack.c.l.b16 %v1988
      %v2690 = vunpack.c.h.b16 %v1988
      %v2691 = vunpack.c.l.b16 %v1989
      %v2692 = vunpack.c.h.b16 %v1989
      %v2693 = vunpack.c.l.b16 %v1990
      %v2694 = vunpack.c.h.b16 %v1990
      %v2695 = vunpack.c.l.b16 %v1991
      %v2696 = vunpack.c.h.b16 %v1991
      %v2697 = vunpack.c.l.b16 %v1992
      %v2698 = vunpack.c.h.b16 %v1992
      %v2699 = vunpack.c.l.b16 %v1993
      %v2700 = vunpack.c.h.b16 %v1993
      %v2701 = vunpack.c.l.b16 %v1994
      %v2702 = vunpack.c.h.b16 %v1994
      %v2703 = vunpack.c.l.b16 %v1995
      %v2704 = vunpack.c.h.b16 %v1995
      %v2705 = vunpack.c.l.b16 %v1996
      %v2706 = vunpack.c.h.b16 %v1996
      %v2707 = vunpack.c.l.b16 %v1997
      %v2708 = vunpack.c.h.b16 %v1997
      %v2709 = vunpack.c.l.b16 %v1998
      %v2710 = vunpack.c.h.b16 %v1998
      %v2711 = vunpack.c.l.b16 %v1999
      %v2712 = vunpack.c.h.b16 %v1999
      %v2713 = vunpack.c.l.b16 %v2000
      %v2714 = vunpack.c.h.b16 %v2000
      %v2715 = vunpack.c.l.b16 %v2001
      %v2716 = vunpack.c.h.b16 %v2001
      %v2717 = vunpack.c.l.b16 %v2002
      %v2718 = vunpack.c.h.b16 %v2002
      %v2719 = vunpack.c.l.b16 %v2003
      %v2720 = vunpack.c.h.b16 %v2003
      %v2721 = vunpack.c.l.b16 %v2004
      %v2722 = vunpack.c.h.b16 %v2004
      %v2723 = vunpack.c.l.b16 %v2005
      %v2724 = vunpack.c.h.b16 %v2005
      %v2725 = vunpack.c.l.b16 %v2006
      %v2726 = vunpack.c.h.b16 %v2006
      %v2727 = vunpack.c.l.b16 %v2007
      %v2728 = vunpack.c.h.b16 %v2007
      %v2729 = vunpack.c.l.b16 %v2008
      %v2730 = vunpack.c.h.b16 %v2008
      %v2731 = vunpack.c.l.b16 %v2009
      %v2732 = vunpack.c.h.b16 %v2009
      %v2733 = vunpack.c.l.b16 %v2010
      %v2734 = vunpack.c.h.b16 %v2010
      %v2735 = vunpack.c.l.b16 %v2011
      %v2736 = vunpack.c.h.b16 %v2011
      %v2737 = vunpack.c.l.b16 %v2012
      %v2738 = vunpack.c.h.b16 %v2012
      %v2739 = vunpack.c.l.b16 %v2013
      %v2740 = vunpack.c.h.b16 %v2013
      %v2741 = vunpack.c.l.b16 %v2014
      %v2742 = vunpack.c.h.b16 %v2014
      %v2743 = vunpack.c.l.b16 %v2015
      %v2744 = vunpack.c.h.b16 %v2015
      %v2745 = vunpack.c.l.b16 %v2016
      %v2746 = vunpack.c.h.b16 %v2016
      %v2747 = vunpack.c.l.b16 %v2017
      %v2748 = vunpack.c.h.b16 %v2017
      %v2749 = vunpack.c.l.b16 %v2018
      %v2750 = vunpack.c.h.b16 %v2018
      %v2751 = vunpack.c.l.b16 %v2019
      %v2752 = vunpack.c.h.b16 %v2019
      %v2753 = vunpack.c.l.b16 %v2020
      %v2754 = vunpack.c.h.b16 %v2020
      %v2755 = vunpack.c.l.b16 %v2021
      %v2756 = vunpack.c.h.b16 %v2021
      %v2757 = vunpack.c.l.b16 %v2022
      %v2758 = vunpack.c.h.b16 %v2022
      %v2759 = vunpack.c.l.b16 %v2023
      %v2760 = vunpack.c.h.b16 %v2023
      %v2761 = vunpack.c.l.b16 %v2024
      %v2762 = vunpack.c.h.b16 %v2024
      %v2763 = vunpack.c.l.b16 %v2025
      %v2764 = vunpack.c.h.b16 %v2025
      %v2765 = vunpack.c.l.b16 %v2026
      %v2766 = vunpack.c.h.b16 %v2026
      %v2767 = vunpack.c.l.b16 %v2027
      %v2768 = vunpack.c.h.b16 %v2027
      %v2769 = vunpack.c.l.b16 %v2028
      %v2770 = vunpack.c.h.b16 %v2028
      %v2771 = vunpack.c.l.b16 %v2029
      %v2772 = vunpack.c.h.b16 %v2029
      %v2773 = vunpack.c.l.b16 %v2030
      %v2774 = vunpack.c.h.b16 %v2030
      %v2775 = vunpack.c.l.b16 %v2031
      %v2776 = vunpack.c.h.b16 %v2031
      %v2777 = vunpack.c.l.b16 %v2032
      %v2778 = vunpack.c.h.b16 %v2032
      %v2779 = vunpack.c.l.b16 %v2033
      %v2780 = vunpack.c.h.b16 %v2033
      %v2781 = vunpack.c.l.b16 %v2034
      %v2782 = vunpack.c.h.b16 %v2034
      %v2783 = vunpack.c.l.b16 %v2035
      %v2784 = vunpack.c.h.b16 %v2035
      %v2785 = vunpack.c.l.b16 %v2036
      %v2786 = vunpack.c.h.b16 %v2036
      %v2787 = vunpack.c.l.b16 %v2037
      %v2788 = vunpack.c.h.b16 %v2037
      %v2789 = vunpack.c.l.b16 %v2038
      %v2790 = vunpack.c.h.b16 %v2038
      %v2791 = vunpack.c.l.b16 %v2039
      %v2792 = vunpack.c.h.b16 %v2039
      %v2793 = vunpack.c.l.b16 %v2040
      %v2794 = vunpack.c.h.b16 %v2040
      %v2795 = vunpack.c.l.b16 %v2041
      %v2796 = vunpack.c.h.b16 %v2041
      %v2797 = vunpack.c.l.b16 %v2042
      %v2798 = vunpack.c.h.b16 %v2042
      %v2799 = vunpack.c.l.b16 %v2043
      %v2800 = vunpack.c.h.b16 %v2043
      %v2801 = vunpack.c.l.b16 %v2044
      %v2802 = vunpack.c.h.b16 %v2044
      %v2803 = vunpack.c.l.b16 %v2045
      %v2804 = vunpack.c.h.b16 %v2045
      %v2805 = vunpack.c.l.b16 %v2046
      %v2806 = vunpack.c.h.b16 %v2046
      %v2807 = vunpack.c.l.b16 %v2047
      %v2808 = vunpack.c.h.b16 %v2047
      %v2809 = vunpack.c.l.b16 %v2048
      %v2810 = vunpack.c.h.b16 %v2048
      %v2811 = vunpack.c.l.b16 %v2049
      %v2812 = vunpack.c.h.b16 %v2049
      %v2813 = vunpack.c.l.b16 %v2050
      %v2814 = vunpack.c.h.b16 %v2050
      %v2815 = vunpack.c.l.b16 %v2051
      %v2816 = vunpack.c.h.b16 %v2051
      %v2817 = vunpack.c.l.b16 %v2052
      %v2818 = vunpack.c.h.b16 %v2052
      %v2819 = vunpack.c.l.b16 %v2053
      %v2820 = vunpack.c.h.b16 %v2053
      %v2821 = vunpack.c.l.b16 %v2054
      %v2822 = vunpack.c.h.b16 %v2054
      %v2823 = vunpack.c.l.b16 %v2055
      %v2824 = vunpack.c.h.b16 %v2055
      %v2825 = vunpack.c.l.b16 %v2056
      %v2826 = vunpack.c.h.b16 %v2056
      %v2827 = vunpack.c.l.b16 %v2057
      %v2828 = vunpack.c.h.b16 %v2057
      %v2829 = vunpack.c.l.b16 %v2058
      %v2830 = vunpack.c.h.b16 %v2058
      %v2831 = vunpack.c.l.b16 %v2059
      %v2832 = vunpack.c.h.b16 %v2059
      %v2833 = vunpack.c.l.b16 %v2060
      %v2834 = vunpack.c.h.b16 %v2060
      %v2835 = vunpack.c.l.b16 %v2061
      %v2836 = vunpack.c.h.b16 %v2061
      %v2837 = vunpack.c.l.b16 %v2062
      %v2838 = vunpack.c.h.b16 %v2062
      %v2839 = vunpack.c.l.b16 %v2063
      %v2840 = vunpack.c.h.b16 %v2063
      %v2841 = vunpack.c.l.b16 %v2064
      %v2842 = vunpack.c.h.b16 %v2064
      %v2843 = vunpack.c.l.b16 %v2065
      %v2844 = vunpack.c.h.b16 %v2065
      %v2845 = vunpack.c.l.b16 %v2066
      %v2846 = vunpack.c.h.b16 %v2066
      %v2847 = vunpack.c.l.b16 %v2067
      %v2848 = vunpack.c.h.b16 %v2067
      %v2849 = vunpack.c.l.b16 %v2068
      %v2850 = vunpack.c.h.b16 %v2068
      %v2851 = vunpack.c.l.b16 %v2069
      %v2852 = vunpack.c.h.b16 %v2069
      %v2853 = vunpack.c.l.b16 %v2070
      %v2854 = vunpack.c.h.b16 %v2070
      %v2855 = vunpack.c.l.b16 %v2071
      %v2856 = vunpack.c.h.b16 %v2071
      %v2857 = vunpack.c.l.b16 %v2072
      %v2858 = vunpack.c.h.b16 %v2072
      %v2859 = vunpack.c.l.b16 %v2073
      %v2860 = vunpack.c.h.b16 %v2073
      %v2861 = vunpack.c.l.b16 %v2074
      %v2862 = vunpack.c.h.b16 %v2074
      %v2863 = vunpack.c.l.b16 %v2075
      %v2864 = vunpack.c.h.b16 %v2075
      %v2865 = vunpack.c.l.b16 %v2076
      %v2866 = vunpack.c.h.b16 %v2076
      %v2867 = vunpack.c.l.b16 %v2077
      %v2868 = vunpack.c.h.b16 %v2077
      %v2869 = vunpack.c.l.b16 %v2078
      %v2870 = vunpack.c.h.b16 %v2078
      %v2871 = vunpack.c.l.b16 %v2079
      %v2872 = vunpack.c.h.b16 %v2079
      %v2873 = vunpack.c.l.b16 %v2080
      %v2874 = vunpack.c.h.b16 %v2080
      %v2875 = vunpack.c.l.b16 %v2081
      %v2876 = vunpack.c.h.b16 %v2081
      %v2877 = vunpack.c.l.b16 %v2082
      %v2878 = vunpack.c.h.b16 %v2082
      %v2879 = vunpack.c.l.b16 %v2083
      %v2880 = vunpack.c.h.b16 %v2083
      %v2881 = vunpack.c.l.b16 %v2084
      %v2882 = vunpack.c.h.b16 %v2084
      %v2883 = vunpack.c.l.b16 %v2085
      %v2884 = vunpack.c.h.b16 %v2085
      %v2885 = vunpack.c.l.b16 %v2086
      %v2886 = vunpack.c.h.b16 %v2086
      %v2887 = vunpack.c.l.b16 %v2087
      %v2888 = vunpack.c.h.b16 %v2087
      %v2889 = vunpack.c.l.b16 %v2088
      %v2890 = vunpack.c.h.b16 %v2088
      %v2891 = vunpack.c.l.b16 %v2089
      %v2892 = vunpack.c.h.b16 %v2089
      %v2893 = vunpack.c.l.b16 %v2090
      %v2894 = vunpack.c.h.b16 %v2090
      %v2895 = vunpack.c.l.b16 %v2091
      %v2896 = vunpack.c.h.b16 %v2091
      %v2897 = vunpack.c.l.b16 %v2092
      %v2898 = vunpack.c.h.b16 %v2092
      %v2899 = vunpack.c.l.b16 %v2093
      %v2900 = vunpack.c.h.b16 %v2093
      %v2901 = vunpack.c.l.b16 %v2094
      %v2902 = vunpack.c.h.b16 %v2094
      %v2903 = vunpack.c.l.b16 %v2095
      %v2904 = vunpack.c.h.b16 %v2095
      %v2905 = vunpack.c.l.b16 %v2096
      %v2906 = vunpack.c.h.b16 %v2096
      %v2907 = vunpack.c.l.b16 %v2097
      %v2908 = vunpack.c.h.b16 %v2097
      %v2909 = vunpack.c.l.b16 %v2098
      %v2910 = vunpack.c.h.b16 %v2098
      %v2911 = vunpack.c.l.b16 %v2099
      %v2912 = vunpack.c.h.b16 %v2099
      %v2913 = vunpack.c.l.b16 %v2100
      %v2914 = vunpack.c.h.b16 %v2100
      %v2915 = vunpack.c.l.b16 %v2101
      %v2916 = vunpack.c.h.b16 %v2101
      %v2917 = vunpack.c.l.b16 %v2102
      %v2918 = vunpack.c.h.b16 %v2102
      %v2919 = vunpack.c.l.b16 %v2103
      %v2920 = vunpack.c.h.b16 %v2103
      %v2921 = vunpack.c.l.b16 %v2104
      %v2922 = vunpack.c.h.b16 %v2104
      %v2923 = vunpack.c.l.b16 %v2105
      %v2924 = vunpack.c.h.b16 %v2105
      %v2925 = vunpack.c.l.b16 %v2106
      %v2926 = vunpack.c.h.b16 %v2106
      %v2927 = vunpack.c.l.b16 %v2107
      %v2928 = vunpack.c.h.b16 %v2107
      %v2929 = vunpack.c.l.b16 %v2108
      %v2930 = vunpack.c.h.b16 %v2108
      %v2931 = vunpack.c.l.b16 %v2109
      %v2932 = vunpack.c.h.b16 %v2109
      %v2933 = vunpack.c.l.b16 %v2110
      %v2934 = vunpack.c.h.b16 %v2110
      %v2935 = vunpack.c.l.b16 %v2111
      %v2936 = vunpack.c.h.b16 %v2111
      %v2937 = vunpack.c.l.b16 %v2112
      %v2938 = vunpack.c.h.b16 %v2112
      %v2939 = vunpack.c.l.b16 %v2113
      %v2940 = vunpack.c.h.b16 %v2113
      %v2941 = vunpack.c.l.b16 %v2114
      %v2942 = vunpack.c.h.b16 %v2114
      %v2943 = vunpack.c.l.b16 %v2115
      %v2944 = vunpack.c.h.b16 %v2115
      %v2945 = vunpack.c.l.b16 %v2116
      %v2946 = vunpack.c.h.b16 %v2116
      %v2947 = vunpack.c.l.b16 %v2117
      %v2948 = vunpack.c.h.b16 %v2117
      %v2949 = vunpack.c.l.b16 %v2118
      %v2950 = vunpack.c.h.b16 %v2118
      %v2951 = vunpack.c.l.b16 %v2119
      %v2952 = vunpack.c.h.b16 %v2119
      %v2953 = vunpack.c.l.b16 %v2120
      %v2954 = vunpack.c.h.b16 %v2120
      %v2955 = vunpack.c.l.b16 %v2121
      %v2956 = vunpack.c.h.b16 %v2121
      %v2957 = vunpack.c.l.b16 %v2122
      %v2958 = vunpack.c.h.b16 %v2122
      %v2959 = vunpack.c.l.b16 %v2123
      %v2960 = vunpack.c.h.b16 %v2123
      %v2961 = vunpack.c.l.b16 %v2124
      %v2962 = vunpack.c.h.b16 %v2124
      %v2963 = vunpack.c.l.b16 %v2125
      %v2964 = vunpack.c.h.b16 %v2125
      %v2965 = vunpack.c.l.b16 %v2126
      %v2966 = vunpack.c.h.b16 %v2126
      %v2967 = vunpack.c.l.b16 %v2127
      %v2968 = vunpack.c.h.b16 %v2127
      %v2969 = vunpack.c.l.b16 %v2128
      %v2970 = vunpack.c.h.b16 %v2128
      %v2971 = vunpack.c.l.b16 %v2129
      %v2972 = vunpack.c.h.b16 %v2129
      %v2973 = vunpack.c.l.b16 %v2130
      %v2974 = vunpack.c.h.b16 %v2130
      %v2975 = vunpack.c.l.b16 %v2131
      %v2976 = vunpack.c.h.b16 %v2131
      %v2977 = vunpack.c.l.b16 %v2132
      %v2978 = vunpack.c.h.b16 %v2132
      %v2979 = vunpack.c.l.b16 %v2133
      %v2980 = vunpack.c.h.b16 %v2133
      %v2981 = vunpack.c.l.b16 %v2134
      %v2982 = vunpack.c.h.b16 %v2134
      %v2983 = vunpack.c.l.b16 %v2135
      %v2984 = vunpack.c.h.b16 %v2135
      %v2985 = vunpack.c.l.b16 %v2136
      %v2986 = vunpack.c.h.b16 %v2136
      %v2987 = vunpack.c.l.b16 %v2137
      %v2988 = vunpack.c.h.b16 %v2137
      %v2989 = vunpack.c.l.b16 %v2138
      %v2990 = vunpack.c.h.b16 %v2138
      %v2991 = vunpack.c.l.b16 %v2139
      %v2992 = vunpack.c.h.b16 %v2139
      %v2993 = vunpack.c.l.b16 %v2140
      %v2994 = vunpack.c.h.b16 %v2140
      %v2995 = vunpack.c.l.b16 %v2141
      %v2996 = vunpack.c.h.b16 %v2141
      %v2997 = vunpack.c.l.b16 %v2142
      %v2998 = vunpack.c.h.b16 %v2142
      %v2999 = vunpack.c.l.b16 %v2143
      %v3000 = vunpack.c.h.b16 %v2143
      %v3001 = vunpack.c.l.b16 %v2144
      %v3002 = vunpack.c.h.b16 %v2144
      %v3003 = vunpack.c.l.b16 %v2145
      %v3004 = vunpack.c.h.b16 %v2145
      %v3005 = vunpack.c.l.b16 %v2146
      %v3006 = vunpack.c.h.b16 %v2146
      %v3007 = vunpack.c.l.b16 %v2147
      %v3008 = vunpack.c.h.b16 %v2147
      %v3009 = vunpack.c.l.b16 %v2148
      %v3010 = vunpack.c.h.b16 %v2148
      %v3011 = vunpack.c.l.b16 %v2149
      %v3012 = vunpack.c.h.b16 %v2149
      %v3013 = vunpack.c.l.b16 %v2150
      %v3014 = vunpack.c.h.b16 %v2150
      %v3015 = vunpack.c.l.b16 %v2151
      %v3016 = vunpack.c.h.b16 %v2151
      %v3017 = vpack.c.b16 %v2445, %v2441
      %v3018 = vpack.c.b16 %v2446, %v2442
      %v3019 = vpack.c.b16 %v2447, %v2443
      %v3020 = vpack.c.b16 %v2448, %v2444
      %v3021 = vpack.c.b16 %v2453, %v2449
      %v3022 = vpack.c.b16 %v2454, %v2450
      %v3023 = vpack.c.b16 %v2455, %v2451
      %v3024 = vpack.c.b16 %v2456, %v2452
      %v3025 = vpack.c.b16 %v2461, %v2457
      %v3026 = vpack.c.b16 %v2462, %v2458
      %v3027 = vpack.c.b16 %v2463, %v2459
      %v3028 = vpack.c.b16 %v2464, %v2460
      %v3029 = vpack.c.b16 %v2469, %v2465
      %v3030 = vpack.c.b16 %v2470, %v2466
      %v3031 = vpack.c.b16 %v2471, %v2467
      %v3032 = vpack.c.b16 %v2472, %v2468
      %v3033 = vpack.c.b16 %v2477, %v2473
      %v3034 = vpack.c.b16 %v2478, %v2474
      %v3035 = vpack.c.b16 %v2479, %v2475
      %v3036 = vpack.c.b16 %v2480, %v2476
      %v3037 = vpack.c.b16 %v2485, %v2481
      %v3038 = vpack.c.b16 %v2486, %v2482
      %v3039 = vpack.c.b16 %v2487, %v2483
      %v3040 = vpack.c.b16 %v2488, %v2484
      %v3041 = vpack.c.b16 %v2493, %v2489
      %v3042 = vpack.c.b16 %v2494, %v2490
      %v3043 = vpack.c.b16 %v2495, %v2491
      %v3044 = vpack.c.b16 %v2496, %v2492
      %v3045 = vpack.c.b16 %v2501, %v2497
      %v3046 = vpack.c.b16 %v2502, %v2498
      %v3047 = vpack.c.b16 %v2503, %v2499
      %v3048 = vpack.c.b16 %v2504, %v2500
      %v3049 = vpack.c.b16 %v2509, %v2505
      %v3050 = vpack.c.b16 %v2510, %v2506
      %v3051 = vpack.c.b16 %v2511, %v2507
      %v3052 = vpack.c.b16 %v2512, %v2508
      %v3053 = vpack.c.b16 %v2517, %v2513
      %v3054 = vpack.c.b16 %v2518, %v2514
      %v3055 = vpack.c.b16 %v2519, %v2515
      %v3056 = vpack.c.b16 %v2520, %v2516
      %v3057 = vpack.c.b16 %v2525, %v2521
      %v3058 = vpack.c.b16 %v2526, %v2522
      %v3059 = vpack.c.b16 %v2527, %v2523
      %v3060 = vpack.c.b16 %v2528, %v2524
      %v3061 = vpack.c.b16 %v2533, %v2529
      %v3062 = vpack.c.b16 %v2534, %v2530
      %v3063 = vpack.c.b16 %v2535, %v2531
      %v3064 = vpack.c.b16 %v2536, %v2532
      %v3065 = vpack.c.b16 %v2541, %v2537
      %v3066 = vpack.c.b16 %v2542, %v2538
      %v3067 = vpack.c.b16 %v2543, %v2539
      %v3068 = vpack.c.b16 %v2544, %v2540
      %v3069 = vpack.c.b16 %v2549, %v2545
      %v3070 = vpack.c.b16 %v2550, %v2546
      %v3071 = vpack.c.b16 %v2551, %v2547
      %v3072 = vpack.c.b16 %v2552, %v2548
      %v3073 = vpack.c.b16 %v2557, %v2553
      %v3074 = vpack.c.b16 %v2558, %v2554
      %v3075 = vpack.c.b16 %v2559, %v2555
      %v3076 = vpack.c.b16 %v2560, %v2556
      %v3077 = vpack.c.b16 %v2565, %v2561
      %v3078 = vpack.c.b16 %v2566, %v2562
      %v3079 = vpack.c.b16 %v2567, %v2563
      %v3080 = vpack.c.b16 %v2568, %v2564
      %v3081 = vpack.c.b16 %v2573, %v2569
      %v3082 = vpack.c.b16 %v2574, %v2570
      %v3083 = vpack.c.b16 %v2575, %v2571
      %v3084 = vpack.c.b16 %v2576, %v2572
      %v3085 = vpack.c.b16 %v2581, %v2577
      %v3086 = vpack.c.b16 %v2582, %v2578
      %v3087 = vpack.c.b16 %v2583, %v2579
      %v3088 = vpack.c.b16 %v2584, %v2580
      %v3089 = vpack.c.b16 %v2589, %v2585
      %v3090 = vpack.c.b16 %v2590, %v2586
      %v3091 = vpack.c.b16 %v2591, %v2587
      %v3092 = vpack.c.b16 %v2592, %v2588
      %v3093 = vpack.c.b16 %v2597, %v2593
      %v3094 = vpack.c.b16 %v2598, %v2594
      %v3095 = vpack.c.b16 %v2599, %v2595
      %v3096 = vpack.c.b16 %v2600, %v2596
      %v3097 = vpack.c.b16 %v2605, %v2601
      %v3098 = vpack.c.b16 %v2606, %v2602
      %v3099 = vpack.c.b16 %v2607, %v2603
      %v3100 = vpack.c.b16 %v2608, %v2604
      %v3101 = vpack.c.b16 %v2613, %v2609
      %v3102 = vpack.c.b16 %v2614, %v2610
      %v3103 = vpack.c.b16 %v2615, %v2611
      %v3104 = vpack.c.b16 %v2616, %v2612
      %v3105 = vpack.c.b16 %v2621, %v2617
      %v3106 = vpack.c.b16 %v2622, %v2618
      %v3107 = vpack.c.b16 %v2623, %v2619
      %v3108 = vpack.c.b16 %v2624, %v2620
      %v3109 = vpack.c.b16 %v2629, %v2625
      %v3110 = vpack.c.b16 %v2630, %v2626
      %v3111 = vpack.c.b16 %v2631, %v2627
      %v3112 = vpack.c.b16 %v2632, %v2628
      %v3113 = vpack.c.b16 %v2637, %v2633
      %v3114 = vpack.c.b16 %v2638, %v2634
      %v3115 = vpack.c.b16 %v2639, %v2635
      %v3116 = vpack.c.b16 %v2640, %v2636
      %v3117 = vpack.c.b16 %v2645, %v2641
      %v3118 = vpack.c.b16 %v2646, %v2642
      %v3119 = vpack.c.b16 %v2647, %v2643
      %v3120 = vpack.c.b16 %v2648, %v2644
      %v3121 = vpack.c.b16 %v2653, %v2649
      %v3122 = vpack.c.b16 %v2654, %v2650
      %v3123 = vpack.c.b16 %v2655, %v2651
      %v3124 = vpack.c.b16 %v2656, %v2652
      %v3125 = vpack.c.b16 %v2661, %v2657
      %v3126 = vpack.c.b16 %v2662, %v2658
      %v3127 = vpack.c.b16 %v2663, %v2659
      %v3128 = vpack.c.b16 %v2664, %v2660
      %v3129 = vpack.c.b16 %v2669, %v2665
      %v3130 = vpack.c.b16 %v2670, %v2666
      %v3131 = vpack.c.b16 %v2671, %v2667
      %v3132 = vpack.c.b16 %v2672, %v2668
      %v3133 = vpack.c.b16 %v2677, %v2673
      %v3134 = vpack.c.b16 %v2678, %v2674
      %v3135 = vpack.c.b16 %v2679, %v2675
      %v3136 = vpack.c.b16 %v2680, %v2676
      %v3137 = vpack.c.b16 %v2685, %v2681
      %v3138 = vpack.c.b16 %v2686, %v2682
      %v3139 = vpack.c.b16 %v2687, %v2683
      %v3140 = vpack.c.b16 %v2688, %v2684
      %v3141 = vpack.c.b16 %v2693, %v2689
      %v3142 = vpack.c.b16 %v2694, %v2690
      %v3143 = vpack.c.b16 %v2695, %v2691
      %v3144 = vpack.c.b16 %v2696, %v2692
      %v3145 = vpack.c.b16 %v2701, %v2697
      %v3146 = vpack.c.b16 %v2702, %v2698
      %v3147 = vpack.c.b16 %v2703, %v2699
      %v3148 = vpack.c.b16 %v2704, %v2700
      %v3149 = vpack.c.b16 %v2709, %v2705
      %v3150 = vpack.c.b16 %v2710, %v2706
      %v3151 = vpack.c.b16 %v2711, %v2707
      %v3152 = vpack.c.b16 %v2712, %v2708
      %v3153 = vpack.c.b16 %v2717, %v2713
      %v3154 = vpack.c.b16 %v2718, %v2714
      %v3155 = vpack.c.b16 %v2719, %v2715
      %v3156 = vpack.c.b16 %v2720, %v2716
      %v3157 = vpack.c.b16 %v2725, %v2721
      %v3158 = vpack.c.b16 %v2726, %v2722
      %v3159 = vpack.c.b16 %v2727, %v2723
      %v3160 = vpack.c.b16 %v2728, %v2724
      %v3161 = vpack.c.b16 %v2733, %v2729
      %v3162 = vpack.c.b16 %v2734, %v2730
      %v3163 = vpack.c.b16 %v2735, %v2731
      %v3164 = vpack.c.b16 %v2736, %v2732
      %v3165 = vpack.c.b16 %v2741, %v2737
      %v3166 = vpack.c.b16 %v2742, %v2738
      %v3167 = vpack.c.b16 %v2743, %v2739
      %v3168 = vpack.c.b16 %v2744, %v2740
      %v3169 = vpack.c.b16 %v2749, %v2745
      %v3170 = vpack.c.b16 %v2750, %v2746
      %v3171 = vpack.c.b16 %v2751, %v2747
      %v3172 = vpack.c.b16 %v2752, %v2748
      %v3173 = vpack.c.b16 %v2757, %v2753
      %v3174 = vpack.c.b16 %v2758, %v2754
      %v3175 = vpack.c.b16 %v2759, %v2755
      %v3176 = vpack.c.b16 %v2760, %v2756
      %v3177 = vpack.c.b16 %v2765, %v2761
      %v3178 = vpack.c.b16 %v2766, %v2762
      %v3179 = vpack.c.b16 %v2767, %v2763
      %v3180 = vpack.c.b16 %v2768, %v2764
      %v3181 = vpack.c.b16 %v2773, %v2769
      %v3182 = vpack.c.b16 %v2774, %v2770
      %v3183 = vpack.c.b16 %v2775, %v2771
      %v3184 = vpack.c.b16 %v2776, %v2772
      %v3185 = vpack.c.b16 %v2781, %v2777
      %v3186 = vpack.c.b16 %v2782, %v2778
      %v3187 = vpack.c.b16 %v2783, %v2779
      %v3188 = vpack.c.b16 %v2784, %v2780
      %v3189 = vpack.c.b16 %v2789, %v2785
      %v3190 = vpack.c.b16 %v2790, %v2786
      %v3191 = vpack.c.b16 %v2791, %v2787
      %v3192 = vpack.c.b16 %v2792, %v2788
      %v3193 = vpack.c.b16 %v2797, %v2793
      %v3194 = vpack.c.b16 %v2798, %v2794
      %v3195 = vpack.c.b16 %v2799, %v2795
      %v3196 = vpack.c.b16 %v2800, %v2796
      %v3197 = vpack.c.b16 %v2805, %v2801
      %v3198 = vpack.c.b16 %v2806, %v2802
      %v3199 = vpack.c.b16 %v2807, %v2803
      %v3200 = vpack.c.b16 %v2808, %v2804
      %v3201 = vpack.c.b16 %v2813, %v2809
      %v3202 = vpack.c.b16 %v2814, %v2810
      %v3203 = vpack.c.b16 %v2815, %v2811
      %v3204 = vpack.c.b16 %v2816, %v2812
      %v3205 = vpack.c.b16 %v2821, %v2817
      %v3206 = vpack.c.b16 %v2822, %v2818
      %v3207 = vpack.c.b16 %v2823, %v2819
      %v3208 = vpack.c.b16 %v2824, %v2820
      %v3209 = vpack.c.b16 %v2829, %v2825
      %v3210 = vpack.c.b16 %v2830, %v2826
      %v3211 = vpack.c.b16 %v2831, %v2827
      %v3212 = vpack.c.b16 %v2832, %v2828
      %v3213 = vpack.c.b16 %v2837, %v2833
      %v3214 = vpack.c.b16 %v2838, %v2834
      %v3215 = vpack.c.b16 %v2839, %v2835
      %v3216 = vpack.c.b16 %v2840, %v2836
      %v3217 = vpack.c.b16 %v2845, %v2841
      %v3218 = vpack.c.b16 %v2846, %v2842
      %v3219 = vpack.c.b16 %v2847, %v2843
      %v3220 = vpack.c.b16 %v2848, %v2844
      %v3221 = vpack.c.b16 %v2853, %v2849
      %v3222 = vpack.c.b16 %v2854, %v2850
      %v3223 = vpack.c.b16 %v2855, %v2851
      %v3224 = vpack.c.b16 %v2856, %v2852
      %v3225 = vpack.c.b16 %v2861, %v2857
      %v3226 = vpack.c.b16 %v2862, %v2858
      %v3227 = vpack.c.b16 %v2863, %v2859
      %v3228 = vpack.c.b16 %v2864, %v2860
      %v3229 = vpack.c.b16 %v2869, %v2865
      %v3230 = vpack.c.b16 %v2870, %v2866
      %v3231 = vpack.c.b16 %v2871, %v2867
      %v3232 = vpack.c.b16 %v2872, %v2868
      %v3233 = vpack.c.b16 %v2877, %v2873
      %v3234 = vpack.c.b16 %v2878, %v2874
      %v3235 = vpack.c.b16 %v2879, %v2875
      %v3236 = vpack.c.b16 %v2880, %v2876
      %v3237 = vpack.c.b16 %v2885, %v2881
      %v3238 = vpack.c.b16 %v2886, %v2882
      %v3239 = vpack.c.b16 %v2887, %v2883
      %v3240 = vpack.c.b16 %v2888, %v2884
      %v3241 = vpack.c.b16 %v2893, %v2889
      %v3242 = vpack.c.b16 %v2894, %v2890
      %v3243 = vpack.c.b16 %v2895, %v2891
      %v3244 = vpack.c.b16 %v2896, %v2892
      %v3245 = vpack.c.b16 %v2901, %v2897
      %v3246 = vpack.c.b16 %v2902, %v2898
      %v3247 = vpack.c.b16 %v2903, %v2899
      %v3248 = vpack.c.b16 %v2904, %v2900
      %v3249 = vpack.c.b16 %v2909, %v2905
      %v3250 = vpack.c.b16 %v2910, %v2906
      %v3251 = vpack.c.b16 %v2911, %v2907
      %v3252 = vpack.c.b16 %v2912, %v2908
      %v3253 = vpack.c.b16 %v2917, %v2913
      %v3254 = vpack.c.b16 %v2918, %v2914
      %v3255 = vpack.c.b16 %v2919, %v2915
      %v3256 = vpack.c.b16 %v2920, %v2916
      %v3257 = vpack.c.b16 %v2925, %v2921
      %v3258 = vpack.c.b16 %v2926, %v2922
      %v3259 = vpack.c.b16 %v2927, %v2923
      %v3260 = vpack.c.b16 %v2928, %v2924
      %v3261 = vpack.c.b16 %v2933, %v2929
      %v3262 = vpack.c.b16 %v2934, %v2930
      %v3263 = vpack.c.b16 %v2935, %v2931
      %v3264 = vpack.c.b16 %v2936, %v2932
      %v3265 = vpack.c.b16 %v2941, %v2937
      %v3266 = vpack.c.b16 %v2942, %v2938
      %v3267 = vpack.c.b16 %v2943, %v2939
      %v3268 = vpack.c.b16 %v2944, %v2940
      %v3269 = vpack.c.b16 %v2949, %v2945
      %v3270 = vpack.c.b16 %v2950, %v2946
      %v3271 = vpack.c.b16 %v2951, %v2947
      %v3272 = vpack.c.b16 %v2952, %v2948
      %v3273 = vpack.c.b16 %v2957, %v2953
      %v3274 = vpack.c.b16 %v2958, %v2954
      %v3275 = vpack.c.b16 %v2959, %v2955
      %v3276 = vpack.c.b16 %v2960, %v2956
      %v3277 = vpack.c.b16 %v2965, %v2961
      %v3278 = vpack.c.b16 %v2966, %v2962
      %v3279 = vpack.c.b16 %v2967, %v2963
      %v3280 = vpack.c.b16 %v2968, %v2964
      %v3281 = vpack.c.b16 %v2973, %v2969
      %v3282 = vpack.c.b16 %v2974, %v2970
      %v3283 = vpack.c.b16 %v2975, %v2971
      %v3284 = vpack.c.b16 %v2976, %v2972
      %v3285 = vpack.c.b16 %v2981, %v2977
      %v3286 = vpack.c.b16 %v2982, %v2978
      %v3287 = vpack.c.b16 %v2983, %v2979
      %v3288 = vpack.c.b16 %v2984, %v2980
      %v3289 = vpack.c.b16 %v2989, %v2985
      %v3290 = vpack.c.b16 %v2990, %v2986
      %v3291 = vpack.c.b16 %v2991, %v2987
      %v3292 = vpack.c.b16 %v2992, %v2988
      %v3293 = vpack.c.b16 %v2997, %v2993
      %v3294 = vpack.c.b16 %v2998, %v2994
      %v3295 = vpack.c.b16 %v2999, %v2995
      %v3296 = vpack.c.b16 %v3000, %v2996
      %v3297 = vpack.c.b16 %v3005, %v3001
      %v3298 = vpack.c.b16 %v3006, %v3002
      %v3299 = vpack.c.b16 %v3007, %v3003
      %v3300 = vpack.c.b16 %v3008, %v3004
      %v3301 = vpack.c.b16 %v3013, %v3009
      %v3302 = vpack.c.b16 %v3014, %v3010
      %v3303 = vpack.c.b16 %v3015, %v3011
      %v3304 = vpack.c.b16 %v3016, %v3012
      %v3594 = vlaneseq
      %v3595 = vshrl.u32 %v3594, 7
      %v3596 = vsub.s32 0, %v3595
      %v3597 = vrot.slane %v2152, %v3596
      %v3598 = vlaneseq
      %v3599 = vshrl.u32 %v3598, 7
      %v3600 = vsub.s32 1, %v3599
      %v3601 = vrot.slane %v2152, %v3600
      %v3602 = vlaneseq
      %v3603 = vshrl.u32 %v3602, 7
      %v3604 = vsub.s32 2, %v3603
      %v3605 = vrot.slane %v2152, %v3604
      %v3606 = vlaneseq
      %v3607 = vshrl.u32 %v3606, 7
      %v3608 = vsub.s32 3, %v3607
      %v3609 = vrot.slane %v2152, %v3608
      %3614 = vmatprep.subr.bf16.mxu0 %v3046
      %3615 = vmatpush1.bf16.msra.mxu0 %v3045
      %3616 = vmatprep.subr.bf16.mxu0 %v3042
      %3617 = vmatpush1.bf16.msra.mxu0 %v3041
      %3618 = vmatprep.subr.bf16.mxu0 %v3038
      %3619 = vmatpush1.bf16.msra.mxu0 %v3037
      %3620 = vmatprep.subr.bf16.mxu0 %v3034
      %3621 = vmatpush1.bf16.msra.mxu0 %v3033
      %3622 = vmatprep.subr.bf16.mxu0 %v3030
      %3623 = vmatpush1.bf16.msra.mxu0 %v3029
      %3624 = vmatprep.subr.bf16.mxu0 %v3026
      %3625 = vmatpush1.bf16.msra.mxu0 %v3025
      %3626 = vmatprep.subr.bf16.mxu0 %v3022
      %3627 = vmatpush1.bf16.msra.mxu0 %v3021
      %3628 = vmatprep.subr.bf16.mxu0 %v3018
      %3629 = vmatpush1.bf16.msra.mxu0 %v3017
      %3630 = vmatprep.subr.bf16.mxu0 %v3078
      %3631 = vmatpush2.bf16.msra.mxu0 %v3077
      %3632 = vmatprep.subr.bf16.mxu0 %v3074
      %3633 = vmatpush2.bf16.msra.mxu0 %v3073
      %3634 = vmatprep.subr.bf16.mxu0 %v3070
      %3635 = vmatpush2.bf16.msra.mxu0 %v3069
      %3636 = vmatprep.subr.bf16.mxu0 %v3066
      %3637 = vmatpush2.bf16.msra.mxu0 %v3065
      %3638 = vmatprep.subr.bf16.mxu0 %v3062
      %3639 = vmatpush2.bf16.msra.mxu0 %v3061
      %3640 = vmatprep.subr.bf16.mxu0 %v3058
      %3641 = vmatpush2.bf16.msra.mxu0 %v3057
      %3642 = vmatprep.subr.bf16.mxu0 %v3054
      %3643 = vmatpush2.bf16.msra.mxu0 %v3053
      %3644 = vmatprep.subr.bf16.mxu0 %v3050
      %3645 = vmatpush2.bf16.msra.mxu0 %v3049
      %3646 = vmatprep.mubr.bf16.mxu0 %v1856
      %3647 = vmatmul.mubr.bf16.gmra.mxu0 %v1855
      %v3648 = vpop.f32.mrf.mxu0
      %v3649 = vadd.f32 %v3597, %v3648
      %v3650 = vpop.f32.mrf.mxu0
      %v3651 = vadd.f32 %v3601, %v3650
      %v3652 = vpop.f32.mrf.mxu0
      %v3653 = vpop.f32.mrf.mxu0
      %3654 = vdwg.mxu0
      %3655 = vmatprep.subr.bf16.mxu0 %v3110
      %3656 = vmatpush1.bf16.msra.mxu0 %v3109
      %3657 = vmatprep.subr.bf16.mxu0 %v3106
      %3658 = vmatpush1.bf16.msra.mxu0 %v3105
      %3659 = vmatprep.subr.bf16.mxu0 %v3102
      %3660 = vmatpush1.bf16.msra.mxu0 %v3101
      %3661 = vmatprep.subr.bf16.mxu0 %v3098
      %3662 = vmatpush1.bf16.msra.mxu0 %v3097
      %3663 = vmatprep.subr.bf16.mxu0 %v3094
      %3664 = vmatpush1.bf16.msra.mxu0 %v3093
      %3665 = vmatprep.subr.bf16.mxu0 %v3090
      %3666 = vmatpush1.bf16.msra.mxu0 %v3089
      %3667 = vmatprep.subr.bf16.mxu0 %v3086
      %3668 = vmatpush1.bf16.msra.mxu0 %v3085
      %3669 = vmatprep.subr.bf16.mxu0 %v3082
      %3670 = vmatpush1.bf16.msra.mxu0 %v3081
      %3671 = vmatprep.subr.bf16.mxu0 %v3142
      %3672 = vmatpush2.bf16.msra.mxu0 %v3141
      %3673 = vmatprep.subr.bf16.mxu0 %v3138
      %3674 = vmatpush2.bf16.msra.mxu0 %v3137
      %3675 = vmatprep.subr.bf16.mxu0 %v3134
      %3676 = vmatpush2.bf16.msra.mxu0 %v3133
      %3677 = vmatprep.subr.bf16.mxu0 %v3130
      %3678 = vmatpush2.bf16.msra.mxu0 %v3129
      %3679 = vmatprep.subr.bf16.mxu0 %v3126
      %3680 = vmatpush2.bf16.msra.mxu0 %v3125
      %3681 = vmatprep.subr.bf16.mxu0 %v3122
      %3682 = vmatpush2.bf16.msra.mxu0 %v3121
      %3683 = vmatprep.subr.bf16.mxu0 %v3118
      %3684 = vmatpush2.bf16.msra.mxu0 %v3117
      %3685 = vmatprep.subr.bf16.mxu0 %v3114
      %3686 = vmatpush2.bf16.msra.mxu0 %v3113
      %3687 = vmatprep.mubr.bf16.mxu0 %v1858
      %3688 = vmatmul.mubr.bf16.gmra.mxu0 %v1857
      %v3689 = vpop.f32.mrf.mxu0
      %v3690 = vadd.f32 %v3649, %v3689
      %v3691 = vpop.f32.mrf.mxu0
      %v3692 = vadd.f32 %v3651, %v3691
      %v3693 = vpop.f32.mrf.mxu0
      %v3694 = vpop.f32.mrf.mxu0
      %3695 = vdwg.mxu0
      %3696 = vmatprep.subr.bf16.mxu0 %v3174
      %3697 = vmatpush1.bf16.msra.mxu0 %v3173
      %3698 = vmatprep.subr.bf16.mxu0 %v3170
      %3699 = vmatpush1.bf16.msra.mxu0 %v3169
      %3700 = vmatprep.subr.bf16.mxu0 %v3166
      %3701 = vmatpush1.bf16.msra.mxu0 %v3165
      %3702 = vmatprep.subr.bf16.mxu0 %v3162
      %3703 = vmatpush1.bf16.msra.mxu0 %v3161
      %3704 = vmatprep.subr.bf16.mxu0 %v3158
      %3705 = vmatpush1.bf16.msra.mxu0 %v3157
      %3706 = vmatprep.subr.bf16.mxu0 %v3154
      %3707 = vmatpush1.bf16.msra.mxu0 %v3153
      %3708 = vmatprep.subr.bf16.mxu0 %v3150
      %3709 = vmatpush1.bf16.msra.mxu0 %v3149
      %3710 = vmatprep.subr.bf16.mxu0 %v3146
      %3711 = vmatpush1.bf16.msra.mxu0 %v3145
      %3712 = vmatprep.subr.bf16.mxu0 %v3206
      %3713 = vmatpush2.bf16.msra.mxu0 %v3205
      %3714 = vmatprep.subr.bf16.mxu0 %v3202
      %3715 = vmatpush2.bf16.msra.mxu0 %v3201
      %3716 = vmatprep.subr.bf16.mxu0 %v3198
      %3717 = vmatpush2.bf16.msra.mxu0 %v3197
      %3718 = vmatprep.subr.bf16.mxu0 %v3194
      %3719 = vmatpush2.bf16.msra.mxu0 %v3193
      %3720 = vmatprep.subr.bf16.mxu0 %v3190
      %3721 = vmatpush2.bf16.msra.mxu0 %v3189
      %3722 = vmatprep.subr.bf16.mxu0 %v3186
      %3723 = vmatpush2.bf16.msra.mxu0 %v3185
      %3724 = vmatprep.subr.bf16.mxu0 %v3182
      %3725 = vmatpush2.bf16.msra.mxu0 %v3181
      %3726 = vmatprep.subr.bf16.mxu0 %v3178
      %3727 = vmatpush2.bf16.msra.mxu0 %v3177
      %3728 = vmatprep.mubr.bf16.mxu0 %v1860
      %3729 = vmatmul.mubr.bf16.gmra.mxu0 %v1859
      %v3730 = vpop.f32.mrf.mxu0
      %v3731 = vadd.f32 %v3690, %v3730
      %v3732 = vpop.f32.mrf.mxu0
      %v3733 = vadd.f32 %v3692, %v3732
      %v3734 = vpop.f32.mrf.mxu0
      %v3735 = vpop.f32.mrf.mxu0
      %3736 = vdwg.mxu0
      %3737 = vmatprep.subr.bf16.mxu0 %v3238
      %3738 = vmatpush1.bf16.msra.mxu0 %v3237
      %3739 = vmatprep.subr.bf16.mxu0 %v3234
      %3740 = vmatpush1.bf16.msra.mxu0 %v3233
      %3741 = vmatprep.subr.bf16.mxu0 %v3230
      %3742 = vmatpush1.bf16.msra.mxu0 %v3229
      %3743 = vmatprep.subr.bf16.mxu0 %v3226
      %3744 = vmatpush1.bf16.msra.mxu0 %v3225
      %3745 = vmatprep.subr.bf16.mxu0 %v3222
      %3746 = vmatpush1.bf16.msra.mxu0 %v3221
      %3747 = vmatprep.subr.bf16.mxu0 %v3218
      %3748 = vmatpush1.bf16.msra.mxu0 %v3217
      %3749 = vmatprep.subr.bf16.mxu0 %v3214
      %3750 = vmatpush1.bf16.msra.mxu0 %v3213
      %3751 = vmatprep.subr.bf16.mxu0 %v3210
      %3752 = vmatpush1.bf16.msra.mxu0 %v3209
      %3753 = vmatprep.subr.bf16.mxu0 %v3270
      %3754 = vmatpush2.bf16.msra.mxu0 %v3269
      %3755 = vmatprep.subr.bf16.mxu0 %v3266
      %3756 = vmatpush2.bf16.msra.mxu0 %v3265
      %3757 = vmatprep.subr.bf16.mxu0 %v3262
      %3758 = vmatpush2.bf16.msra.mxu0 %v3261
      %3759 = vmatprep.subr.bf16.mxu0 %v3258
      %3760 = vmatpush2.bf16.msra.mxu0 %v3257
      %3761 = vmatprep.subr.bf16.mxu0 %v3254
      %3762 = vmatpush2.bf16.msra.mxu0 %v3253
      %3763 = vmatprep.subr.bf16.mxu0 %v3250
      %3764 = vmatpush2.bf16.msra.mxu0 %v3249
      %3765 = vmatprep.subr.bf16.mxu0 %v3246
      %3766 = vmatpush2.bf16.msra.mxu0 %v3245
      %3767 = vmatprep.subr.bf16.mxu0 %v3242
      %3768 = vmatpush2.bf16.msra.mxu0 %v3241
      %3769 = vmatprep.mubr.bf16.mxu0 %v1862
      %3770 = vmatmul.mubr.bf16.gmra.mxu0 %v1861
      %v3771 = vpop.f32.mrf.mxu0
      %v3772 = vadd.f32 %v3731, %v3771
      %v3773 = vpop.f32.mrf.mxu0
      %v3774 = vadd.f32 %v3733, %v3773
      %v3775 = vpop.f32.mrf.mxu0
      %v3776 = vpop.f32.mrf.mxu0
      %3777 = vdwg.mxu0
      %3778 = vmatprep.subr.bf16.mxu0 %v3302
      %3779 = vmatpush1.bf16.msra.mxu0 %v3301
      %3780 = vmatprep.subr.bf16.mxu0 %v3298
      %3781 = vmatpush1.bf16.msra.mxu0 %v3297
      %3782 = vmatprep.subr.bf16.mxu0 %v3294
      %3783 = vmatpush1.bf16.msra.mxu0 %v3293
      %3784 = vmatprep.subr.bf16.mxu0 %v3290
      %3785 = vmatpush1.bf16.msra.mxu0 %v3289
      %3786 = vmatprep.subr.bf16.mxu0 %v3286
      %3787 = vmatpush1.bf16.msra.mxu0 %v3285
      %3788 = vmatprep.subr.bf16.mxu0 %v3282
      %3789 = vmatpush1.bf16.msra.mxu0 %v3281
      %3790 = vmatprep.subr.bf16.mxu0 %v3278
      %3791 = vmatpush1.bf16.msra.mxu0 %v3277
      %3792 = vmatprep.subr.bf16.mxu0 %v3274
      %3793 = vmatpush1.bf16.msra.mxu0 %v3273
      %3794 = vmatprep.subr.bf16.mxu0 0
      %3795 = vmatpush2.bf16.msra.mxu0 0
      %3796 = vmatprep.subr.bf16.mxu0 0
      %3797 = vmatpush2.bf16.msra.mxu0 0
      %3798 = vmatprep.subr.bf16.mxu0 0
      %3799 = vmatpush2.bf16.msra.mxu0 0
      %3800 = vmatprep.subr.bf16.mxu0 0
      %3801 = vmatpush2.bf16.msra.mxu0 0
      %3802 = vmatprep.subr.bf16.mxu0 0
      %3803 = vmatpush2.bf16.msra.mxu0 0
      %3804 = vmatprep.subr.bf16.mxu0 0
      %3805 = vmatpush2.bf16.msra.mxu0 0
      %3806 = vmatprep.subr.bf16.mxu0 0
      %3807 = vmatpush2.bf16.msra.mxu0 0
      %3808 = vmatprep.subr.bf16.mxu0 0
      %3809 = vmatpush2.bf16.msra.mxu0 0
      %3810 = vmatprep.mubr.bf16.mxu0 0
      %3811 = vmatmul.mubr.bf16.gmra.mxu0 %v1863
      %v3812 = vpop.f32.mrf.mxu0
      %v3813 = vadd.f32 %v3772, %v3812
      %v3814 = vpop.f32.mrf.mxu0
      %v3815 = vadd.f32 %v3774, %v3814
      %v3816 = vpop.f32.mrf.mxu0
      %v3817 = vpop.f32.mrf.mxu0
      %3818 = vdwg.mxu0
      %3819 = vmatprep.subr.bf16.mxu0 %v3048
      %3820 = vmatpush1.bf16.msra.mxu0 %v3047
      %3821 = vmatprep.subr.bf16.mxu0 %v3044
      %3822 = vmatpush1.bf16.msra.mxu0 %v3043
      %3823 = vmatprep.subr.bf16.mxu0 %v3040
      %3824 = vmatpush1.bf16.msra.mxu0 %v3039
      %3825 = vmatprep.subr.bf16.mxu0 %v3036
      %3826 = vmatpush1.bf16.msra.mxu0 %v3035
      %3827 = vmatprep.subr.bf16.mxu0 %v3032
      %3828 = vmatpush1.bf16.msra.mxu0 %v3031
      %3829 = vmatprep.subr.bf16.mxu0 %v3028
      %3830 = vmatpush1.bf16.msra.mxu0 %v3027
      %3831 = vmatprep.subr.bf16.mxu0 %v3024
      %3832 = vmatpush1.bf16.msra.mxu0 %v3023
      %3833 = vmatprep.subr.bf16.mxu0 %v3020
      %3834 = vmatpush1.bf16.msra.mxu0 %v3019
      %3835 = vmatprep.subr.bf16.mxu0 %v3080
      %3836 = vmatpush2.bf16.msra.mxu0 %v3079
      %3837 = vmatprep.subr.bf16.mxu0 %v3076
      %3838 = vmatpush2.bf16.msra.mxu0 %v3075
      %3839 = vmatprep.subr.bf16.mxu0 %v3072
      %3840 = vmatpush2.bf16.msra.mxu0 %v3071
      %3841 = vmatprep.subr.bf16.mxu0 %v3068
      %3842 = vmatpush2.bf16.msra.mxu0 %v3067
      %3843 = vmatprep.subr.bf16.mxu0 %v3064
      %3844 = vmatpush2.bf16.msra.mxu0 %v3063
      %3845 = vmatprep.subr.bf16.mxu0 %v3060
      %3846 = vmatpush2.bf16.msra.mxu0 %v3059
      %3847 = vmatprep.subr.bf16.mxu0 %v3056
      %3848 = vmatpush2.bf16.msra.mxu0 %v3055
      %3849 = vmatprep.subr.bf16.mxu0 %v3052
      %3850 = vmatpush2.bf16.msra.mxu0 %v3051
      %3851 = vmatprep.mubr.bf16.mxu0 %v1856
      %3852 = vmatmul.mubr.bf16.gmra.mxu0 %v1855
      %v3853 = vpop.f32.mrf.mxu0
      %v3854 = vadd.f32 %v3605, %v3853
      %v3855 = vpop.f32.mrf.mxu0
      %v3856 = vadd.f32 %v3609, %v3855
      %v3857 = vpop.f32.mrf.mxu0
      %v3858 = vpop.f32.mrf.mxu0
      %3859 = vdwg.mxu0
      %3860 = vmatprep.subr.bf16.mxu0 %v3112
      %3861 = vmatpush1.bf16.msra.mxu0 %v3111
      %3862 = vmatprep.subr.bf16.mxu0 %v3108
      %3863 = vmatpush1.bf16.msra.mxu0 %v3107
      %3864 = vmatprep.subr.bf16.mxu0 %v3104
      %3865 = vmatpush1.bf16.msra.mxu0 %v3103
      %3866 = vmatprep.subr.bf16.mxu0 %v3100
      %3867 = vmatpush1.bf16.msra.mxu0 %v3099
      %3868 = vmatprep.subr.bf16.mxu0 %v3096
      %3869 = vmatpush1.bf16.msra.mxu0 %v3095
      %3870 = vmatprep.subr.bf16.mxu0 %v3092
      %3871 = vmatpush1.bf16.msra.mxu0 %v3091
      %3872 = vmatprep.subr.bf16.mxu0 %v3088
      %3873 = vmatpush1.bf16.msra.mxu0 %v3087
      %3874 = vmatprep.subr.bf16.mxu0 %v3084
      %3875 = vmatpush1.bf16.msra.mxu0 %v3083
      %3876 = vmatprep.subr.bf16.mxu0 %v3144
      %3877 = vmatpush2.bf16.msra.mxu0 %v3143
      %3878 = vmatprep.subr.bf16.mxu0 %v3140
      %3879 = vmatpush2.bf16.msra.mxu0 %v3139
      %3880 = vmatprep.subr.bf16.mxu0 %v3136
      %3881 = vmatpush2.bf16.msra.mxu0 %v3135
      %3882 = vmatprep.subr.bf16.mxu0 %v3132
      %3883 = vmatpush2.bf16.msra.mxu0 %v3131
      %3884 = vmatprep.subr.bf16.mxu0 %v3128
      %3885 = vmatpush2.bf16.msra.mxu0 %v3127
      %3886 = vmatprep.subr.bf16.mxu0 %v3124
      %3887 = vmatpush2.bf16.msra.mxu0 %v3123
      %3888 = vmatprep.subr.bf16.mxu0 %v3120
      %3889 = vmatpush2.bf16.msra.mxu0 %v3119
      %3890 = vmatprep.subr.bf16.mxu0 %v3116
      %3891 = vmatpush2.bf16.msra.mxu0 %v3115
      %3892 = vmatprep.mubr.bf16.mxu0 %v1858
      %3893 = vmatmul.mubr.bf16.gmra.mxu0 %v1857
      %v3894 = vpop.f32.mrf.mxu0
      %v3895 = vadd.f32 %v3854, %v3894
      %v3896 = vpop.f32.mrf.mxu0
      %v3897 = vadd.f32 %v3856, %v3896
      %v3898 = vpop.f32.mrf.mxu0
      %v3899 = vpop.f32.mrf.mxu0
      %3900 = vdwg.mxu0
      %3901 = vmatprep.subr.bf16.mxu0 %v3176
      %3902 = vmatpush1.bf16.msra.mxu0 %v3175
      %3903 = vmatprep.subr.bf16.mxu0 %v3172
      %3904 = vmatpush1.bf16.msra.mxu0 %v3171
      %3905 = vmatprep.subr.bf16.mxu0 %v3168
      %3906 = vmatpush1.bf16.msra.mxu0 %v3167
      %3907 = vmatprep.subr.bf16.mxu0 %v3164
      %3908 = vmatpush1.bf16.msra.mxu0 %v3163
      %3909 = vmatprep.subr.bf16.mxu0 %v3160
      %3910 = vmatpush1.bf16.msra.mxu0 %v3159
      %3911 = vmatprep.subr.bf16.mxu0 %v3156
      %3912 = vmatpush1.bf16.msra.mxu0 %v3155
      %3913 = vmatprep.subr.bf16.mxu0 %v3152
      %3914 = vmatpush1.bf16.msra.mxu0 %v3151
      %3915 = vmatprep.subr.bf16.mxu0 %v3148
      %3916 = vmatpush1.bf16.msra.mxu0 %v3147
      %3917 = vmatprep.subr.bf16.mxu0 %v3208
      %3918 = vmatpush2.bf16.msra.mxu0 %v3207
      %3919 = vmatprep.subr.bf16.mxu0 %v3204
      %3920 = vmatpush2.bf16.msra.mxu0 %v3203
      %3921 = vmatprep.subr.bf16.mxu0 %v3200
      %3922 = vmatpush2.bf16.msra.mxu0 %v3199
      %3923 = vmatprep.subr.bf16.mxu0 %v3196
      %3924 = vmatpush2.bf16.msra.mxu0 %v3195
      %3925 = vmatprep.subr.bf16.mxu0 %v3192
      %3926 = vmatpush2.bf16.msra.mxu0 %v3191
      %3927 = vmatprep.subr.bf16.mxu0 %v3188
      %3928 = vmatpush2.bf16.msra.mxu0 %v3187
      %3929 = vmatprep.subr.bf16.mxu0 %v3184
      %3930 = vmatpush2.bf16.msra.mxu0 %v3183
      %3931 = vmatprep.subr.bf16.mxu0 %v3180
      %3932 = vmatpush2.bf16.msra.mxu0 %v3179
      %3933 = vmatprep.mubr.bf16.mxu0 %v1860
      %3934 = vmatmul.mubr.bf16.gmra.mxu0 %v1859
      %v3935 = vpop.f32.mrf.mxu0
      %v3936 = vadd.f32 %v3895, %v3935
      %v3937 = vpop.f32.mrf.mxu0
      %v3938 = vadd.f32 %v3897, %v3937
      %v3939 = vpop.f32.mrf.mxu0
      %v3940 = vpop.f32.mrf.mxu0
      %3941 = vdwg.mxu0
      %3942 = vmatprep.subr.bf16.mxu0 %v3240
      %3943 = vmatpush1.bf16.msra.mxu0 %v3239
      %3944 = vmatprep.subr.bf16.mxu0 %v3236
      %3945 = vmatpush1.bf16.msra.mxu0 %v3235
      %3946 = vmatprep.subr.bf16.mxu0 %v3232
      %3947 = vmatpush1.bf16.msra.mxu0 %v3231
      %3948 = vmatprep.subr.bf16.mxu0 %v3228
      %3949 = vmatpush1.bf16.msra.mxu0 %v3227
      %3950 = vmatprep.subr.bf16.mxu0 %v3224
      %3951 = vmatpush1.bf16.msra.mxu0 %v3223
      %3952 = vmatprep.subr.bf16.mxu0 %v3220
      %3953 = vmatpush1.bf16.msra.mxu0 %v3219
      %3954 = vmatprep.subr.bf16.mxu0 %v3216
      %3955 = vmatpush1.bf16.msra.mxu0 %v3215
      %3956 = vmatprep.subr.bf16.mxu0 %v3212
      %3957 = vmatpush1.bf16.msra.mxu0 %v3211
      %3958 = vmatprep.subr.bf16.mxu0 %v3272
      %3959 = vmatpush2.bf16.msra.mxu0 %v3271
      %3960 = vmatprep.subr.bf16.mxu0 %v3268
      %3961 = vmatpush2.bf16.msra.mxu0 %v3267
      %3962 = vmatprep.subr.bf16.mxu0 %v3264
      %3963 = vmatpush2.bf16.msra.mxu0 %v3263
      %3964 = vmatprep.subr.bf16.mxu0 %v3260
      %3965 = vmatpush2.bf16.msra.mxu0 %v3259
      %3966 = vmatprep.subr.bf16.mxu0 %v3256
      %3967 = vmatpush2.bf16.msra.mxu0 %v3255
      %3968 = vmatprep.subr.bf16.mxu0 %v3252
      %3969 = vmatpush2.bf16.msra.mxu0 %v3251
      %3970 = vmatprep.subr.bf16.mxu0 %v3248
      %3971 = vmatpush2.bf16.msra.mxu0 %v3247
      %3972 = vmatprep.subr.bf16.mxu0 %v3244
      %3973 = vmatpush2.bf16.msra.mxu0 %v3243
      %3974 = vmatprep.mubr.bf16.mxu0 %v1862
      %3975 = vmatmul.mubr.bf16.gmra.mxu0 %v1861
      %v3976 = vpop.f32.mrf.mxu0
      %v3977 = vadd.f32 %v3936, %v3976
      %v3978 = vpop.f32.mrf.mxu0
      %v3979 = vadd.f32 %v3938, %v3978
      %v3980 = vpop.f32.mrf.mxu0
      %v3981 = vpop.f32.mrf.mxu0
      %3982 = vdwg.mxu0
      %3983 = vmatprep.subr.bf16.mxu0 %v3304
      %3984 = vmatpush1.bf16.msra.mxu0 %v3303
      %3985 = vmatprep.subr.bf16.mxu0 %v3300
      %3986 = vmatpush1.bf16.msra.mxu0 %v3299
      %3987 = vmatprep.subr.bf16.mxu0 %v3296
      %3988 = vmatpush1.bf16.msra.mxu0 %v3295
      %3989 = vmatprep.subr.bf16.mxu0 %v3292
      %3990 = vmatpush1.bf16.msra.mxu0 %v3291
      %3991 = vmatprep.subr.bf16.mxu0 %v3288
      %3992 = vmatpush1.bf16.msra.mxu0 %v3287
      %3993 = vmatprep.subr.bf16.mxu0 %v3284
      %3994 = vmatpush1.bf16.msra.mxu0 %v3283
      %3995 = vmatprep.subr.bf16.mxu0 %v3280
      %3996 = vmatpush1.bf16.msra.mxu0 %v3279
      %3997 = vmatprep.subr.bf16.mxu0 %v3276
      %3998 = vmatpush1.bf16.msra.mxu0 %v3275
      %3999 = vmatprep.subr.bf16.mxu0 0
      %4000 = vmatpush2.bf16.msra.mxu0 0
      %4001 = vmatprep.subr.bf16.mxu0 0
      %4002 = vmatpush2.bf16.msra.mxu0 0
      %4003 = vmatprep.subr.bf16.mxu0 0
      %4004 = vmatpush2.bf16.msra.mxu0 0
      %4005 = vmatprep.subr.bf16.mxu0 0
      %4006 = vmatpush2.bf16.msra.mxu0 0
      %4007 = vmatprep.subr.bf16.mxu0 0
      %4008 = vmatpush2.bf16.msra.mxu0 0
      %4009 = vmatprep.subr.bf16.mxu0 0
      %4010 = vmatpush2.bf16.msra.mxu0 0
      %4011 = vmatprep.subr.bf16.mxu0 0
      %4012 = vmatpush2.bf16.msra.mxu0 0
      %4013 = vmatprep.subr.bf16.mxu0 0
      %4014 = vmatpush2.bf16.msra.mxu0 0
      %4015 = vmatprep.mubr.bf16.mxu0 0
      %4016 = vmatmul.mubr.bf16.gmra.mxu0 %v1863
      %v4017 = vpop.f32.mrf.mxu0
      %v4018 = vadd.f32 %v3977, %v4017
      %v4019 = vpop.f32.mrf.mxu0
      %v4020 = vadd.f32 %v3979, %v4019
      %v4021 = vpop.f32.mrf.mxu0
      %v4022 = vpop.f32.mrf.mxu0
      %4023 = vdwg.mxu0
      %v4024 = vmul.f32 %v3813, 0.01
      %v4025 = vmul.f32 %v3815, 0.01
      %v4026 = vmul.f32 %v4018, 0.01
      %v4027 = vmul.f32 %v4020, 0.01
      %v4028 = vmax.f32 %v3813, %v4024
      %v4029 = vmax.f32 %v3815, %v4025
      %v4030 = vmax.f32 %v4018, %v4026
      %v4031 = vmax.f32 %v4020, %v4027
      %v4032 = vpack.c.bf16 %v4028, %v4028
      %v4033 = vpack.c.bf16 %v4029, %v4029
      %v4034 = vpack.c.bf16 %v4030, %v4030
      %v4035 = vpack.c.bf16 %v4031, %v4031
      %v4036 = vld [vmem:[%s9] sm:$0xf]
      %v4037 = vld [vmem:[%s9 + $0x4] sm:$0xf]
      %v4038 = vld [vmem:[%s9 + $0x8] sm:$0xf]
      %v4039 = vld [vmem:[%s9 + $0xc] sm:$0xf]
      %v4040 = vld [vmem:[%s9 + $0x10] sm:$0xf]
      %v4041 = vld [vmem:[%s9 + $0x14] sm:$0xf]
      %v4042 = vld [vmem:[%s9 + $0x18] sm:$0xf]
      %v4043 = vld [vmem:[%s9 + $0x1c] sm:$0xf]
      %v4044 = vld [vmem:[%s9 + $0x20] sm:$0xf]
      %v4045 = vld [vmem:[%s9 + $0x24] sm:$0xf]
      %v4046 = vld [vmem:[%s9 + $0x28] sm:$0xf]
      %v4047 = vld [vmem:[%s9 + $0x2c] sm:$0xf]
      %v4048 = vld [vmem:[%s9 + $0x30] sm:$0xf]
      %v4049 = vld [vmem:[%s9 + $0x34] sm:$0xf]
      %v4050 = vld [vmem:[%s9 + $0x38] sm:$0xf]
      %v4051 = vld [vmem:[%s9 + $0x3c] sm:$0xf]
      %v4052 = vld [vmem:[%s9 + $0x40] sm:$0xf]
      %v4053 = vld [vmem:[%s9 + $0x44] sm:$0xf]
      %v4054 = vld [vmem:[%s9 + $0x48] sm:$0xf]
      %v4055 = vld [vmem:[%s9 + $0x4c] sm:$0xf]
      %v4056 = vld [vmem:[%s9 + $0x50] sm:$0xf]
      %v4057 = vld [vmem:[%s9 + $0x54] sm:$0xf]
      %v4058 = vld [vmem:[%s9 + $0x58] sm:$0xf]
      %v4059 = vld [vmem:[%s9 + $0x5c] sm:$0xf]
      %v4060 = vld [vmem:[%s9 + $0x60] sm:$0xf]
      %v4061 = vld [vmem:[%s9 + $0x64] sm:$0xf]
      %v4062 = vld [vmem:[%s9 + $0x68] sm:$0xf]
      %v4063 = vld [vmem:[%s9 + $0x6c] sm:$0xf]
      %v4064 = vld [vmem:[%s9 + $0x70] sm:$0xf]
      %v4065 = vld [vmem:[%s9 + $0x74] sm:$0xf]
      %v4066 = vld [vmem:[%s9 + $0x78] sm:$0xf]
      %v4067 = vld [vmem:[%s9 + $0x7c] sm:$0xf]
      %v4068 = vld [vmem:[%s9 + $0x80] sm:$0xf]
      %v4069 = vld [vmem:[%s9 + $0x84] sm:$0xf]
      %v4070 = vld [vmem:[%s9 + $0x88] sm:$0xf]
      %v4071 = vld [vmem:[%s9 + $0x8c] sm:$0xf]
      %v4072 = vld [vmem:[%s9 + $0x90] sm:$0xf]
      %v4073 = vld [vmem:[%s9 + $0x94] sm:$0xf]
      %v4074 = vld [vmem:[%s9 + $0x98] sm:$0xf]
      %v4075 = vld [vmem:[%s9 + $0x9c] sm:$0xf]
      %v4076 = vld [vmem:[%s9 + $0xa0] sm:$0xf]
      %v4077 = vld [vmem:[%s9 + $0xa4] sm:$0xf]
      %v4078 = vld [vmem:[%s9 + $0xa8] sm:$0xf]
      %v4079 = vld [vmem:[%s9 + $0xac] sm:$0xf]
      %v4080 = vld [vmem:[%s9 + $0xb0] sm:$0xf]
      %v4081 = vld [vmem:[%s9 + $0xb4] sm:$0xf]
      %v4082 = vld [vmem:[%s9 + $0xb8] sm:$0xf]
      %v4083 = vld [vmem:[%s9 + $0xbc] sm:$0xf]
      %v4084 = vld [vmem:[%s9 + $0xc0] sm:$0xf]
      %v4085 = vld [vmem:[%s9 + $0xc4] sm:$0xf]
      %v4086 = vld [vmem:[%s9 + $0xc8] sm:$0xf]
      %v4087 = vld [vmem:[%s9 + $0xcc] sm:$0xf]
      %v4088 = vld [vmem:[%s9 + $0xd0] sm:$0xf]
      %v4089 = vld [vmem:[%s9 + $0xd4] sm:$0xf]
      %v4090 = vld [vmem:[%s9 + $0xd8] sm:$0xf]
      %v4091 = vld [vmem:[%s9 + $0xdc] sm:$0xf]
      %v4092 = vld [vmem:[%s9 + $0xe0] sm:$0xf]
      %v4093 = vld [vmem:[%s9 + $0xe4] sm:$0xf]
      %v4094 = vld [vmem:[%s9 + $0xe8] sm:$0xf]
      %v4095 = vld [vmem:[%s9 + $0xec] sm:$0xf]
      %v4096 = vld [vmem:[%s9 + $0xf0] sm:$0xf]
      %v4097 = vld [vmem:[%s9 + $0xf4] sm:$0xf]
      %v4098 = vld [vmem:[%s9 + $0xf8] sm:$0xf]
      %v4099 = vld [vmem:[%s9 + $0xfc] sm:$0xf]
      %v4100 = vld [vmem:[%s10] sm:$0x1]
      %v4165 = vunpack.c.l.b16 %v4036
      %v4166 = vunpack.c.l.b16 %v4037
      %v4167 = vunpack.c.l.b16 %v4038
      %v4168 = vunpack.c.l.b16 %v4039
      %v4169 = vunpack.c.l.b16 %v4040
      %v4170 = vunpack.c.l.b16 %v4041
      %v4171 = vunpack.c.l.b16 %v4042
      %v4172 = vunpack.c.l.b16 %v4043
      %v4173 = vunpack.c.l.b16 %v4044
      %v4174 = vunpack.c.l.b16 %v4045
      %v4175 = vunpack.c.l.b16 %v4046
      %v4176 = vunpack.c.l.b16 %v4047
      %v4177 = vunpack.c.l.b16 %v4048
      %v4178 = vunpack.c.l.b16 %v4049
      %v4179 = vunpack.c.l.b16 %v4050
      %v4180 = vunpack.c.l.b16 %v4051
      %v4181 = vunpack.c.l.b16 %v4052
      %v4182 = vunpack.c.l.b16 %v4053
      %v4183 = vunpack.c.l.b16 %v4054
      %v4184 = vunpack.c.l.b16 %v4055
      %v4185 = vunpack.c.l.b16 %v4056
      %v4186 = vunpack.c.l.b16 %v4057
      %v4187 = vunpack.c.l.b16 %v4058
      %v4188 = vunpack.c.l.b16 %v4059
      %v4189 = vunpack.c.l.b16 %v4060
      %v4190 = vunpack.c.l.b16 %v4061
      %v4191 = vunpack.c.l.b16 %v4062
      %v4192 = vunpack.c.l.b16 %v4063
      %v4193 = vunpack.c.l.b16 %v4064
      %v4194 = vunpack.c.l.b16 %v4065
      %v4195 = vunpack.c.l.b16 %v4066
      %v4196 = vunpack.c.l.b16 %v4067
      %v4197 = vunpack.c.l.b16 %v4068
      %v4198 = vunpack.c.l.b16 %v4069
      %v4199 = vunpack.c.l.b16 %v4070
      %v4200 = vunpack.c.l.b16 %v4071
      %v4201 = vunpack.c.l.b16 %v4072
      %v4202 = vunpack.c.l.b16 %v4073
      %v4203 = vunpack.c.l.b16 %v4074
      %v4204 = vunpack.c.l.b16 %v4075
      %v4205 = vunpack.c.l.b16 %v4076
      %v4206 = vunpack.c.l.b16 %v4077
      %v4207 = vunpack.c.l.b16 %v4078
      %v4208 = vunpack.c.l.b16 %v4079
      %v4209 = vunpack.c.l.b16 %v4080
      %v4210 = vunpack.c.l.b16 %v4081
      %v4211 = vunpack.c.l.b16 %v4082
      %v4212 = vunpack.c.l.b16 %v4083
      %v4213 = vunpack.c.l.b16 %v4084
      %v4214 = vunpack.c.l.b16 %v4085
      %v4215 = vunpack.c.l.b16 %v4086
      %v4216 = vunpack.c.l.b16 %v4087
      %v4217 = vunpack.c.l.b16 %v4088
      %v4218 = vunpack.c.l.b16 %v4089
      %v4219 = vunpack.c.l.b16 %v4090
      %v4220 = vunpack.c.l.b16 %v4091
      %v4221 = vunpack.c.l.b16 %v4092
      %v4222 = vunpack.c.l.b16 %v4093
      %v4223 = vunpack.c.l.b16 %v4094
      %v4224 = vunpack.c.l.b16 %v4095
      %v4225 = vunpack.c.l.b16 %v4096
      %v4226 = vunpack.c.l.b16 %v4097
      %v4227 = vunpack.c.l.b16 %v4098
      %v4228 = vunpack.c.l.b16 %v4099
      %v4229 = vpack.c.b16 %v4166, %v4165
      %v4230 = vpack.c.b16 %v4168, %v4167
      %v4231 = vpack.c.b16 %v4170, %v4169
      %v4232 = vpack.c.b16 %v4172, %v4171
      %v4233 = vpack.c.b16 %v4174, %v4173
      %v4234 = vpack.c.b16 %v4176, %v4175
      %v4235 = vpack.c.b16 %v4178, %v4177
      %v4236 = vpack.c.b16 %v4180, %v4179
      %v4237 = vpack.c.b16 %v4182, %v4181
      %v4238 = vpack.c.b16 %v4184, %v4183
      %v4239 = vpack.c.b16 %v4186, %v4185
      %v4240 = vpack.c.b16 %v4188, %v4187
      %v4241 = vpack.c.b16 %v4190, %v4189
      %v4242 = vpack.c.b16 %v4192, %v4191
      %v4243 = vpack.c.b16 %v4194, %v4193
      %v4244 = vpack.c.b16 %v4196, %v4195
      %v4245 = vpack.c.b16 %v4198, %v4197
      %v4246 = vpack.c.b16 %v4200, %v4199
      %v4247 = vpack.c.b16 %v4202, %v4201
      %v4248 = vpack.c.b16 %v4204, %v4203
      %v4249 = vpack.c.b16 %v4206, %v4205
      %v4250 = vpack.c.b16 %v4208, %v4207
      %v4251 = vpack.c.b16 %v4210, %v4209
      %v4252 = vpack.c.b16 %v4212, %v4211
      %v4253 = vpack.c.b16 %v4214, %v4213
      %v4254 = vpack.c.b16 %v4216, %v4215
      %v4255 = vpack.c.b16 %v4218, %v4217
      %v4256 = vpack.c.b16 %v4220, %v4219
      %v4257 = vpack.c.b16 %v4222, %v4221
      %v4258 = vpack.c.b16 %v4224, %v4223
      %v4259 = vpack.c.b16 %v4226, %v4225
      %v4260 = vpack.c.b16 %v4228, %v4227
      %4293 = vmatprep.subr.bf16.mxu0 0
      %4294 = vmatpush1.bf16.msra.mxu0 %v4236
      %4295 = vmatprep.subr.bf16.mxu0 0
      %4296 = vmatpush1.bf16.msra.mxu0 %v4235
      %4297 = vmatprep.subr.bf16.mxu0 0
      %4298 = vmatpush1.bf16.msra.mxu0 %v4234
      %4299 = vmatprep.subr.bf16.mxu0 0
      %4300 = vmatpush1.bf16.msra.mxu0 %v4233
      %4301 = vmatprep.subr.bf16.mxu0 0
      %4302 = vmatpush1.bf16.msra.mxu0 %v4232
      %4303 = vmatprep.subr.bf16.mxu0 0
      %4304 = vmatpush1.bf16.msra.mxu0 %v4231
      %4305 = vmatprep.subr.bf16.mxu0 0
      %4306 = vmatpush1.bf16.msra.mxu0 %v4230
      %4307 = vmatprep.subr.bf16.mxu0 0
      %4308 = vmatpush1.bf16.msra.mxu0 %v4229
      %4309 = vmatprep.subr.bf16.mxu0 0
      %4310 = vmatpush2.bf16.msra.mxu0 %v4244
      %4311 = vmatprep.subr.bf16.mxu0 0
      %4312 = vmatpush2.bf16.msra.mxu0 %v4243
      %4313 = vmatprep.subr.bf16.mxu0 0
      %4314 = vmatpush2.bf16.msra.mxu0 %v4242
      %4315 = vmatprep.subr.bf16.mxu0 0
      %4316 = vmatpush2.bf16.msra.mxu0 %v4241
      %4317 = vmatprep.subr.bf16.mxu0 0
      %4318 = vmatpush2.bf16.msra.mxu0 %v4240
      %4319 = vmatprep.subr.bf16.mxu0 0
      %4320 = vmatpush2.bf16.msra.mxu0 %v4239
      %4321 = vmatprep.subr.bf16.mxu0 0
      %4322 = vmatpush2.bf16.msra.mxu0 %v4238
      %4323 = vmatprep.subr.bf16.mxu0 0
      %4324 = vmatpush2.bf16.msra.mxu0 %v4237
      %4325 = vmatprep.mubr.bf16.mxu0 %v4033
      %4326 = vmatmul.mubr.bf16.gmra.mxu0 %v4032
      %v4327 = vpop.f32.mrf.mxu0
      %v4328 = vadd.f32 %v4100, %v4327
      %v4329 = vpop.f32.mrf.mxu0
      %v4330 = vpop.f32.mrf.mxu0
      %v4331 = vpop.f32.mrf.mxu0
      %4332 = vdwg.mxu0
      %4333 = vmatprep.subr.bf16.mxu0 0
      %4334 = vmatpush1.bf16.msra.mxu0 %v4252
      %4335 = vmatprep.subr.bf16.mxu0 0
      %4336 = vmatpush1.bf16.msra.mxu0 %v4251
      %4337 = vmatprep.subr.bf16.mxu0 0
      %4338 = vmatpush1.bf16.msra.mxu0 %v4250
      %4339 = vmatprep.subr.bf16.mxu0 0
      %4340 = vmatpush1.bf16.msra.mxu0 %v4249
      %4341 = vmatprep.subr.bf16.mxu0 0
      %4342 = vmatpush1.bf16.msra.mxu0 %v4248
      %4343 = vmatprep.subr.bf16.mxu0 0
      %4344 = vmatpush1.bf16.msra.mxu0 %v4247
      %4345 = vmatprep.subr.bf16.mxu0 0
      %4346 = vmatpush1.bf16.msra.mxu0 %v4246
      %4347 = vmatprep.subr.bf16.mxu0 0
      %4348 = vmatpush1.bf16.msra.mxu0 %v4245
      %4349 = vmatprep.subr.bf16.mxu0 0
      %4350 = vmatpush2.bf16.msra.mxu0 %v4260
      %4351 = vmatprep.subr.bf16.mxu0 0
      %4352 = vmatpush2.bf16.msra.mxu0 %v4259
      %4353 = vmatprep.subr.bf16.mxu0 0
      %4354 = vmatpush2.bf16.msra.mxu0 %v4258
      %4355 = vmatprep.subr.bf16.mxu0 0
      %4356 = vmatpush2.bf16.msra.mxu0 %v4257
      %4357 = vmatprep.subr.bf16.mxu0 0
      %4358 = vmatpush2.bf16.msra.mxu0 %v4256
      %4359 = vmatprep.subr.bf16.mxu0 0
      %4360 = vmatpush2.bf16.msra.mxu0 %v4255
      %4361 = vmatprep.subr.bf16.mxu0 0
      %4362 = vmatpush2.bf16.msra.mxu0 %v4254
      %4363 = vmatprep.subr.bf16.mxu0 0
      %4364 = vmatpush2.bf16.msra.mxu0 %v4253
      %4365 = vmatprep.mubr.bf16.mxu0 %v4035
      %4366 = vmatmul.mubr.bf16.gmra.mxu0 %v4034
      %v4367 = vpop.f32.mrf.mxu0
      %v4368 = vadd.f32 %v4328, %v4367
      %v4369 = vpop.f32.mrf.mxu0
      %v4370 = vpop.f32.mrf.mxu0
      %v4371 = vpop.f32.mrf.mxu0
      %4372 = vdwg.mxu0
      %v4373 = vmul.f32 %v4368, 0.01
      %v4374 = vmax.f32 %v4368, %v4373
      %v4375 = vpack.c.bf16 %v4374, %v4374
      %v4376 = vld [vmem:[%s11] sm:$0xf]
      %v4377 = vld [vmem:[%s11 + $0x4] sm:$0xf]
      %v4378 = vld [vmem:[%s11 + $0x8] sm:$0xf]
      %v4379 = vld [vmem:[%s11 + $0xc] sm:$0xf]
      %v4380 = vld [vmem:[%s11 + $0x10] sm:$0xf]
      %v4381 = vld [vmem:[%s11 + $0x14] sm:$0xf]
      %v4382 = vld [vmem:[%s11 + $0x18] sm:$0xf]
      %v4383 = vld [vmem:[%s11 + $0x1c] sm:$0xf]
      %v4384 = vld [vmem:[%s11 + $0x20] sm:$0xf]
      %v4385 = vld [vmem:[%s11 + $0x24] sm:$0xf]
      %v4386 = vld [vmem:[%s11 + $0x28] sm:$0xf]
      %v4387 = vld [vmem:[%s11 + $0x2c] sm:$0xf]
      %v4388 = vld [vmem:[%s11 + $0x30] sm:$0xf]
      %v4389 = vld [vmem:[%s11 + $0x34] sm:$0xf]
      %v4390 = vld [vmem:[%s11 + $0x38] sm:$0xf]
      %v4391 = vld [vmem:[%s11 + $0x3c] sm:$0xf]
      %v4392 = vld [vmem:[%s12] sm:$0x1]
      %v4409 = vunpack.c.l.b16 %v4376
      %v4410 = vunpack.c.l.b16 %v4377
      %v4411 = vunpack.c.l.b16 %v4378
      %v4412 = vunpack.c.l.b16 %v4379
      %v4413 = vunpack.c.l.b16 %v4380
      %v4414 = vunpack.c.l.b16 %v4381
      %v4415 = vunpack.c.l.b16 %v4382
      %v4416 = vunpack.c.l.b16 %v4383
      %v4417 = vunpack.c.l.b16 %v4384
      %v4418 = vunpack.c.l.b16 %v4385
      %v4419 = vunpack.c.l.b16 %v4386
      %v4420 = vunpack.c.l.b16 %v4387
      %v4421 = vunpack.c.l.b16 %v4388
      %v4422 = vunpack.c.l.b16 %v4389
      %v4423 = vunpack.c.l.b16 %v4390
      %v4424 = vunpack.c.l.b16 %v4391
      %v4425 = vpack.c.b16 %v4410, %v4409
      %v4426 = vpack.c.b16 %v4412, %v4411
      %v4427 = vpack.c.b16 %v4414, %v4413
      %v4428 = vpack.c.b16 %v4416, %v4415
      %v4429 = vpack.c.b16 %v4418, %v4417
      %v4430 = vpack.c.b16 %v4420, %v4419
      %v4431 = vpack.c.b16 %v4422, %v4421
      %v4432 = vpack.c.b16 %v4424, %v4423
      %4441 = vmatprep.subr.bf16.mxu0 0
      %4442 = vmatpush1.bf16.msra.mxu0 %v4432
      %4443 = vmatprep.subr.bf16.mxu0 0
      %4444 = vmatpush1.bf16.msra.mxu0 %v4431
      %4445 = vmatprep.subr.bf16.mxu0 0
      %4446 = vmatpush1.bf16.msra.mxu0 %v4430
      %4447 = vmatprep.subr.bf16.mxu0 0
      %4448 = vmatpush1.bf16.msra.mxu0 %v4429
      %4449 = vmatprep.subr.bf16.mxu0 0
      %4450 = vmatpush1.bf16.msra.mxu0 %v4428
      %4451 = vmatprep.subr.bf16.mxu0 0
      %4452 = vmatpush1.bf16.msra.mxu0 %v4427
      %4453 = vmatprep.subr.bf16.mxu0 0
      %4454 = vmatpush1.bf16.msra.mxu0 %v4426
      %4455 = vmatprep.subr.bf16.mxu0 0
      %4456 = vmatpush1.bf16.msra.mxu0 %v4425
      %4457 = vmatprep.subr.bf16.mxu0 0
      %4458 = vmatpush2.bf16.msra.mxu0 0
      %4459 = vmatprep.subr.bf16.mxu0 0
      %4460 = vmatpush2.bf16.msra.mxu0 0
      %4461 = vmatprep.subr.bf16.mxu0 0
      %4462 = vmatpush2.bf16.msra.mxu0 0
      %4463 = vmatprep.subr.bf16.mxu0 0
      %4464 = vmatpush2.bf16.msra.mxu0 0
      %4465 = vmatprep.subr.bf16.mxu0 0
      %4466 = vmatpush2.bf16.msra.mxu0 0
      %4467 = vmatprep.subr.bf16.mxu0 0
      %4468 = vmatpush2.bf16.msra.mxu0 0
      %4469 = vmatprep.subr.bf16.mxu0 0
      %4470 = vmatpush2.bf16.msra.mxu0 0
      %4471 = vmatprep.subr.bf16.mxu0 0
      %4472 = vmatpush2.bf16.msra.mxu0 0
      %4473 = vmatprep.mubr.bf16.mxu0 0
      %4474 = vmatmul.mubr.bf16.gmra.mxu0 %v4375
      %v4475 = vpop.f32.mrf.mxu0
      %v4476 = vadd.f32 %v4392, %v4475
      %v4477 = vpop.f32.mrf.mxu0
      %v4478 = vpop.f32.mrf.mxu0
      %v4479 = vpop.f32.mrf.mxu0
      %4480 = vdwg.mxu0
      %v4481 = vsub.f32 0.0, %v4476
      %v4482 = vmul.f32 %v4481, 1.442695
      %v4483 = vpow.pop %v4482
      %v4484 = vadd.f32 %v4483, 1.0
      %v4485 = vrcp.pop %v4484
      %v4486 = vmul.f32 1.0, %v4485
      %4487 = vst [vmem:[%s436] sm:$0x1] %v4486
      %p4488 = scmp.lt.s32.totalorder %s24, 1
      %s4489 = scalar_select %p4488, %s24, 1
      %s4490 = scalar_lea.vmem %s13, %s4489
      // Predicated region
      $region73: #{one_d_net_scaled.1} parent=71 // pred_check
        %p4491 = pneg %p320
      $region74: #{one_d_net_scaled.1} parent=71 // pred_check_branch
        %4493 = sbr.rel (%p4491) target = $region76
      $region75: #{one_d_net_scaled.1} parent=71 // pred_region
        _
      $region76: #{one_d_net_scaled.1} parent=71 // pred_fallthru
        _
    $region72: #{one_d_net_scaled.1} parent=5 // pred_fallthru
      _
    %p4494 = scmp.le.s32.totalorder 2, %s19
    // Predicated region
    $region77: #{one_d_net_scaled.1} parent=5 // pred_check
      %p4495 = pneg %p4494
    $region78: #{one_d_net_scaled.1} parent=5 // pred_check_branch
      %4497 = sbr.rel (%p4495) target = $region80
    $region79: #{one_d_net_scaled.1} parent=5 // pred_region
      %s4498 = ssub.s32 %s19, 2
      // Predicated region
      $region81: #{one_d_net_scaled.1} parent=79 // pred_check
        %p4499 = pneg %p326
      $region82: #{one_d_net_scaled.1} parent=79 // pred_check_branch
        %4501 = sbr.rel (%p4499) target = $region84
      $region83: #{one_d_net_scaled.1} parent=79 // pred_region
        %p4502 = scmp.lt.s32.totalorder %s25, 1
        %s4503 = scalar_select %p4502, %s25, 1
        %s4504 = scalar_lea.vmem %s13, %s4503
      $region84: #{one_d_net_scaled.1} parent=79 // pred_fallthru
        _
    $region80: #{one_d_net_scaled.1} parent=5 // pred_fallthru
      _
  $region6: #{one_d_net_scaled.1} parent=0 // loop_footer
    %s23 = sadd.s32 1, %s19
  $region7: #{one_d_net_scaled.1} parent=0 // loop_footer_branch
    %18 = sbr.rel target = $region3
  $region8: #{one_d_net_scaled.1} parent=0 // loop_exit
    _

</llo_original>
